<compile_context>
chip_gen: v7x
topology: tpu7x:2x2x1
jax: 0.10.0
libtpu: 0.0.40
codegen_flags: <defaults>
</compile_context>

<pallas_src>
import functools

import jax
import jax.numpy as jnp
from jax.experimental import pallas as pl
from jax.experimental.pallas import tpu as pltpu


def _window_attn_kernel(x_ref, wqkv_ref, bqkv_ref, wp_ref, bp_ref, o_ref,
                        o_heads_ref, *, num_heads):
    """Processes a block of Wb windows: (Wb, N, C) bf16 -> (Wb, N, C) bf16."""
    Wb, N, C = x_ref.shape
    hd = C // num_heads
    M = Wb * N

    # ---- QKV projection: one (M, C) @ (C, 3C) MXU matmul, fp32 accumulate ----
    x2 = x_ref[...].reshape(M, C)                       # bf16, leading-dim merge (free)
    qkv = jnp.dot(x2, wqkv_ref[...], preferred_element_type=jnp.float32)
    qkv = qkv + bqkv_ref[...]                           # fp32 bias add (q pre-scaled)
    qkv_bf = qkv.astype(jnp.bfloat16).reshape(Wb, N, 3 * C)   # single bf16 pack

    # ---- per-head attention; head outputs written into one bf16 scratch ----
    for h in range(num_heads):                          # static unrolled loop
        lo = h * hd
        q_h = qkv_bf[:, :, lo:lo + hd]                  # (Wb, N, hd) bf16
        k_h = qkv_bf[:, :, C + lo:C + lo + hd]
        v_h = qkv_bf[:, :, 2 * C + lo:2 * C + lo + hd]

        # scores (Wb, N, N), batched over the windows in this block
        s = jnp.einsum('wqd,wkd->wqk', q_h, k_h,
                       preferred_element_type=jnp.float32)

        # fp32 softmax; normalization deferred past the value matmul
        s = s - jnp.max(s, axis=-1, keepdims=True)
        p = jnp.exp(s)
        l = jnp.sum(p, axis=-1, keepdims=True)          # (Wb, N, 1) fp32

        o_h = jnp.einsum('wqk,wkd->wqd', p.astype(jnp.bfloat16), v_h,
                         preferred_element_type=jnp.float32)
        o_h = o_h * pl.reciprocal(l, approx=True)       # EUP slot, not a divide

        # head h's columns of the merged (M, C) attention output
        o_heads_ref[:, lo:lo + hd] = o_h.reshape(M, hd).astype(jnp.bfloat16)

    # ---- single output projection: (M, C) @ (C, C), fp32 accumulate ----
    out = jnp.dot(o_heads_ref[...], wp_ref[...],
                  preferred_element_type=jnp.float32)
    out = out + bp_ref[...]
    o_ref[...] = out.reshape(Wb, N, C).astype(o_ref.dtype)


def _vmem_budget_and_limit():
    """Generation-aware per-step working-set budget and explicit scoped limit."""
    cap = None
    try:
        cap = getattr(pltpu.get_tpu_info(), "vmem_capacity_bytes", None)
    except Exception:
        cap = None
    if not cap:
        cap = 64 * 1024 * 1024            # conservative fallback (v7x per-TC)
    limit = int(min(cap * 3 // 4, 96 * 1024 * 1024))   # v5e/v6e ~96MiB, v7x ~48MiB
    budget = limit // 2                   # headroom for double buffers / weights
    return budget, limit


def _pick_window_block(nw_total, n_tok, c, vmem_budget):
    """Windows per grid step: as big as the VMEM budget allows, while keeping
    >= 4 grid steps when possible (>= 2 steps per TensorCore on v7x)."""
    # rough per-window working set per grid step (dominant terms):
    #   bf16 x + out blocks, double-buffered; fp32+bf16 qkv; fp32 scores+probs
    #   for one live head; bf16 head-merge scratch.
    per_win = ((2 * 2 * n_tok * c * 2) +
               (n_tok * 3 * c * 6) +
               (2 * n_tok * n_tok * 4) +
               (n_tok * c * 2))
    wb = max(1, min(nw_total, vmem_budget // max(per_win, 1)))
    while wb > 1 and pl.cdiv(nw_total, wb) < 4:
        wb = max(1, wb // 2)
    return wb


def window_attention_pallas(x_win, wqkv, bqkv, wp, bp, *, num_heads, scale):
    """x_win: (NW, N, C).  Weights in (in_features, out_features) layout so
    y = x @ W + b (== PyTorch Linear's x @ W.T + b)."""
    NW, N, C = x_win.shape

    # Fold the attention scale into the q columns of the QKV weight/bias
    # (exact in fp32, single bf16 round afterwards for the MXU operands).
    wqkv_f = wqkv.astype(jnp.float32).at[:, :C].multiply(scale)
    bqkv_f = bqkv.astype(jnp.float32).at[:, :C].multiply(scale)
    wqkv_bf = wqkv_f.astype(jnp.bfloat16)
    wp_bf = wp.astype(jnp.bfloat16)
    bp_f = bp.astype(jnp.float32)

    budget, vmem_limit = _vmem_budget_and_limit()
    Wb = _pick_window_block(NW, N, C, budget)

    # Pad NW to a multiple of Wb (padded windows are garbage-but-finite and
    # discarded) instead of shrinking Wb to an exact divisor.
    NWp = pl.cdiv(NW, Wb) * Wb
    xw = x_win.astype(jnp.bfloat16)
    if NWp != NW:
        xw = jnp.pad(xw, ((0, NWp - NW), (0, 0), (0, 0)))

    kernel = functools.partial(_window_attn_kernel, num_heads=num_heads)
    out = pl.pallas_call(
        kernel,
        out_shape=jax.ShapeDtypeStruct((NWp, N, C), jnp.bfloat16),
        grid_spec=pltpu.PrefetchScalarGridSpec(
            num_scalar_prefetch=0,
            grid=(NWp // Wb,),
            in_specs=[
                pl.BlockSpec((Wb, N, C), lambda i: (i, 0, 0)),     # bf16 activations
                pl.BlockSpec((C, 3 * C), lambda i: (0, 0)),        # bf16, q pre-scaled
                pl.BlockSpec((1, 3 * C), lambda i: (0, 0)),        # fp32 bias
                pl.BlockSpec((C, C), lambda i: (0, 0)),            # bf16
                pl.BlockSpec((1, C), lambda i: (0, 0)),            # fp32 bias
            ],
            out_specs=pl.BlockSpec((Wb, N, C), lambda i: (i, 0, 0)),
            scratch_shapes=[pltpu.VMEM((Wb * N, C), jnp.bfloat16)],
        ),
        compiler_params=pltpu.CompilerParams(
            dimension_semantics=("parallel",),
            vmem_limit_bytes=vmem_limit),
    )(xw, wqkv_bf, bqkv_f, wp_bf, bp_f)

    if NWp != NW:
        out = out[:NW]
    return out


def window_attention_forward(x, params, *, num_heads, window_size):
    """Full module forward.  x: (B, C, H, W) float32 (NCHW, like PyTorch)."""
    B, C, H, W = x.shape
    assert C % num_heads == 0
    ws = window_size
    head_dim = C // num_heads
    scale = head_dim ** (-0.5)

    pad_h = (ws - H % ws) % ws
    pad_w = (ws - W % ws) % ws
    if pad_h > 0 or pad_w > 0:
        x = jnp.pad(x, ((0, 0), (0, 0), (0, pad_h), (0, pad_w)))
    Hp, Wp = H + pad_h, W + pad_w
    nh, nw = Hp // ws, Wp // ws

    # NCHW -> NHWC (cast to bf16 fuses with this copy) -> window partition.
    xw = jnp.transpose(x, (0, 2, 3, 1)).astype(jnp.bfloat16)
    xw = xw.reshape(B, nh, ws, nw, ws, C)
    xw = jnp.transpose(xw, (0, 1, 3, 2, 4, 5)).reshape(B * nh * nw, ws * ws, C)

    ow = window_attention_pallas(
        xw, params["wqkv"], params["bqkv"], params["wp"], params["bp"],
        num_heads=num_heads, scale=scale)

    # window merge (bf16) -> NHWC -> NCHW, crop padding, cast back to fp32 last.
    o = ow.reshape(B, nh, nw, ws, ws, C)
    o = jnp.transpose(o, (0, 1, 3, 2, 4, 5)).reshape(B, Hp, Wp, C)
    o = jnp.transpose(o, (0, 3, 1, 2))
    if pad_h > 0 or pad_w > 0:
        o = o[:, :, :H, :W]
    return o.astype(jnp.float32)


def window_attention_reference(x, params, *, num_heads, window_size):
    """Pure-JAX fp32 reference mirroring the PyTorch forward (verification)."""
    B, C, H, W = x.shape
    ws = window_size
    head_dim = C // num_heads
    scale = head_dim ** (-0.5)

    pad_h = (ws - H % ws) % ws
    pad_w = (ws - W % ws) % ws
    if pad_h > 0 or pad_w > 0:
        x = jnp.pad(x, ((0, 0), (0, 0), (0, pad_h), (0, pad_w)))
    Hp, Wp = H + pad_h, W + pad_w
    nh, nw = Hp // ws, Wp // ws

    xw = jnp.transpose(x, (0, 2, 3, 1)).reshape(B, nh, ws, nw, ws, C)
    xw = jnp.transpose(xw, (0, 1, 3, 2, 4, 5)).reshape(B, nh * nw, ws * ws, C)

    qkv = xw @ params["wqkv"] + params["bqkv"][0]
    qkv = qkv.reshape(B, nh * nw, ws * ws, 3, num_heads, head_dim)
    qkv = jnp.transpose(qkv, (3, 0, 1, 4, 2, 5))
    q, k, v = qkv[0], qkv[1], qkv[2]
    attn = (q @ jnp.swapaxes(k, -2, -1)) * scale
    attn = jax.nn.softmax(attn, axis=-1)
    o = jnp.swapaxes(attn @ v, 2, 3).reshape(B, nh * nw, ws * ws, C)
    o = o @ params["wp"] + params["bp"][0]

    o = o.reshape(B, nh, nw, ws, ws, C)
    o = jnp.transpose(o, (0, 1, 3, 2, 4, 5)).reshape(B, Hp, Wp, C)
    o = jnp.transpose(o, (0, 3, 1, 2))
    if pad_h > 0 or pad_w > 0:
        o = o[:, :, :H, :W]
    return o


if __name__ == "__main__":
    # Small but representative shapes: dim=32, 4 heads, window_size=8.
    B, C, H, W = 2, 32, 16, 16
    num_heads = 4
    window_size = 8

    key = jax.random.PRNGKey(0)
    kx, kw1, kb1, kw2, kb2 = jax.random.split(key, 5)

    x = jax.random.normal(kx, (B, C, H, W), dtype=jnp.float32)

    # Weights stored as (in_features, out_features): y = x @ W + b.
    params = {
        "wqkv": jax.random.normal(kw1, (C, 3 * C), dtype=jnp.float32) * 0.02,
        "bqkv": jax.random.normal(kb1, (1, 3 * C), dtype=jnp.float32) * 0.02,
        "wp":   jax.random.normal(kw2, (C, C), dtype=jnp.float32) * 0.02,
        "bp":   jax.random.normal(kb2, (1, C), dtype=jnp.float32) * 0.02,
    }

    out = window_attention_forward(x, params, num_heads=num_heads,
                                   window_size=window_size)
    out = jax.block_until_ready(out)

    ref = window_attention_reference(x, params, num_heads=num_heads,
                                     window_size=window_size)
    ref = jax.block_until_ready(ref)

    assert out.shape == (B, C, H, W), out.shape
    # Tolerance accounts for bf16 activations/operands + approx reciprocal.
    assert jnp.allclose(out, ref, atol=5e-3, rtol=5e-2), (
        float(jnp.max(jnp.abs(out - ref))))

    print("KERNEL_OK")
</pallas_src>

<mosaic_0001>
module attributes {stable_mosaic.version = 11 : i64} {
  func.func @_window_attn_kernel(%arg0: i32, %arg1: memref<2x64x32xbf16, #tpu.memory_space<vmem>>, %arg2: memref<32x96xbf16, #tpu.memory_space<vmem>>, %arg3: memref<1x96xf32, #tpu.memory_space<vmem>>, %arg4: memref<32x32xbf16, #tpu.memory_space<vmem>>, %arg5: memref<1x32xf32, #tpu.memory_space<vmem>>, %arg6: memref<2x64x32xbf16, #tpu.memory_space<vmem>>, %arg7: memref<128x32xbf16, #tpu.memory_space<vmem>>) attributes {dimension_semantics = [#tpu.dimension_semantics<parallel>], iteration_bounds = array<i64: 4>, scalar_prefetch = 0 : i64, scratch_operands = 1 : i64, tpu.core_type = #tpu.core_type<tc>, window_params = [{transform_indices = @transform_0, window_bounds = array<i64: 2, 64, 32>}, {pipeline_mode = #tpu.pipeline_mode<synchronous>, transform_indices = @transform_1, window_bounds = array<i64: 32, 96>}, {pipeline_mode = #tpu.pipeline_mode<synchronous>, transform_indices = @transform_2, window_bounds = array<i64: 1, 96>}, {pipeline_mode = #tpu.pipeline_mode<synchronous>, transform_indices = @transform_3, window_bounds = array<i64: 32, 32>}, {pipeline_mode = #tpu.pipeline_mode<synchronous>, transform_indices = @transform_4, window_bounds = array<i64: 1, 32>}, {transform_indices = @transform_5, window_bounds = array<i64: 2, 64, 32>}]} {
    %c0 = arith.constant 0 : index
    %c0_0 = arith.constant 0 : index
    %c0_1 = arith.constant 0 : index
    %0 = vector.load %arg1[%c0, %c0_0, %c0_1] : memref<2x64x32xbf16, #tpu.memory_space<vmem>>, vector<2x64x32xbf16>
    %1 = vector.shape_cast %0 : vector<2x64x32xbf16> to vector<128x32xbf16>
    %c0_2 = arith.constant 0 : index
    %c0_3 = arith.constant 0 : index
    %2 = vector.load %arg2[%c0_2, %c0_3] : memref<32x96xbf16, #tpu.memory_space<vmem>>, vector<32x96xbf16>
    %cst = arith.constant dense<0.000000e+00> : vector<128x96xf32>
    %3 = tpu.matmul %1, %2, %cst {dimension_numbers = #tpu.dot_dimension_numbers<[1], [0], [0], [1], [0, 0, 1, 1], [], []>} : vector<128x32xbf16>, vector<32x96xbf16>, vector<128x96xf32> -> vector<128x96xf32>
    %c0_4 = arith.constant 0 : index
    %c0_5 = arith.constant 0 : index
    %4 = vector.load %arg3[%c0_4, %c0_5] : memref<1x96xf32, #tpu.memory_space<vmem>>, vector<1x96xf32>
    %5 = vector.broadcast %4 : vector<1x96xf32> to vector<128x96xf32>
    %6 = arith.addf %3, %5 : vector<128x96xf32>
    %7 = arith.truncf %6 : vector<128x96xf32> to vector<128x96xbf16>
    %8 = vector.shape_cast %7 : vector<128x96xbf16> to vector<2x64x96xbf16>
    %9 = vector.extract_strided_slice %8 {offsets = [0, 0, 0], sizes = [2, 64, 8], strides = [1, 1, 1]} : vector<2x64x96xbf16> to vector<2x64x8xbf16>
    %10 = vector.extract_strided_slice %8 {offsets = [0, 0, 32], sizes = [2, 64, 8], strides = [1, 1, 1]} : vector<2x64x96xbf16> to vector<2x64x8xbf16>
    %11 = vector.extract_strided_slice %8 {offsets = [0, 0, 64], sizes = [2, 64, 8], strides = [1, 1, 1]} : vector<2x64x96xbf16> to vector<2x64x8xbf16>
    "tpu.trace_start"() <{level = 10 : i32, message = "wqd,wkd->wqk"}> : () -> ()
    %cst_6 = arith.constant dense<0.000000e+00> : vector<2x64x64xf32>
    %12 = tpu.matmul %9, %10, %cst_6 {dimension_numbers = #tpu.dot_dimension_numbers<[2], [2], [1], [1], [0, 0, 0, 1, 1, 1], [0], [0]>} : vector<2x64x8xbf16>, vector<2x64x8xbf16>, vector<2x64x64xf32> -> vector<2x64x64xf32>
    "tpu.trace_stop"() : () -> ()
    %cst_7 = arith.constant dense<0xFF800000> : vector<2x64xf32>
    %13 = vector.multi_reduction <maximumf>, %12, %cst_7 [2] : vector<2x64x64xf32> to vector<2x64xf32>
    %14 = vector.shape_cast %13 : vector<2x64xf32> to vector<2x64x1xf32>
    %15 = vector.broadcast %14 : vector<2x64x1xf32> to vector<2x64x64xf32>
    %16 = arith.subf %12, %15 : vector<2x64x64xf32>
    %17 = math.exp %16 : vector<2x64x64xf32>
    %cst_8 = arith.constant dense<0.000000e+00> : vector<2x64xf32>
    %18 = vector.multi_reduction <add>, %17, %cst_8 [2] : vector<2x64x64xf32> to vector<2x64xf32>
    %19 = vector.shape_cast %18 : vector<2x64xf32> to vector<2x64x1xf32>
    %20 = arith.truncf %17 : vector<2x64x64xf32> to vector<2x64x64xbf16>
    "tpu.trace_start"() <{level = 10 : i32, message = "wqk,wkd->wqd"}> : () -> ()
    %cst_9 = arith.constant dense<0.000000e+00> : vector<2x64x8xf32>
    %21 = tpu.matmul %20, %11, %cst_9 {dimension_numbers = #tpu.dot_dimension_numbers<[2], [1], [1], [2], [0, 0, 0, 1, 1, 2], [0], [0]>} : vector<2x64x64xbf16>, vector<2x64x8xbf16>, vector<2x64x8xf32> -> vector<2x64x8xf32>
    "tpu.trace_stop"() : () -> ()
    %22 = tpu.reciprocal %19 {approx = true} : vector<2x64x1xf32> -> vector<2x64x1xf32>
    %23 = vector.broadcast %22 : vector<2x64x1xf32> to vector<2x64x8xf32>
    %24 = arith.mulf %21, %23 : vector<2x64x8xf32>
    %25 = vector.shape_cast %24 : vector<2x64x8xf32> to vector<128x8xf32>
    %26 = arith.truncf %25 : vector<128x8xf32> to vector<128x8xbf16>
    %c0_10 = arith.constant 0 : index
    %c0_11 = arith.constant 0 : index
    %27 = vector.load %arg7[%c0_10, %c0_11] : memref<128x32xbf16, #tpu.memory_space<vmem>>, vector<128x8xbf16>
    tpu.vector_store %arg7[%c0_10, %c0_11], %26 {strides = array<i32>} : memref<128x32xbf16, #tpu.memory_space<vmem>>, vector<128x8xbf16>,
    %28 = vector.extract_strided_slice %8 {offsets = [0, 0, 8], sizes = [2, 64, 8], strides = [1, 1, 1]} : vector<2x64x96xbf16> to vector<2x64x8xbf16>
    %29 = vector.extract_strided_slice %8 {offsets = [0, 0, 40], sizes = [2, 64, 8], strides = [1, 1, 1]} : vector<2x64x96xbf16> to vector<2x64x8xbf16>
    %30 = vector.extract_strided_slice %8 {offsets = [0, 0, 72], sizes = [2, 64, 8], strides = [1, 1, 1]} : vector<2x64x96xbf16> to vector<2x64x8xbf16>
    "tpu.trace_start"() <{level = 10 : i32, message = "wqd,wkd->wqk"}> : () -> ()
    %cst_12 = arith.constant dense<0.000000e+00> : vector<2x64x64xf32>
    %31 = tpu.matmul %28, %29, %cst_12 {dimension_numbers = #tpu.dot_dimension_numbers<[2], [2], [1], [1], [0, 0, 0, 1, 1, 1], [0], [0]>} : vector<2x64x8xbf16>, vector<2x64x8xbf16>, vector<2x64x64xf32> -> vector<2x64x64xf32>
    "tpu.trace_stop"() : () -> ()
    %cst_13 = arith.constant dense<0xFF800000> : vector<2x64xf32>
    %32 = vector.multi_reduction <maximumf>, %31, %cst_13 [2] : vector<2x64x64xf32> to vector<2x64xf32>
    %33 = vector.shape_cast %32 : vector<2x64xf32> to vector<2x64x1xf32>
    %34 = vector.broadcast %33 : vector<2x64x1xf32> to vector<2x64x64xf32>
    %35 = arith.subf %31, %34 : vector<2x64x64xf32>
    %36 = math.exp %35 : vector<2x64x64xf32>
    %cst_14 = arith.constant dense<0.000000e+00> : vector<2x64xf32>
    %37 = vector.multi_reduction <add>, %36, %cst_14 [2] : vector<2x64x64xf32> to vector<2x64xf32>
    %38 = vector.shape_cast %37 : vector<2x64xf32> to vector<2x64x1xf32>
    %39 = arith.truncf %36 : vector<2x64x64xf32> to vector<2x64x64xbf16>
    "tpu.trace_start"() <{level = 10 : i32, message = "wqk,wkd->wqd"}> : () -> ()
    %cst_15 = arith.constant dense<0.000000e+00> : vector<2x64x8xf32>
    %40 = tpu.matmul %39, %30, %cst_15 {dimension_numbers = #tpu.dot_dimension_numbers<[2], [1], [1], [2], [0, 0, 0, 1, 1, 2], [0], [0]>} : vector<2x64x64xbf16>, vector<2x64x8xbf16>, vector<2x64x8xf32> -> vector<2x64x8xf32>
    "tpu.trace_stop"() : () -> ()
    %41 = tpu.reciprocal %38 {approx = true} : vector<2x64x1xf32> -> vector<2x64x1xf32>
    %42 = vector.broadcast %41 : vector<2x64x1xf32> to vector<2x64x8xf32>
    %43 = arith.mulf %40, %42 : vector<2x64x8xf32>
    %44 = vector.shape_cast %43 : vector<2x64x8xf32> to vector<128x8xf32>
    %45 = arith.truncf %44 : vector<128x8xf32> to vector<128x8xbf16>
    %c0_16 = arith.constant 0 : index
    %c8 = arith.constant 8 : index
    %46 = vector.load %arg7[%c0_16, %c8] : memref<128x32xbf16, #tpu.memory_space<vmem>>, vector<128x8xbf16>
    tpu.vector_store %arg7[%c0_16, %c8], %45 {strides = array<i32>} : memref<128x32xbf16, #tpu.memory_space<vmem>>, vector<128x8xbf16>,
    %47 = vector.extract_strided_slice %8 {offsets = [0, 0, 16], sizes = [2, 64, 8], strides = [1, 1, 1]} : vector<2x64x96xbf16> to vector<2x64x8xbf16>
    %48 = vector.extract_strided_slice %8 {offsets = [0, 0, 48], sizes = [2, 64, 8], strides = [1, 1, 1]} : vector<2x64x96xbf16> to vector<2x64x8xbf16>
    %49 = vector.extract_strided_slice %8 {offsets = [0, 0, 80], sizes = [2, 64, 8], strides = [1, 1, 1]} : vector<2x64x96xbf16> to vector<2x64x8xbf16>
    "tpu.trace_start"() <{level = 10 : i32, message = "wqd,wkd->wqk"}> : () -> ()
    %cst_17 = arith.constant dense<0.000000e+00> : vector<2x64x64xf32>
    %50 = tpu.matmul %47, %48, %cst_17 {dimension_numbers = #tpu.dot_dimension_numbers<[2], [2], [1], [1], [0, 0, 0, 1, 1, 1], [0], [0]>} : vector<2x64x8xbf16>, vector<2x64x8xbf16>, vector<2x64x64xf32> -> vector<2x64x64xf32>
    "tpu.trace_stop"() : () -> ()
    %cst_18 = arith.constant dense<0xFF800000> : vector<2x64xf32>
    %51 = vector.multi_reduction <maximumf>, %50, %cst_18 [2] : vector<2x64x64xf32> to vector<2x64xf32>
    %52 = vector.shape_cast %51 : vector<2x64xf32> to vector<2x64x1xf32>
    %53 = vector.broadcast %52 : vector<2x64x1xf32> to vector<2x64x64xf32>
    %54 = arith.subf %50, %53 : vector<2x64x64xf32>
    %55 = math.exp %54 : vector<2x64x64xf32>
    %cst_19 = arith.constant dense<0.000000e+00> : vector<2x64xf32>
    %56 = vector.multi_reduction <add>, %55, %cst_19 [2] : vector<2x64x64xf32> to vector<2x64xf32>
    %57 = vector.shape_cast %56 : vector<2x64xf32> to vector<2x64x1xf32>
    %58 = arith.truncf %55 : vector<2x64x64xf32> to vector<2x64x64xbf16>
    "tpu.trace_start"() <{level = 10 : i32, message = "wqk,wkd->wqd"}> : () -> ()
    %cst_20 = arith.constant dense<0.000000e+00> : vector<2x64x8xf32>
    %59 = tpu.matmul %58, %49, %cst_20 {dimension_numbers = #tpu.dot_dimension_numbers<[2], [1], [1], [2], [0, 0, 0, 1, 1, 2], [0], [0]>} : vector<2x64x64xbf16>, vector<2x64x8xbf16>, vector<2x64x8xf32> -> vector<2x64x8xf32>
    "tpu.trace_stop"() : () -> ()
    %60 = tpu.reciprocal %57 {approx = true} : vector<2x64x1xf32> -> vector<2x64x1xf32>
    %61 = vector.broadcast %60 : vector<2x64x1xf32> to vector<2x64x8xf32>
    %62 = arith.mulf %59, %61 : vector<2x64x8xf32>
    %63 = vector.shape_cast %62 : vector<2x64x8xf32> to vector<128x8xf32>
    %64 = arith.truncf %63 : vector<128x8xf32> to vector<128x8xbf16>
    %c0_21 = arith.constant 0 : index
    %c16 = arith.constant 16 : index
    %65 = vector.load %arg7[%c0_21, %c16] : memref<128x32xbf16, #tpu.memory_space<vmem>>, vector<128x8xbf16>
    tpu.vector_store %arg7[%c0_21, %c16], %64 {strides = array<i32>} : memref<128x32xbf16, #tpu.memory_space<vmem>>, vector<128x8xbf16>,
    %66 = vector.extract_strided_slice %8 {offsets = [0, 0, 24], sizes = [2, 64, 8], strides = [1, 1, 1]} : vector<2x64x96xbf16> to vector<2x64x8xbf16>
    %67 = vector.extract_strided_slice %8 {offsets = [0, 0, 56], sizes = [2, 64, 8], strides = [1, 1, 1]} : vector<2x64x96xbf16> to vector<2x64x8xbf16>
    %68 = vector.extract_strided_slice %8 {offsets = [0, 0, 88], sizes = [2, 64, 8], strides = [1, 1, 1]} : vector<2x64x96xbf16> to vector<2x64x8xbf16>
    "tpu.trace_start"() <{level = 10 : i32, message = "wqd,wkd->wqk"}> : () -> ()
    %cst_22 = arith.constant dense<0.000000e+00> : vector<2x64x64xf32>
    %69 = tpu.matmul %66, %67, %cst_22 {dimension_numbers = #tpu.dot_dimension_numbers<[2], [2], [1], [1], [0, 0, 0, 1, 1, 1], [0], [0]>} : vector<2x64x8xbf16>, vector<2x64x8xbf16>, vector<2x64x64xf32> -> vector<2x64x64xf32>
    "tpu.trace_stop"() : () -> ()
    %cst_23 = arith.constant dense<0xFF800000> : vector<2x64xf32>
    %70 = vector.multi_reduction <maximumf>, %69, %cst_23 [2] : vector<2x64x64xf32> to vector<2x64xf32>
    %71 = vector.shape_cast %70 : vector<2x64xf32> to vector<2x64x1xf32>
    %72 = vector.broadcast %71 : vector<2x64x1xf32> to vector<2x64x64xf32>
    %73 = arith.subf %69, %72 : vector<2x64x64xf32>
    %74 = math.exp %73 : vector<2x64x64xf32>
    %cst_24 = arith.constant dense<0.000000e+00> : vector<2x64xf32>
    %75 = vector.multi_reduction <add>, %74, %cst_24 [2] : vector<2x64x64xf32> to vector<2x64xf32>
    %76 = vector.shape_cast %75 : vector<2x64xf32> to vector<2x64x1xf32>
    %77 = arith.truncf %74 : vector<2x64x64xf32> to vector<2x64x64xbf16>
    "tpu.trace_start"() <{level = 10 : i32, message = "wqk,wkd->wqd"}> : () -> ()
    %cst_25 = arith.constant dense<0.000000e+00> : vector<2x64x8xf32>
    %78 = tpu.matmul %77, %68, %cst_25 {dimension_numbers = #tpu.dot_dimension_numbers<[2], [1], [1], [2], [0, 0, 0, 1, 1, 2], [0], [0]>} : vector<2x64x64xbf16>, vector<2x64x8xbf16>, vector<2x64x8xf32> -> vector<2x64x8xf32>
    "tpu.trace_stop"() : () -> ()
    %79 = tpu.reciprocal %76 {approx = true} : vector<2x64x1xf32> -> vector<2x64x1xf32>
    %80 = vector.broadcast %79 : vector<2x64x1xf32> to vector<2x64x8xf32>
    %81 = arith.mulf %78, %80 : vector<2x64x8xf32>
    %82 = vector.shape_cast %81 : vector<2x64x8xf32> to vector<128x8xf32>
    %83 = arith.truncf %82 : vector<128x8xf32> to vector<128x8xbf16>
    %c0_26 = arith.constant 0 : index
    %c24 = arith.constant 24 : index
    %84 = vector.load %arg7[%c0_26, %c24] : memref<128x32xbf16, #tpu.memory_space<vmem>>, vector<128x8xbf16>
    tpu.vector_store %arg7[%c0_26, %c24], %83 {strides = array<i32>} : memref<128x32xbf16, #tpu.memory_space<vmem>>, vector<128x8xbf16>,
    %c0_27 = arith.constant 0 : index
    %c0_28 = arith.constant 0 : index
    %85 = vector.load %arg7[%c0_27, %c0_28] : memref<128x32xbf16, #tpu.memory_space<vmem>>, vector<128x32xbf16>
    %c0_29 = arith.constant 0 : index
    %c0_30 = arith.constant 0 : index
    %86 = vector.load %arg4[%c0_29, %c0_30] : memref<32x32xbf16, #tpu.memory_space<vmem>>, vector<32x32xbf16>
    %cst_31 = arith.constant dense<0.000000e+00> : vector<128x32xf32>
    %87 = tpu.matmul %85, %86, %cst_31 {dimension_numbers = #tpu.dot_dimension_numbers<[1], [0], [0], [1], [0, 0, 1, 1], [], []>} : vector<128x32xbf16>, vector<32x32xbf16>, vector<128x32xf32> -> vector<128x32xf32>
    %c0_32 = arith.constant 0 : index
    %c0_33 = arith.constant 0 : index
    %88 = vector.load %arg5[%c0_32, %c0_33] : memref<1x32xf32, #tpu.memory_space<vmem>>, vector<1x32xf32>
    %89 = vector.broadcast %88 : vector<1x32xf32> to vector<128x32xf32>
    %90 = arith.addf %87, %89 : vector<128x32xf32>
    %91 = vector.shape_cast %90 : vector<128x32xf32> to vector<2x64x32xf32>
    %92 = arith.truncf %91 : vector<2x64x32xf32> to vector<2x64x32xbf16>
    %c0_34 = arith.constant 0 : index
    %c0_35 = arith.constant 0 : index
    %c0_36 = arith.constant 0 : index
    %93 = vector.load %arg6[%c0_34, %c0_35, %c0_36] : memref<2x64x32xbf16, #tpu.memory_space<vmem>>, vector<2x64x32xbf16>
    tpu.vector_store %arg6[%c0_34, %c0_35, %c0_36], %92 {strides = array<i32>} : memref<2x64x32xbf16, #tpu.memory_space<vmem>>, vector<2x64x32xbf16>,
    return
  }
  func.func @transform_0(%arg0: i32) -> (i32, i32, i32) {
    %c0_i32 = arith.constant 0 : i32
    %c0_i32_0 = arith.constant 0 : i32
    %c0_i32_1 = arith.constant 0 : i32
    return %arg0, %c0_i32, %c0_i32_0 : i32, i32, i32
  }
  func.func @transform_1(%arg0: i32) -> (i32, i32) {
    %c0_i32 = arith.constant 0 : i32
    %c0_i32_0 = arith.constant 0 : i32
    %c0_i32_1 = arith.constant 0 : i32
    return %c0_i32, %c0_i32_0 : i32, i32
  }
  func.func @transform_2(%arg0: i32) -> (i32, i32) {
    %c0_i32 = arith.constant 0 : i32
    %c0_i32_0 = arith.constant 0 : i32
    %c0_i32_1 = arith.constant 0 : i32
    return %c0_i32, %c0_i32_0 : i32, i32
  }
  func.func @transform_3(%arg0: i32) -> (i32, i32) {
    %c0_i32 = arith.constant 0 : i32
    %c0_i32_0 = arith.constant 0 : i32
    %c0_i32_1 = arith.constant 0 : i32
    return %c0_i32, %c0_i32_0 : i32, i32
  }
  func.func @transform_4(%arg0: i32) -> (i32, i32) {
    %c0_i32 = arith.constant 0 : i32
    %c0_i32_0 = arith.constant 0 : i32
    %c0_i32_1 = arith.constant 0 : i32
    return %c0_i32, %c0_i32_0 : i32, i32
  }
  func.func @transform_5(%arg0: i32) -> (i32, i32, i32) {
    %c0_i32 = arith.constant 0 : i32
    %c0_i32_0 = arith.constant 0 : i32
    %c0_i32_1 = arith.constant 0 : i32
    return %arg0, %c0_i32, %c0_i32_0 : i32, i32, i32
  }
}

</mosaic_0001>

<llo_original>
// kernel: tpu_custom_call.1
$region0: #{tpu_custom_call.1}
  #allocation0 [shape = 'u32[]', space=smem, size = 0x4, offset = 0x4, fixed_abs, tag = 'smem constant byte address 0x4 - core index']
  #allocation1 [shape = 'u32[144,128]{1,0:T(1,128)}', space=vmem, size = 0x12000, scoped, tag = 'internal scratch']
  #allocation2 [shape = 'bf16[128,32]{1,0:T(16,128)(2,1)}', space=vmem, size = 0x8000, scoped, tag = 'scratch operand']
  %s0 = inlined_call_operand.vmem [shape: bf16[8,64,32], index: 0, kind: input, shape index: {}]
  %s1 = inlined_call_operand.vmem [shape: bf16[32,96], index: 1, kind: input, shape index: {}]
  %s2 = inlined_call_operand.vmem [shape: f32[1,96], index: 2, kind: input, shape index: {}]
  %s3 = inlined_call_operand.vmem [shape: bf16[32,32], index: 3, kind: input, shape index: {}]
  %s4 = inlined_call_operand.vmem [shape: f32[1,32], index: 4, kind: input, shape index: {}]
  %s5 = inlined_call_operand.vmem [shape: bf16[8,64,32], index: 5, kind: output, shape index: {}]
  %s6 = sld [smem:[#allocation0]]
  $region53: #{tpu_custom_call.1} parent=0
    _
  %s8 = ssub.s32 1, %s6
  %s9 = scalar_select 0, %s8, %s6
  loop: start=0, step=1, limit=6
  $region2: #{tpu_custom_call.1} parent=0 // loop_pre_header
    _
  $region3: #{tpu_custom_call.1} parent=0 // loop_header
    %s11 = sphi 0, %s15
    %p12 = scmp.ge.s32.totalorder %s11, 6
    %s21 = sphi 0, %s23
    %s24 = sphi 0, %s21
    %s25 = sphi 0, %s24
    %s41 = sphi 0, %s25
    %s45 = sphi 0, %s45
    %s47 = sphi 0, %s45
    %s48 = sphi 0, %s47
    %s62 = sphi 0, %s48
    %s66 = sphi 0, %s66
    %s68 = sphi 0, %s66
    %s69 = sphi 0, %s68
    %s83 = sphi 0, %s69
    %s87 = sphi 0, %s87
    %s89 = sphi 0, %s87
    %s90 = sphi 0, %s89
    %s104 = sphi 0, %s90
    %s108 = sphi 0, %s108
    %s110 = sphi 0, %s108
    %s111 = sphi 0, %s110
    %s125 = sphi 0, %s111
    %s131 = sphi 0, %s133
    %s134 = sphi 0, %s131
    %s135 = sphi 0, %s134
    %s151 = sphi 0, %s135
  $region4: #{tpu_custom_call.1} parent=0 // loop_header_branch
    %14 = sbr.rel (%p12) target = $region8
  $region5: #{tpu_custom_call.1} parent=0 // loop_body
    %s16 = ssub.s32 %s11, 1
    %s17 = ssub.s32 %s11, 2
    %s18 = sadd.s32 %s11, 1
    %s19 = ssub.s32 %s11, %s18
    %p20 = scmp.eq.s32.totalorder %s19, 0
    %s22 = sadd.s32 %s21, 1
    %s23 = scalar_select %p20, %s21, %s22
    %p26 = pneg %p20
    %p27 = scmp.eq.s32.totalorder %s11, 3
    %p28 = por %p26, %p27
    %p29 = scmp.ne.s32.totalorder %s21, %s24
    %p30 = scmp.eq.s32.totalorder %s11, 0
    %p31 = por %p29, %p30
    %p32 = scmp.ne.s32.totalorder %s21, %s24
    %p33 = scmp.eq.s32.totalorder %s16, 3
    %p34 = por %p32, %p33
    %p35 = scmp.ne.s32.totalorder %s24, %s25
    %p36 = scmp.eq.s32.totalorder %s16, 0
    %p37 = por %p35, %p36
    %p38 = scmp.ne.s32.totalorder %s24, %s25
    %p39 = scmp.eq.s32.totalorder %s17, 3
    %p40 = por %p38, %p39
    %p42 = scmp.ne.s32.totalorder %s25, %s41
    %p43 = scmp.eq.s32.totalorder %s17, 0
    %p44 = por %p42, %p43
    %s46 = sadd.s32 %s45, 1
    %p49 = scmp.eq.s32.totalorder %s11, 3
    %p50 = scmp.ne.s32.totalorder %s45, %s47
    %p51 = scmp.eq.s32.totalorder %s11, 0
    %p52 = por %p50, %p51
    %p53 = scmp.ne.s32.totalorder %s45, %s47
    %p54 = scmp.eq.s32.totalorder %s16, 3
    %p55 = por %p53, %p54
    %p56 = scmp.ne.s32.totalorder %s47, %s48
    %p57 = scmp.eq.s32.totalorder %s16, 0
    %p58 = por %p56, %p57
    %p59 = scmp.ne.s32.totalorder %s47, %s48
    %p60 = scmp.eq.s32.totalorder %s17, 3
    %p61 = por %p59, %p60
    %p63 = scmp.ne.s32.totalorder %s48, %s62
    %p64 = scmp.eq.s32.totalorder %s17, 0
    %p65 = por %p63, %p64
    %s67 = sadd.s32 %s66, 1
    %p70 = scmp.eq.s32.totalorder %s11, 3
    %p71 = scmp.ne.s32.totalorder %s66, %s68
    %p72 = scmp.eq.s32.totalorder %s11, 0
    %p73 = por %p71, %p72
    %p74 = scmp.ne.s32.totalorder %s66, %s68
    %p75 = scmp.eq.s32.totalorder %s16, 3
    %p76 = por %p74, %p75
    %p77 = scmp.ne.s32.totalorder %s68, %s69
    %p78 = scmp.eq.s32.totalorder %s16, 0
    %p79 = por %p77, %p78
    %p80 = scmp.ne.s32.totalorder %s68, %s69
    %p81 = scmp.eq.s32.totalorder %s17, 3
    %p82 = por %p80, %p81
    %p84 = scmp.ne.s32.totalorder %s69, %s83
    %p85 = scmp.eq.s32.totalorder %s17, 0
    %p86 = por %p84, %p85
    %s88 = sadd.s32 %s87, 1
    %p91 = scmp.eq.s32.totalorder %s11, 3
    %p92 = scmp.ne.s32.totalorder %s87, %s89
    %p93 = scmp.eq.s32.totalorder %s11, 0
    %p94 = por %p92, %p93
    %p95 = scmp.ne.s32.totalorder %s87, %s89
    %p96 = scmp.eq.s32.totalorder %s16, 3
    %p97 = por %p95, %p96
    %p98 = scmp.ne.s32.totalorder %s89, %s90
    %p99 = scmp.eq.s32.totalorder %s16, 0
    %p100 = por %p98, %p99
    %p101 = scmp.ne.s32.totalorder %s89, %s90
    %p102 = scmp.eq.s32.totalorder %s17, 3
    %p103 = por %p101, %p102
    %p105 = scmp.ne.s32.totalorder %s90, %s104
    %p106 = scmp.eq.s32.totalorder %s17, 0
    %p107 = por %p105, %p106
    %s109 = sadd.s32 %s108, 1
    %p112 = scmp.eq.s32.totalorder %s11, 3
    %p113 = scmp.ne.s32.totalorder %s108, %s110
    %p114 = scmp.eq.s32.totalorder %s11, 0
    %p115 = por %p113, %p114
    %p116 = scmp.ne.s32.totalorder %s108, %s110
    %p117 = scmp.eq.s32.totalorder %s16, 3
    %p118 = por %p116, %p117
    %p119 = scmp.ne.s32.totalorder %s110, %s111
    %p120 = scmp.eq.s32.totalorder %s16, 0
    %p121 = por %p119, %p120
    %p122 = scmp.ne.s32.totalorder %s110, %s111
    %p123 = scmp.eq.s32.totalorder %s17, 3
    %p124 = por %p122, %p123
    %p126 = scmp.ne.s32.totalorder %s111, %s125
    %p127 = scmp.eq.s32.totalorder %s17, 0
    %p128 = por %p126, %p127
    %s129 = ssub.s32 %s11, %s18
    %p130 = scmp.eq.s32.totalorder %s129, 0
    %s132 = sadd.s32 %s131, 1
    %s133 = scalar_select %p130, %s131, %s132
    %p136 = pneg %p130
    %p137 = scmp.eq.s32.totalorder %s11, 3
    %p138 = por %p136, %p137
    %p139 = scmp.ne.s32.totalorder %s131, %s134
    %p140 = scmp.eq.s32.totalorder %s11, 0
    %p141 = por %p139, %p140
    %p142 = scmp.ne.s32.totalorder %s131, %s134
    %p143 = scmp.eq.s32.totalorder %s16, 3
    %p144 = por %p142, %p143
    %p145 = scmp.ne.s32.totalorder %s134, %s135
    %p146 = scmp.eq.s32.totalorder %s16, 0
    %p147 = por %p145, %p146
    %p148 = scmp.ne.s32.totalorder %s134, %s135
    %p149 = scmp.eq.s32.totalorder %s17, 3
    %p150 = por %p148, %p149
    %p152 = scmp.ne.s32.totalorder %s135, %s151
    %p153 = scmp.eq.s32.totalorder %s17, 0
    %p154 = por %p152, %p153
    %p155 = scmp.le.s32.totalorder 1, %s11
    %p156 = scmp.lt.s32.totalorder %s11, 5
    %p157 = pnand %p155, %p156
    %p158 = pneg %p157
    // Predicated region
    $region9: #{tpu_custom_call.1} parent=5 // pred_check
      _
    $region10: #{tpu_custom_call.1} parent=5 // pred_check_branch
      %160 = sbr.rel (%p157) target = $region12
    $region11: #{tpu_custom_call.1} parent=5 // pred_region
      %s161 = ssub.s32 %s11, 1
      // Predicated region
      $region13: #{tpu_custom_call.1} parent=11 // pred_check
        %p162 = pneg %p58
      $region14: #{tpu_custom_call.1} parent=11 // pred_check_branch
        %164 = sbr.rel (%p162) target = $region16
      $region15: #{tpu_custom_call.1} parent=11 // pred_region
        _
      $region16: #{tpu_custom_call.1} parent=11 // pred_fallthru
        _
      // Predicated region
      $region17: #{tpu_custom_call.1} parent=11 // pred_check
        %p165 = pneg %p79
      $region18: #{tpu_custom_call.1} parent=11 // pred_check_branch
        %167 = sbr.rel (%p165) target = $region20
      $region19: #{tpu_custom_call.1} parent=11 // pred_region
        _
      $region20: #{tpu_custom_call.1} parent=11 // pred_fallthru
        _
      // Predicated region
      $region21: #{tpu_custom_call.1} parent=11 // pred_check
        %p168 = pneg %p100
      $region22: #{tpu_custom_call.1} parent=11 // pred_check_branch
        %170 = sbr.rel (%p168) target = $region24
      $region23: #{tpu_custom_call.1} parent=11 // pred_region
        _
      $region24: #{tpu_custom_call.1} parent=11 // pred_fallthru
        _
      // Predicated region
      $region25: #{tpu_custom_call.1} parent=11 // pred_check
        %p171 = pneg %p121
      $region26: #{tpu_custom_call.1} parent=11 // pred_check_branch
        %173 = sbr.rel (%p171) target = $region28
      $region27: #{tpu_custom_call.1} parent=11 // pred_region
        _
      $region28: #{tpu_custom_call.1} parent=11 // pred_fallthru
        _
    $region12: #{tpu_custom_call.1} parent=5 // pred_fallthru
      _
    %p174 = scmp.lt.s32.totalorder %s11, 4
    // Predicated region
    $region29: #{tpu_custom_call.1} parent=5 // pred_check
      %p175 = pneg %p174
    $region30: #{tpu_custom_call.1} parent=5 // pred_check_branch
      %177 = sbr.rel (%p175) target = $region32
    $region31: #{tpu_custom_call.1} parent=5 // pred_region
      // Predicated region
      $region33: #{tpu_custom_call.1} parent=31 // pred_check
        %p178 = pneg %p31
      $region34: #{tpu_custom_call.1} parent=31 // pred_check_branch
        %180 = sbr.rel (%p178) target = $region36
      $region35: #{tpu_custom_call.1} parent=31 // pred_region
        %s181 = smul.u32 2, %s11
        %p182 = scmp.lt.s32.totalorder %s181, 7
        %s183 = scalar_select %p182, %s181, 7
        %s184 = smul.addr %s183, 8
        %s185 = smul.addr %s184, 4
        %s186 = scalar_lea.vmem %s0, %s185
        %s187 = smul.u32 2, %s11
      $region36: #{tpu_custom_call.1} parent=31 // pred_fallthru
        _
    $region32: #{tpu_custom_call.1} parent=5 // pred_fallthru
      _
    %p188 = scmp.le.s32.totalorder 1, %s11
    %p189 = scmp.lt.s32.totalorder %s11, 5
    %p190 = pnand %p188, %p189
    %p191 = pneg %p190
    // Predicated region
    $region37: #{tpu_custom_call.1} parent=5 // pred_check
      _
    $region38: #{tpu_custom_call.1} parent=5 // pred_check_branch
      %193 = sbr.rel (%p190) target = $region40
    $region39: #{tpu_custom_call.1} parent=5 // pred_region
      %s194 = ssub.s32 %s11, 1
      %s195 = smul.u32 2, %s16
      %p196 = scmp.lt.s32.totalorder %s195, 7
      %s197 = scalar_select %p196, %s195, 7
      %s198 = smul.addr %s197, 8
      %s199 = smul.addr %s198, 4
      %s200 = scalar_lea.vmem %s0, %s199
      %p201 = pneg %p37
      %p202 = pneg %p34
      %p203 = pneg %p58
      %p204 = pneg %p55
      %p205 = pneg %p79
      %p206 = pneg %p76
      %p207 = pneg %p100
      %p208 = pneg %p97
      %p209 = pneg %p121
      %p210 = pneg %p118
      %p211 = pneg %p147
      %p212 = pneg %p144
      %s213 = smul.u32 2, %s16
      %p214 = scmp.lt.s32.totalorder %s213, 7
      %s215 = scalar_select %p214, %s213, 7
      %s216 = smul.addr %s215, 8
      %s217 = smul.addr %s216, 4
      %s218 = scalar_lea.vmem %s5, %s217
      %s219 = smul.u32 2, %s16
      %p220 = scmp.lt.s32.totalorder %s219, 7
      %s221 = scalar_select %p220, %s219, 7
      %s222 = smul.addr %s221, 8
      %s223 = smul.addr %s222, 4
      %s224 = scalar_lea.vmem %s0, %s223
      %s225 = smul.u32 2, %s16
      %s226 = smul.u32 2, %s16
      %p227 = scmp.lt.s32.totalorder %s226, 7
      %s228 = scalar_select %p227, %s226, 7
      %s229 = smul.addr %s228, 8
      %s230 = smul.addr %s229, 4
      %s231 = scalar_lea.vmem %s5, %s230
      %s232 = smul.u32 2, %s16
      %v234 = vld [vmem:[%s224] sm:$0xf]
      %v235 = vld [vmem:[%s224 + $0x4] sm:$0xf]
      %v236 = vld [vmem:[%s224 + $0x8] sm:$0xf]
      %v237 = vld [vmem:[%s224 + $0xc] sm:$0xf]
      %v238 = vld [vmem:[%s224 + $0x10] sm:$0xf]
      %v239 = vld [vmem:[%s224 + $0x14] sm:$0xf]
      %v240 = vld [vmem:[%s224 + $0x18] sm:$0xf]
      %v241 = vld [vmem:[%s224 + $0x1c] sm:$0xf]
      %v242 = vld [vmem:[%s224 + $0x20] sm:$0xf]
      %v243 = vld [vmem:[%s224 + $0x24] sm:$0xf]
      %v244 = vld [vmem:[%s224 + $0x28] sm:$0xf]
      %v245 = vld [vmem:[%s224 + $0x2c] sm:$0xf]
      %v246 = vld [vmem:[%s224 + $0x30] sm:$0xf]
      %v247 = vld [vmem:[%s224 + $0x34] sm:$0xf]
      %v248 = vld [vmem:[%s224 + $0x38] sm:$0xf]
      %v249 = vld [vmem:[%s224 + $0x3c] sm:$0xf]
      %v250 = vld [vmem:[%s1] sm:$0xf]
      %v251 = vld [vmem:[%s1 + $0x4] sm:$0xf]
      %v252 = vld [vmem:[%s1 + $0x8] sm:$0xf]
      %v253 = vld [vmem:[%s1 + $0xc] sm:$0xf]
      %v254 = vld [vmem:[%s2] sm:$0x1]
      %v256 = vlaneseq
      %v257 = vshrl.u32 %v256, 7
      %v258 = vsub.s32 0, %v257
      %v259 = vrot.slane %v254, %v258
      %v277 = vunpack.c.l.b16 %v234
      %v278 = vunpack.c.l.b16 %v235
      %v279 = vunpack.c.l.b16 %v236
      %v280 = vunpack.c.l.b16 %v237
      %v281 = vunpack.c.l.b16 %v238
      %v282 = vunpack.c.l.b16 %v239
      %v283 = vunpack.c.l.b16 %v240
      %v284 = vunpack.c.l.b16 %v241
      %v285 = vunpack.c.l.b16 %v242
      %v286 = vunpack.c.l.b16 %v243
      %v287 = vunpack.c.l.b16 %v244
      %v288 = vunpack.c.l.b16 %v245
      %v289 = vunpack.c.l.b16 %v246
      %v290 = vunpack.c.l.b16 %v247
      %v291 = vunpack.c.l.b16 %v248
      %v292 = vunpack.c.l.b16 %v249
      %v293 = vpack.c.b16 %v278, %v277
      %v294 = vpack.c.b16 %v280, %v279
      %v295 = vpack.c.b16 %v282, %v281
      %v296 = vpack.c.b16 %v284, %v283
      %v297 = vpack.c.b16 %v286, %v285
      %v298 = vpack.c.b16 %v288, %v287
      %v299 = vpack.c.b16 %v290, %v289
      %v300 = vpack.c.b16 %v292, %v291
      %v305 = vunpack.c.l.b16 %v250
      %v306 = vunpack.c.l.b16 %v251
      %v307 = vunpack.c.l.b16 %v252
      %v308 = vunpack.c.l.b16 %v253
      %v309 = vpack.c.b16 %v306, %v305
      %v310 = vpack.c.b16 %v308, %v307
      %vm313 = vcmask 261120
      %v315 = vsel %vm313, %v293, 0
      %v318 = vsel %vm313, %v294, 0
      %v321 = vsel %vm313, %v295, 0
      %v324 = vsel %vm313, %v296, 0
      %v327 = vsel %vm313, %v297, 0
      %v330 = vsel %vm313, %v298, 0
      %v333 = vsel %vm313, %v299, 0
      %v336 = vsel %vm313, %v300, 0
      %338 = vmatprep.subr.bf16.mxu0 0
      %339 = vmatpush1.bf16.msra.mxu0 %v309
      %340 = vmatprep.subr.bf16.mxu0 0
      %341 = vmatpush1.bf16.msra.mxu0 %v310
      %342 = vmatprep.subr.bf16.mxu0 0
      %343 = vmatpush1.bf16.msra.mxu0 0
      %344 = vmatprep.subr.bf16.mxu0 0
      %345 = vmatpush1.bf16.msra.mxu0 0
      %346 = vmatprep.subr.bf16.mxu0 0
      %347 = vmatpush1.bf16.msra.mxu0 0
      %348 = vmatprep.subr.bf16.mxu0 0
      %349 = vmatpush1.bf16.msra.mxu0 0
      %350 = vmatprep.subr.bf16.mxu0 0
      %351 = vmatpush1.bf16.msra.mxu0 0
      %352 = vmatprep.subr.bf16.mxu0 0
      %353 = vmatpush1.bf16.msra.mxu0 0
      %354 = vmatprep.subr.bf16.mxu0 0
      %355 = vmatpush1.bf16.msra.mxu0 0
      %356 = vmatprep.subr.bf16.mxu0 0
      %357 = vmatpush1.bf16.msra.mxu0 0
      %358 = vmatprep.subr.bf16.mxu0 0
      %359 = vmatpush1.bf16.msra.mxu0 0
      %360 = vmatprep.subr.bf16.mxu0 0
      %361 = vmatpush1.bf16.msra.mxu0 0
      %362 = vmatprep.subr.bf16.mxu0 0
      %363 = vmatpush1.bf16.msra.mxu0 0
      %364 = vmatprep.subr.bf16.mxu0 0
      %365 = vmatpush1.bf16.msra.mxu0 0
      %366 = vmatprep.subr.bf16.mxu0 0
      %367 = vmatpush1.bf16.msra.mxu0 0
      %368 = vmatprep.subr.bf16.mxu0 0
      %369 = vmatpush1.bf16.msra.mxu0 0
      %370 = vmatprep.mubr.bf16.mxu0 0
      %371 = vmatmul.mubr.bf16.gmra.mrb[0].mxu0 %v315
      %v372 = vpop.f32.mrb[0].mxu0
      %v373 = vadd.f32 %v259, %v372
      %v374 = vpop.f32.mrb[0].mxu0
      %v375 = vpop.f32.mrb[0].mxu0
      %v376 = vadd.f32 %v259, %v375
      %v377 = vpop.f32.mrb[0].mxu0
      %378 = vmatprep.mubr.bf16.mxu0 0
      %379 = vmatmul.mubr.bf16.gmra.mrb[0].mxu0 %v318
      %v380 = vpop.f32.mrb[0].mxu0
      %v381 = vadd.f32 %v259, %v380
      %v382 = vpop.f32.mrb[0].mxu0
      %v383 = vpop.f32.mrb[0].mxu0
      %v384 = vadd.f32 %v259, %v383
      %v385 = vpop.f32.mrb[0].mxu0
      %386 = vmatprep.mubr.bf16.mxu0 0
      %387 = vmatmul.mubr.bf16.gmra.mrb[0].mxu0 %v321
      %v388 = vpop.f32.mrb[0].mxu0
      %v389 = vadd.f32 %v259, %v388
      %v390 = vpop.f32.mrb[0].mxu0
      %v391 = vpop.f32.mrb[0].mxu0
      %v392 = vadd.f32 %v259, %v391
      %v393 = vpop.f32.mrb[0].mxu0
      %394 = vmatprep.mubr.bf16.mxu0 0
      %395 = vmatmul.mubr.bf16.gmra.mrb[0].mxu0 %v324
      %v396 = vpop.f32.mrb[0].mxu0
      %v397 = vadd.f32 %v259, %v396
      %v398 = vpop.f32.mrb[0].mxu0
      %v399 = vpop.f32.mrb[0].mxu0
      %v400 = vadd.f32 %v259, %v399
      %v401 = vpop.f32.mrb[0].mxu0
      %402 = vmatprep.mubr.bf16.mxu0 0
      %403 = vmatmul.mubr.bf16.gmra.mrb[0].mxu0 %v327
      %v404 = vpop.f32.mrb[0].mxu0
      %v405 = vadd.f32 %v259, %v404
      %v406 = vpop.f32.mrb[0].mxu0
      %v407 = vpop.f32.mrb[0].mxu0
      %v408 = vadd.f32 %v259, %v407
      %v409 = vpop.f32.mrb[0].mxu0
      %410 = vmatprep.mubr.bf16.mxu0 0
      %411 = vmatmul.mubr.bf16.gmra.mrb[0].mxu0 %v330
      %v412 = vpop.f32.mrb[0].mxu0
      %v413 = vadd.f32 %v259, %v412
      %v414 = vpop.f32.mrb[0].mxu0
      %v415 = vpop.f32.mrb[0].mxu0
      %v416 = vadd.f32 %v259, %v415
      %v417 = vpop.f32.mrb[0].mxu0
      %418 = vmatprep.mubr.bf16.mxu0 0
      %419 = vmatmul.mubr.bf16.gmra.mrb[0].mxu0 %v333
      %v420 = vpop.f32.mrb[0].mxu0
      %v421 = vadd.f32 %v259, %v420
      %v422 = vpop.f32.mrb[0].mxu0
      %v423 = vpop.f32.mrb[0].mxu0
      %v424 = vadd.f32 %v259, %v423
      %v425 = vpop.f32.mrb[0].mxu0
      %426 = vmatprep.mubr.bf16.mxu0 0
      %427 = vmatmul.mubr.bf16.gmra.mrb[0].mxu0 %v336
      %v428 = vpop.f32.mrb[0].mxu0
      %v429 = vadd.f32 %v259, %v428
      %v430 = vpop.f32.mrb[0].mxu0
      %v431 = vpop.f32.mrb[0].mxu0
      %v432 = vadd.f32 %v259, %v431
      %v433 = vpop.f32.mrb[0].mxu0
      %434 = vdwg.mxu0
      %v435 = vpack.c.bf16 %v376, %v373
      %v436 = vpack.c.bf16 %v384, %v381
      %v437 = vpack.c.bf16 %v392, %v389
      %v438 = vpack.c.bf16 %v400, %v397
      %v439 = vpack.c.bf16 %v408, %v405
      %v440 = vpack.c.bf16 %v416, %v413
      %v441 = vpack.c.bf16 %v424, %v421
      %v442 = vpack.c.bf16 %v432, %v429
      %447 = vrot.lane.b32.xlu0 %v435, 96
      %v448 = vpop.permute.xlu0 %447
      %449 = vrot.lane.b32.xlu0 %v436, 96
      %v450 = vpop.permute.xlu0 %449
      %451 = vrot.lane.b32.xlu0 %v437, 96
      %v452 = vpop.permute.xlu0 %451
      %453 = vrot.lane.b32.xlu0 %v438, 96
      %v454 = vpop.permute.xlu0 %453
      %vm455 = vcmask 64512
      %v457 = vsel %vm455, %v435, 0
      %v460 = vsel %vm455, %v436, 0
      %v463 = vsel %vm455, %v437, 0
      %v466 = vsel %vm455, %v438, 0
      %v469 = vsel %vm455, %v448, 0
      %v472 = vsel %vm455, %v450, 0
      %v475 = vsel %vm455, %v452, 0
      %v478 = vsel %vm455, %v454, 0
      %480 = vmatprep.subr.bf16.mxu0 0
      %481 = vmatpush1.bf16.xpose.msra.mxu0 %v469
      %482 = vmatprep.subr.bf16.mxu0 0
      %483 = vmatpush1.bf16.xpose.msra.mxu0 %v472
      %484 = vmatprep.subr.bf16.mxu0 0
      %485 = vmatpush1.bf16.xpose.msra.mxu0 %v475
      %486 = vmatprep.subr.bf16.mxu0 0
      %487 = vmatpush1.bf16.xpose.msra.mxu0 %v478
      %488 = vmatprep.subr.bf16.mxu0 0
      %489 = vmatpush1.bf16.xpose.msra.mxu0 0
      %490 = vmatprep.subr.bf16.mxu0 0
      %491 = vmatpush1.bf16.xpose.msra.mxu0 0
      %492 = vmatprep.subr.bf16.mxu0 0
      %493 = vmatpush1.bf16.xpose.msra.mxu0 0
      %494 = vmatprep.subr.bf16.mxu0 0
      %495 = vmatpush1.bf16.xpose.msra.mxu0 0
      %496 = vmatprep.subr.bf16.mxu0 0
      %497 = vmatpush1.bf16.xpose.msra.mxu0 0
      %498 = vmatprep.subr.bf16.mxu0 0
      %499 = vmatpush1.bf16.xpose.msra.mxu0 0
      %500 = vmatprep.subr.bf16.mxu0 0
      %501 = vmatpush1.bf16.xpose.msra.mxu0 0
      %502 = vmatprep.subr.bf16.mxu0 0
      %503 = vmatpush1.bf16.xpose.msra.mxu0 0
      %504 = vmatprep.subr.bf16.mxu0 0
      %505 = vmatpush1.bf16.xpose.msra.mxu0 0
      %506 = vmatprep.subr.bf16.mxu0 0
      %507 = vmatpush1.bf16.xpose.msra.mxu0 0
      %508 = vmatprep.subr.bf16.mxu0 0
      %509 = vmatpush1.bf16.xpose.msra.mxu0 0
      %510 = vmatprep.subr.bf16.mxu0 0
      %511 = vmatpush1.bf16.xpose.msra.mxu0 0
      %512 = vmatprep.mubr.bf16.mxu0 0
      %513 = vmatmul.mubr.bf16.gmra.mrb[0].mxu0 %v457
      %v514 = vpop.f32.mrb[0].mxu0
      %v515 = vadd.f32 0.0, %v514
      %v516 = vpop.f32.mrb[0].mxu0
      %v517 = vpop.f32.mrb[0].mxu0
      %v518 = vadd.f32 0.0, %v517
      %v519 = vpop.f32.mrb[0].mxu0
      %520 = vmatprep.mubr.bf16.mxu0 0
      %521 = vmatmul.mubr.bf16.gmra.mrb[0].mxu0 %v460
      %v522 = vpop.f32.mrb[0].mxu0
      %v523 = vadd.f32 0.0, %v522
      %v524 = vpop.f32.mrb[0].mxu0
      %v525 = vpop.f32.mrb[0].mxu0
      %v526 = vadd.f32 0.0, %v525
      %v527 = vpop.f32.mrb[0].mxu0
      %528 = vmatprep.mubr.bf16.mxu0 0
      %529 = vmatmul.mubr.bf16.gmra.mrb[0].mxu0 %v463
      %v530 = vpop.f32.mrb[0].mxu0
      %v531 = vadd.f32 0.0, %v530
      %v532 = vpop.f32.mrb[0].mxu0
      %v533 = vpop.f32.mrb[0].mxu0
      %v534 = vadd.f32 0.0, %v533
      %v535 = vpop.f32.mrb[0].mxu0
      %536 = vmatprep.mubr.bf16.mxu0 0
      %537 = vmatmul.mubr.bf16.gmra.mrb[0].mxu0 %v466
      %v538 = vpop.f32.mrb[0].mxu0
      %v539 = vadd.f32 0.0, %v538
      %v540 = vpop.f32.mrb[0].mxu0
      %v541 = vpop.f32.mrb[0].mxu0
      %v542 = vadd.f32 0.0, %v541
      %v543 = vpop.f32.mrb[0].mxu0
      %544 = vdwg.mxu0
      %549 = vrot.lane.b32.xlu0 %v439, 96
      %v550 = vpop.permute.xlu0 %549
      %551 = vrot.lane.b32.xlu0 %v440, 96
      %v552 = vpop.permute.xlu0 %551
      %553 = vrot.lane.b32.xlu0 %v441, 96
      %v554 = vpop.permute.xlu0 %553
      %555 = vrot.lane.b32.xlu0 %v442, 96
      %v556 = vpop.permute.xlu0 %555
      %v558 = vsel %vm455, %v439, 0
      %v561 = vsel %vm455, %v440, 0
      %v564 = vsel %vm455, %v441, 0
      %v567 = vsel %vm455, %v442, 0
      %v570 = vsel %vm455, %v550, 0
      %v573 = vsel %vm455, %v552, 0
      %v576 = vsel %vm455, %v554, 0
      %v579 = vsel %vm455, %v556, 0
      %581 = vmatprep.subr.bf16.mxu0 0
      %582 = vmatpush1.bf16.xpose.msra.mxu0 %v570
      %583 = vmatprep.subr.bf16.mxu0 0
      %584 = vmatpush1.bf16.xpose.msra.mxu0 %v573
      %585 = vmatprep.subr.bf16.mxu0 0
      %586 = vmatpush1.bf16.xpose.msra.mxu0 %v576
      %587 = vmatprep.subr.bf16.mxu0 0
      %588 = vmatpush1.bf16.xpose.msra.mxu0 %v579
      %589 = vmatprep.subr.bf16.mxu0 0
      %590 = vmatpush1.bf16.xpose.msra.mxu0 0
      %591 = vmatprep.subr.bf16.mxu0 0
      %592 = vmatpush1.bf16.xpose.msra.mxu0 0
      %593 = vmatprep.subr.bf16.mxu0 0
      %594 = vmatpush1.bf16.xpose.msra.mxu0 0
      %595 = vmatprep.subr.bf16.mxu0 0
      %596 = vmatpush1.bf16.xpose.msra.mxu0 0
      %597 = vmatprep.subr.bf16.mxu0 0
      %598 = vmatpush1.bf16.xpose.msra.mxu0 0
      %599 = vmatprep.subr.bf16.mxu0 0
      %600 = vmatpush1.bf16.xpose.msra.mxu0 0
      %601 = vmatprep.subr.bf16.mxu0 0
      %602 = vmatpush1.bf16.xpose.msra.mxu0 0
      %603 = vmatprep.subr.bf16.mxu0 0
      %604 = vmatpush1.bf16.xpose.msra.mxu0 0
      %605 = vmatprep.subr.bf16.mxu0 0
      %606 = vmatpush1.bf16.xpose.msra.mxu0 0
      %607 = vmatprep.subr.bf16.mxu0 0
      %608 = vmatpush1.bf16.xpose.msra.mxu0 0
      %609 = vmatprep.subr.bf16.mxu0 0
      %610 = vmatpush1.bf16.xpose.msra.mxu0 0
      %611 = vmatprep.subr.bf16.mxu0 0
      %612 = vmatpush1.bf16.xpose.msra.mxu0 0
      %613 = vmatprep.mubr.bf16.mxu0 0
      %614 = vmatmul.mubr.bf16.gmra.mrb[0].mxu0 %v558
      %v615 = vpop.f32.mrb[0].mxu0
      %v616 = vadd.f32 0.0, %v615
      %v617 = vpop.f32.mrb[0].mxu0
      %v618 = vpop.f32.mrb[0].mxu0
      %v619 = vadd.f32 0.0, %v618
      %v620 = vpop.f32.mrb[0].mxu0
      %621 = vmatprep.mubr.bf16.mxu0 0
      %622 = vmatmul.mubr.bf16.gmra.mrb[0].mxu0 %v561
      %v623 = vpop.f32.mrb[0].mxu0
      %v624 = vadd.f32 0.0, %v623
      %v625 = vpop.f32.mrb[0].mxu0
      %v626 = vpop.f32.mrb[0].mxu0
      %v627 = vadd.f32 0.0, %v626
      %v628 = vpop.f32.mrb[0].mxu0
      %629 = vmatprep.mubr.bf16.mxu0 0
      %630 = vmatmul.mubr.bf16.gmra.mrb[0].mxu0 %v564
      %v631 = vpop.f32.mrb[0].mxu0
      %v632 = vadd.f32 0.0, %v631
      %v633 = vpop.f32.mrb[0].mxu0
      %v634 = vpop.f32.mrb[0].mxu0
      %v635 = vadd.f32 0.0, %v634
      %v636 = vpop.f32.mrb[0].mxu0
      %637 = vmatprep.mubr.bf16.mxu0 0
      %638 = vmatmul.mubr.bf16.gmra.mrb[0].mxu0 %v567
      %v639 = vpop.f32.mrb[0].mxu0
      %v640 = vadd.f32 0.0, %v639
      %v641 = vpop.f32.mrb[0].mxu0
      %v642 = vpop.f32.mrb[0].mxu0
      %v643 = vadd.f32 0.0, %v642
      %v644 = vpop.f32.mrb[0].mxu0
      %645 = vdwg.mxu0
      %vm646 = vcmask 523264
      %v647 = vsel %vm646, %v515, -inf
      %648 = vmax.xlane.f32.xlu0 %v647
      %v649 = vpop.xlane.xlu0 %648
      %v650 = vsel %vm646, %v518, -inf
      %651 = vmax.xlane.f32.xlu0 %v650
      %v652 = vpop.xlane.xlu0 %651
      %v653 = vsel %vm646, %v523, -inf
      %654 = vmax.xlane.f32.xlu0 %v653
      %v655 = vpop.xlane.xlu0 %654
      %v656 = vsel %vm646, %v526, -inf
      %657 = vmax.xlane.f32.xlu0 %v656
      %v658 = vpop.xlane.xlu0 %657
      %v659 = vsel %vm646, %v531, -inf
      %660 = vmax.xlane.f32.xlu0 %v659
      %v661 = vpop.xlane.xlu0 %660
      %v662 = vsel %vm646, %v534, -inf
      %663 = vmax.xlane.f32.xlu0 %v662
      %v664 = vpop.xlane.xlu0 %663
      %v665 = vsel %vm646, %v539, -inf
      %666 = vmax.xlane.f32.xlu0 %v665
      %v667 = vpop.xlane.xlu0 %666
      %v668 = vsel %vm646, %v542, -inf
      %669 = vmax.xlane.f32.xlu0 %v668
      %v670 = vpop.xlane.xlu0 %669
      %v671 = vsel %vm646, %v616, -inf
      %672 = vmax.xlane.f32.xlu0 %v671
      %v673 = vpop.xlane.xlu0 %672
      %v674 = vsel %vm646, %v619, -inf
      %675 = vmax.xlane.f32.xlu0 %v674
      %v676 = vpop.xlane.xlu0 %675
      %v677 = vsel %vm646, %v624, -inf
      %678 = vmax.xlane.f32.xlu0 %v677
      %v679 = vpop.xlane.xlu0 %678
      %v680 = vsel %vm646, %v627, -inf
      %681 = vmax.xlane.f32.xlu0 %v680
      %v682 = vpop.xlane.xlu0 %681
      %v683 = vsel %vm646, %v632, -inf
      %684 = vmax.xlane.f32.xlu0 %v683
      %v685 = vpop.xlane.xlu0 %684
      %v686 = vsel %vm646, %v635, -inf
      %687 = vmax.xlane.f32.xlu0 %v686
      %v688 = vpop.xlane.xlu0 %687
      %v689 = vsel %vm646, %v640, -inf
      %690 = vmax.xlane.f32.xlu0 %v689
      %v691 = vpop.xlane.xlu0 %690
      %v692 = vsel %vm646, %v643, -inf
      %693 = vmax.xlane.f32.xlu0 %v692
      %v694 = vpop.xlane.xlu0 %693
      %v695 = vsub.f32 %v515, %v649
      %v696 = vsub.f32 %v518, %v652
      %v697 = vsub.f32 %v523, %v655
      %v698 = vsub.f32 %v526, %v658
      %v699 = vsub.f32 %v531, %v661
      %v700 = vsub.f32 %v534, %v664
      %v701 = vsub.f32 %v539, %v667
      %v702 = vsub.f32 %v542, %v670
      %v703 = vsub.f32 %v616, %v673
      %v704 = vsub.f32 %v619, %v676
      %v705 = vsub.f32 %v624, %v679
      %v706 = vsub.f32 %v627, %v682
      %v707 = vsub.f32 %v632, %v685
      %v708 = vsub.f32 %v635, %v688
      %v709 = vsub.f32 %v640, %v691
      %v710 = vsub.f32 %v643, %v694
      %v711 = vmul.f32 %v695, 1.442695
      %v712 = vpow.pop %v711
      %v713 = vmul.f32 %v696, 1.442695
      %v714 = vpow.pop %v713
      %v715 = vmul.f32 %v697, 1.442695
      %v716 = vpow.pop %v715
      %v717 = vmul.f32 %v698, 1.442695
      %v718 = vpow.pop %v717
      %v719 = vmul.f32 %v699, 1.442695
      %v720 = vpow.pop %v719
      %v721 = vmul.f32 %v700, 1.442695
      %v722 = vpow.pop %v721
      %v723 = vmul.f32 %v701, 1.442695
      %v724 = vpow.pop %v723
      %v725 = vmul.f32 %v702, 1.442695
      %v726 = vpow.pop %v725
      %v727 = vmul.f32 %v703, 1.442695
      %v728 = vpow.pop %v727
      %v729 = vmul.f32 %v704, 1.442695
      %v730 = vpow.pop %v729
      %v731 = vmul.f32 %v705, 1.442695
      %v732 = vpow.pop %v731
      %v733 = vmul.f32 %v706, 1.442695
      %v734 = vpow.pop %v733
      %v735 = vmul.f32 %v707, 1.442695
      %v736 = vpow.pop %v735
      %v737 = vmul.f32 %v708, 1.442695
      %v738 = vpow.pop %v737
      %v739 = vmul.f32 %v709, 1.442695
      %v740 = vpow.pop %v739
      %v741 = vmul.f32 %v710, 1.442695
      %v742 = vpow.pop %v741
      %v743 = vsel %vm646, %v712, 0.0
      %744 = vadd.xlane.f32.xlu0 %v743
      %v745 = vpop.xlane.xlu0 %744
      %v746 = vsel %vm646, %v714, 0.0
      %747 = vadd.xlane.f32.xlu0 %v746
      %v748 = vpop.xlane.xlu0 %747
      %v749 = vsel %vm646, %v716, 0.0
      %750 = vadd.xlane.f32.xlu0 %v749
      %v751 = vpop.xlane.xlu0 %750
      %v752 = vsel %vm646, %v718, 0.0
      %753 = vadd.xlane.f32.xlu0 %v752
      %v754 = vpop.xlane.xlu0 %753
      %v755 = vsel %vm646, %v720, 0.0
      %756 = vadd.xlane.f32.xlu0 %v755
      %v757 = vpop.xlane.xlu0 %756
      %v758 = vsel %vm646, %v722, 0.0
      %759 = vadd.xlane.f32.xlu0 %v758
      %v760 = vpop.xlane.xlu0 %759
      %v761 = vsel %vm646, %v724, 0.0
      %762 = vadd.xlane.f32.xlu0 %v761
      %v763 = vpop.xlane.xlu0 %762
      %v764 = vsel %vm646, %v726, 0.0
      %765 = vadd.xlane.f32.xlu0 %v764
      %v766 = vpop.xlane.xlu0 %765
      %v767 = vsel %vm646, %v728, 0.0
      %768 = vadd.xlane.f32.xlu0 %v767
      %v769 = vpop.xlane.xlu0 %768
      %v770 = vsel %vm646, %v730, 0.0
      %771 = vadd.xlane.f32.xlu0 %v770
      %v772 = vpop.xlane.xlu0 %771
      %v773 = vsel %vm646, %v732, 0.0
      %774 = vadd.xlane.f32.xlu0 %v773
      %v775 = vpop.xlane.xlu0 %774
      %v776 = vsel %vm646, %v734, 0.0
      %777 = vadd.xlane.f32.xlu0 %v776
      %v778 = vpop.xlane.xlu0 %777
      %v779 = vsel %vm646, %v736, 0.0
      %780 = vadd.xlane.f32.xlu0 %v779
      %v781 = vpop.xlane.xlu0 %780
      %v782 = vsel %vm646, %v738, 0.0
      %783 = vadd.xlane.f32.xlu0 %v782
      %v784 = vpop.xlane.xlu0 %783
      %v785 = vsel %vm646, %v740, 0.0
      %786 = vadd.xlane.f32.xlu0 %v785
      %v787 = vpop.xlane.xlu0 %786
      %v788 = vsel %vm646, %v742, 0.0
      %789 = vadd.xlane.f32.xlu0 %v788
      %v790 = vpop.xlane.xlu0 %789
      %v791 = vpack.c.bf16 %v714, %v712
      %v792 = vpack.c.bf16 %v718, %v716
      %v793 = vpack.c.bf16 %v722, %v720
      %v794 = vpack.c.bf16 %v726, %v724
      %v795 = vpack.c.bf16 %v730, %v728
      %v796 = vpack.c.bf16 %v734, %v732
      %v797 = vpack.c.bf16 %v738, %v736
      %v798 = vpack.c.bf16 %v742, %v740
      %799 = vrot.lane.b32.xlu0 %v435, 64
      %v800 = vpop.permute.xlu0 %799
      %801 = vrot.lane.b32.xlu0 %v436, 64
      %v802 = vpop.permute.xlu0 %801
      %803 = vrot.lane.b32.xlu0 %v437, 64
      %v804 = vpop.permute.xlu0 %803
      %805 = vrot.lane.b32.xlu0 %v438, 64
      %v806 = vpop.permute.xlu0 %805
      %v812 = vsel %vm646, %v791, 0
      %v815 = vsel %vm646, %v792, 0
      %v818 = vsel %vm646, %v793, 0
      %v821 = vsel %vm646, %v794, 0
      %823 = vmatprep.subr.bf16.mxu0 0
      %824 = vmatpush1.bf16.msra.mxu0 %v800
      %825 = vmatprep.subr.bf16.mxu0 0
      %826 = vmatpush1.bf16.msra.mxu0 %v802
      %827 = vmatprep.subr.bf16.mxu0 0
      %828 = vmatpush1.bf16.msra.mxu0 %v804
      %829 = vmatprep.subr.bf16.mxu0 0
      %830 = vmatpush1.bf16.msra.mxu0 %v806
      %831 = vmatprep.subr.bf16.mxu0 0
      %832 = vmatpush1.bf16.msra.mxu0 0
      %833 = vmatprep.subr.bf16.mxu0 0
      %834 = vmatpush1.bf16.msra.mxu0 0
      %835 = vmatprep.subr.bf16.mxu0 0
      %836 = vmatpush1.bf16.msra.mxu0 0
      %837 = vmatprep.subr.bf16.mxu0 0
      %838 = vmatpush1.bf16.msra.mxu0 0
      %839 = vmatprep.subr.bf16.mxu0 0
      %840 = vmatpush1.bf16.msra.mxu0 0
      %841 = vmatprep.subr.bf16.mxu0 0
      %842 = vmatpush1.bf16.msra.mxu0 0
      %843 = vmatprep.subr.bf16.mxu0 0
      %844 = vmatpush1.bf16.msra.mxu0 0
      %845 = vmatprep.subr.bf16.mxu0 0
      %846 = vmatpush1.bf16.msra.mxu0 0
      %847 = vmatprep.subr.bf16.mxu0 0
      %848 = vmatpush1.bf16.msra.mxu0 0
      %849 = vmatprep.subr.bf16.mxu0 0
      %850 = vmatpush1.bf16.msra.mxu0 0
      %851 = vmatprep.subr.bf16.mxu0 0
      %852 = vmatpush1.bf16.msra.mxu0 0
      %853 = vmatprep.subr.bf16.mxu0 0
      %854 = vmatpush1.bf16.msra.mxu0 0
      %855 = vmatprep.mubr.bf16.mxu0 0
      %856 = vmatmul.mubr.bf16.gmra.mrb[0].mxu0 %v812
      %v857 = vpop.f32.mrb[0].mxu0
      %v858 = vadd.f32 0.0, %v857
      %v859 = vpop.f32.mrb[0].mxu0
      %v860 = vpop.f32.mrb[0].mxu0
      %v861 = vadd.f32 0.0, %v860
      %v862 = vpop.f32.mrb[0].mxu0
      %863 = vmatprep.mubr.bf16.mxu0 0
      %864 = vmatmul.mubr.bf16.gmra.mrb[0].mxu0 %v815
      %v865 = vpop.f32.mrb[0].mxu0
      %v866 = vadd.f32 0.0, %v865
      %v867 = vpop.f32.mrb[0].mxu0
      %v868 = vpop.f32.mrb[0].mxu0
      %v869 = vadd.f32 0.0, %v868
      %v870 = vpop.f32.mrb[0].mxu0
      %871 = vmatprep.mubr.bf16.mxu0 0
      %872 = vmatmul.mubr.bf16.gmra.mrb[0].mxu0 %v818
      %v873 = vpop.f32.mrb[0].mxu0
      %v874 = vadd.f32 0.0, %v873
      %v875 = vpop.f32.mrb[0].mxu0
      %v876 = vpop.f32.mrb[0].mxu0
      %v877 = vadd.f32 0.0, %v876
      %v878 = vpop.f32.mrb[0].mxu0
      %879 = vmatprep.mubr.bf16.mxu0 0
      %880 = vmatmul.mubr.bf16.gmra.mrb[0].mxu0 %v821
      %v881 = vpop.f32.mrb[0].mxu0
      %v882 = vadd.f32 0.0, %v881
      %v883 = vpop.f32.mrb[0].mxu0
      %v884 = vpop.f32.mrb[0].mxu0
      %v885 = vadd.f32 0.0, %v884
      %v886 = vpop.f32.mrb[0].mxu0
      %887 = vdwg.mxu0
      %888 = vrot.lane.b32.xlu0 %v439, 64
      %v889 = vpop.permute.xlu0 %888
      %890 = vrot.lane.b32.xlu0 %v440, 64
      %v891 = vpop.permute.xlu0 %890
      %892 = vrot.lane.b32.xlu0 %v441, 64
      %v893 = vpop.permute.xlu0 %892
      %894 = vrot.lane.b32.xlu0 %v442, 64
      %v895 = vpop.permute.xlu0 %894
      %v901 = vsel %vm646, %v795, 0
      %v904 = vsel %vm646, %v796, 0
      %v907 = vsel %vm646, %v797, 0
      %v910 = vsel %vm646, %v798, 0
      %912 = vmatprep.subr.bf16.mxu0 0
      %913 = vmatpush1.bf16.msra.mxu0 %v889
      %914 = vmatprep.subr.bf16.mxu0 0
      %915 = vmatpush1.bf16.msra.mxu0 %v891
      %916 = vmatprep.subr.bf16.mxu0 0
      %917 = vmatpush1.bf16.msra.mxu0 %v893
      %918 = vmatprep.subr.bf16.mxu0 0
      %919 = vmatpush1.bf16.msra.mxu0 %v895
      %920 = vmatprep.subr.bf16.mxu0 0
      %921 = vmatpush1.bf16.msra.mxu0 0
      %922 = vmatprep.subr.bf16.mxu0 0
      %923 = vmatpush1.bf16.msra.mxu0 0
      %924 = vmatprep.subr.bf16.mxu0 0
      %925 = vmatpush1.bf16.msra.mxu0 0
      %926 = vmatprep.subr.bf16.mxu0 0
      %927 = vmatpush1.bf16.msra.mxu0 0
      %928 = vmatprep.subr.bf16.mxu0 0
      %929 = vmatpush1.bf16.msra.mxu0 0
      %930 = vmatprep.subr.bf16.mxu0 0
      %931 = vmatpush1.bf16.msra.mxu0 0
      %932 = vmatprep.subr.bf16.mxu0 0
      %933 = vmatpush1.bf16.msra.mxu0 0
      %934 = vmatprep.subr.bf16.mxu0 0
      %935 = vmatpush1.bf16.msra.mxu0 0
      %936 = vmatprep.subr.bf16.mxu0 0
      %937 = vmatpush1.bf16.msra.mxu0 0
      %938 = vmatprep.subr.bf16.mxu0 0
      %939 = vmatpush1.bf16.msra.mxu0 0
      %940 = vmatprep.subr.bf16.mxu0 0
      %941 = vmatpush1.bf16.msra.mxu0 0
      %942 = vmatprep.subr.bf16.mxu0 0
      %943 = vmatpush1.bf16.msra.mxu0 0
      %944 = vmatprep.mubr.bf16.mxu0 0
      %945 = vmatmul.mubr.bf16.gmra.mrb[0].mxu0 %v901
      %v946 = vpop.f32.mrb[0].mxu0
      %v947 = vadd.f32 0.0, %v946
      %v948 = vpop.f32.mrb[0].mxu0
      %v949 = vpop.f32.mrb[0].mxu0
      %v950 = vadd.f32 0.0, %v949
      %v951 = vpop.f32.mrb[0].mxu0
      %952 = vmatprep.mubr.bf16.mxu0 0
      %953 = vmatmul.mubr.bf16.gmra.mrb[0].mxu0 %v904
      %v954 = vpop.f32.mrb[0].mxu0
      %v955 = vadd.f32 0.0, %v954
      %v956 = vpop.f32.mrb[0].mxu0
      %v957 = vpop.f32.mrb[0].mxu0
      %v958 = vadd.f32 0.0, %v957
      %v959 = vpop.f32.mrb[0].mxu0
      %960 = vmatprep.mubr.bf16.mxu0 0
      %961 = vmatmul.mubr.bf16.gmra.mrb[0].mxu0 %v907
      %v962 = vpop.f32.mrb[0].mxu0
      %v963 = vadd.f32 0.0, %v962
      %v964 = vpop.f32.mrb[0].mxu0
      %v965 = vpop.f32.mrb[0].mxu0
      %v966 = vadd.f32 0.0, %v965
      %v967 = vpop.f32.mrb[0].mxu0
      %968 = vmatprep.mubr.bf16.mxu0 0
      %969 = vmatmul.mubr.bf16.gmra.mrb[0].mxu0 %v910
      %v970 = vpop.f32.mrb[0].mxu0
      %v971 = vadd.f32 0.0, %v970
      %v972 = vpop.f32.mrb[0].mxu0
      %v973 = vpop.f32.mrb[0].mxu0
      %v974 = vadd.f32 0.0, %v973
      %v975 = vpop.f32.mrb[0].mxu0
      %976 = vdwg.mxu0
      %v977 = vrcp.pop %v745
      %v978 = vrcp.pop %v748
      %v979 = vrcp.pop %v751
      %v980 = vrcp.pop %v754
      %v981 = vrcp.pop %v757
      %v982 = vrcp.pop %v760
      %v983 = vrcp.pop %v763
      %v984 = vrcp.pop %v766
      %v985 = vrcp.pop %v769
      %v986 = vrcp.pop %v772
      %v987 = vrcp.pop %v775
      %v988 = vrcp.pop %v778
      %v989 = vrcp.pop %v781
      %v990 = vrcp.pop %v784
      %v991 = vrcp.pop %v787
      %v992 = vrcp.pop %v790
      %v993 = vmul.f32 %v858, %v977
      %v994 = vmul.f32 %v861, %v978
      %v995 = vmul.f32 %v866, %v979
      %v996 = vmul.f32 %v869, %v980
      %v997 = vmul.f32 %v874, %v981
      %v998 = vmul.f32 %v877, %v982
      %v999 = vmul.f32 %v882, %v983
      %v1000 = vmul.f32 %v885, %v984
      %v1001 = vmul.f32 %v947, %v985
      %v1002 = vmul.f32 %v950, %v986
      %v1003 = vmul.f32 %v955, %v987
      %v1004 = vmul.f32 %v958, %v988
      %v1005 = vmul.f32 %v963, %v989
      %v1006 = vmul.f32 %v966, %v990
      %v1007 = vmul.f32 %v971, %v991
      %v1008 = vmul.f32 %v974, %v992
      %v1009 = vpack.c.bf16 %v994, %v993
      %v1010 = vpack.c.bf16 %v996, %v995
      %v1011 = vpack.c.bf16 %v998, %v997
      %v1012 = vpack.c.bf16 %v1000, %v999
      %v1013 = vpack.c.bf16 %v1002, %v1001
      %v1014 = vpack.c.bf16 %v1004, %v1003
      %v1015 = vpack.c.bf16 %v1006, %v1005
      %v1016 = vpack.c.bf16 %v1008, %v1007
      %1017 = vst.msk [vmem:[#allocation2] sm:$0xff] %vm455, %v1009
      %1018 = vst.msk [vmem:[#allocation2 + $0x8] sm:$0xff] %vm455, %v1010
      %1019 = vst.msk [vmem:[#allocation2 + $0x10] sm:$0xff] %vm455, %v1011
      %1020 = vst.msk [vmem:[#allocation2 + $0x18] sm:$0xff] %vm455, %v1012
      %1021 = vst.msk [vmem:[#allocation2 + $0x20] sm:$0xff] %vm455, %v1013
      %1022 = vst.msk [vmem:[#allocation2 + $0x28] sm:$0xff] %vm455, %v1014
      %1023 = vst.msk [vmem:[#allocation2 + $0x30] sm:$0xff] %vm455, %v1015
      %1024 = vst.msk [vmem:[#allocation2 + $0x38] sm:$0xff] %vm455, %v1016
      %1025 = vrot.lane.b32.xlu0 %v435, 120
      %v1026 = vpop.permute.xlu0 %1025
      %1027 = vrot.lane.b32.xlu0 %v436, 120
      %v1028 = vpop.permute.xlu0 %1027
      %1029 = vrot.lane.b32.xlu0 %v437, 120
      %v1030 = vpop.permute.xlu0 %1029
      %1031 = vrot.lane.b32.xlu0 %v438, 120
      %v1032 = vpop.permute.xlu0 %1031
      %1033 = vrot.lane.b32.xlu0 %v435, 88
      %v1034 = vpop.permute.xlu0 %1033
      %1035 = vrot.lane.b32.xlu0 %v436, 88
      %v1036 = vpop.permute.xlu0 %1035
      %1037 = vrot.lane.b32.xlu0 %v437, 88
      %v1038 = vpop.permute.xlu0 %1037
      %1039 = vrot.lane.b32.xlu0 %v438, 88
      %v1040 = vpop.permute.xlu0 %1039
      %v1042 = vsel %vm455, %v1026, 0
      %v1045 = vsel %vm455, %v1028, 0
      %v1048 = vsel %vm455, %v1030, 0
      %v1051 = vsel %vm455, %v1032, 0
      %v1054 = vsel %vm455, %v1034, 0
      %v1057 = vsel %vm455, %v1036, 0
      %v1060 = vsel %vm455, %v1038, 0
      %v1063 = vsel %vm455, %v1040, 0
      %1065 = vmatprep.subr.bf16.mxu0 0
      %1066 = vmatpush1.bf16.xpose.msra.mxu0 %v1054
      %1067 = vmatprep.subr.bf16.mxu0 0
      %1068 = vmatpush1.bf16.xpose.msra.mxu0 %v1057
      %1069 = vmatprep.subr.bf16.mxu0 0
      %1070 = vmatpush1.bf16.xpose.msra.mxu0 %v1060
      %1071 = vmatprep.subr.bf16.mxu0 0
      %1072 = vmatpush1.bf16.xpose.msra.mxu0 %v1063
      %1073 = vmatprep.subr.bf16.mxu0 0
      %1074 = vmatpush1.bf16.xpose.msra.mxu0 0
      %1075 = vmatprep.subr.bf16.mxu0 0
      %1076 = vmatpush1.bf16.xpose.msra.mxu0 0
      %1077 = vmatprep.subr.bf16.mxu0 0
      %1078 = vmatpush1.bf16.xpose.msra.mxu0 0
      %1079 = vmatprep.subr.bf16.mxu0 0
      %1080 = vmatpush1.bf16.xpose.msra.mxu0 0
      %1081 = vmatprep.subr.bf16.mxu0 0
      %1082 = vmatpush1.bf16.xpose.msra.mxu0 0
      %1083 = vmatprep.subr.bf16.mxu0 0
      %1084 = vmatpush1.bf16.xpose.msra.mxu0 0
      %1085 = vmatprep.subr.bf16.mxu0 0
      %1086 = vmatpush1.bf16.xpose.msra.mxu0 0
      %1087 = vmatprep.subr.bf16.mxu0 0
      %1088 = vmatpush1.bf16.xpose.msra.mxu0 0
      %1089 = vmatprep.subr.bf16.mxu0 0
      %1090 = vmatpush1.bf16.xpose.msra.mxu0 0
      %1091 = vmatprep.subr.bf16.mxu0 0
      %1092 = vmatpush1.bf16.xpose.msra.mxu0 0
      %1093 = vmatprep.subr.bf16.mxu0 0
      %1094 = vmatpush1.bf16.xpose.msra.mxu0 0
      %1095 = vmatprep.subr.bf16.mxu0 0
      %1096 = vmatpush1.bf16.xpose.msra.mxu0 0
      %1097 = vmatprep.mubr.bf16.mxu0 0
      %1098 = vmatmul.mubr.bf16.gmra.mrb[0].mxu0 %v1042
      %v1099 = vpop.f32.mrb[0].mxu0
      %v1100 = vadd.f32 0.0, %v1099
      %v1101 = vpop.f32.mrb[0].mxu0
      %v1102 = vpop.f32.mrb[0].mxu0
      %v1103 = vadd.f32 0.0, %v1102
      %v1104 = vpop.f32.mrb[0].mxu0
      %1105 = vmatprep.mubr.bf16.mxu0 0
      %1106 = vmatmul.mubr.bf16.gmra.mrb[0].mxu0 %v1045
      %v1107 = vpop.f32.mrb[0].mxu0
      %v1108 = vadd.f32 0.0, %v1107
      %v1109 = vpop.f32.mrb[0].mxu0
      %v1110 = vpop.f32.mrb[0].mxu0
      %v1111 = vadd.f32 0.0, %v1110
      %v1112 = vpop.f32.mrb[0].mxu0
      %1113 = vmatprep.mubr.bf16.mxu0 0
      %1114 = vmatmul.mubr.bf16.gmra.mrb[0].mxu0 %v1048
      %v1115 = vpop.f32.mrb[0].mxu0
      %v1116 = vadd.f32 0.0, %v1115
      %v1117 = vpop.f32.mrb[0].mxu0
      %v1118 = vpop.f32.mrb[0].mxu0
      %v1119 = vadd.f32 0.0, %v1118
      %v1120 = vpop.f32.mrb[0].mxu0
      %1121 = vmatprep.mubr.bf16.mxu0 0
      %1122 = vmatmul.mubr.bf16.gmra.mrb[0].mxu0 %v1051
      %v1123 = vpop.f32.mrb[0].mxu0
      %v1124 = vadd.f32 0.0, %v1123
      %v1125 = vpop.f32.mrb[0].mxu0
      %v1126 = vpop.f32.mrb[0].mxu0
      %v1127 = vadd.f32 0.0, %v1126
      %v1128 = vpop.f32.mrb[0].mxu0
      %1129 = vdwg.mxu0
      %1130 = vrot.lane.b32.xlu0 %v439, 120
      %v1131 = vpop.permute.xlu0 %1130
      %1132 = vrot.lane.b32.xlu0 %v440, 120
      %v1133 = vpop.permute.xlu0 %1132
      %1134 = vrot.lane.b32.xlu0 %v441, 120
      %v1135 = vpop.permute.xlu0 %1134
      %1136 = vrot.lane.b32.xlu0 %v442, 120
      %v1137 = vpop.permute.xlu0 %1136
      %1138 = vrot.lane.b32.xlu0 %v439, 88
      %v1139 = vpop.permute.xlu0 %1138
      %1140 = vrot.lane.b32.xlu0 %v440, 88
      %v1141 = vpop.permute.xlu0 %1140
      %1142 = vrot.lane.b32.xlu0 %v441, 88
      %v1143 = vpop.permute.xlu0 %1142
      %1144 = vrot.lane.b32.xlu0 %v442, 88
      %v1145 = vpop.permute.xlu0 %1144
      %v1147 = vsel %vm455, %v1131, 0
      %v1150 = vsel %vm455, %v1133, 0
      %v1153 = vsel %vm455, %v1135, 0
      %v1156 = vsel %vm455, %v1137, 0
      %v1159 = vsel %vm455, %v1139, 0
      %v1162 = vsel %vm455, %v1141, 0
      %v1165 = vsel %vm455, %v1143, 0
      %v1168 = vsel %vm455, %v1145, 0
      %1170 = vmatprep.subr.bf16.mxu0 0
      %1171 = vmatpush1.bf16.xpose.msra.mxu0 %v1159
      %1172 = vmatprep.subr.bf16.mxu0 0
      %1173 = vmatpush1.bf16.xpose.msra.mxu0 %v1162
      %1174 = vmatprep.subr.bf16.mxu0 0
      %1175 = vmatpush1.bf16.xpose.msra.mxu0 %v1165
      %1176 = vmatprep.subr.bf16.mxu0 0
      %1177 = vmatpush1.bf16.xpose.msra.mxu0 %v1168
      %1178 = vmatprep.subr.bf16.mxu0 0
      %1179 = vmatpush1.bf16.xpose.msra.mxu0 0
      %1180 = vmatprep.subr.bf16.mxu0 0
      %1181 = vmatpush1.bf16.xpose.msra.mxu0 0
      %1182 = vmatprep.subr.bf16.mxu0 0
      %1183 = vmatpush1.bf16.xpose.msra.mxu0 0
      %1184 = vmatprep.subr.bf16.mxu0 0
      %1185 = vmatpush1.bf16.xpose.msra.mxu0 0
      %1186 = vmatprep.subr.bf16.mxu0 0
      %1187 = vmatpush1.bf16.xpose.msra.mxu0 0
      %1188 = vmatprep.subr.bf16.mxu0 0
      %1189 = vmatpush1.bf16.xpose.msra.mxu0 0
      %1190 = vmatprep.subr.bf16.mxu0 0
      %1191 = vmatpush1.bf16.xpose.msra.mxu0 0
      %1192 = vmatprep.subr.bf16.mxu0 0
      %1193 = vmatpush1.bf16.xpose.msra.mxu0 0
      %1194 = vmatprep.subr.bf16.mxu0 0
      %1195 = vmatpush1.bf16.xpose.msra.mxu0 0
      %1196 = vmatprep.subr.bf16.mxu0 0
      %1197 = vmatpush1.bf16.xpose.msra.mxu0 0
      %1198 = vmatprep.subr.bf16.mxu0 0
      %1199 = vmatpush1.bf16.xpose.msra.mxu0 0
      %1200 = vmatprep.subr.bf16.mxu0 0
      %1201 = vmatpush1.bf16.xpose.msra.mxu0 0
      %1202 = vmatprep.mubr.bf16.mxu0 0
      %1203 = vmatmul.mubr.bf16.gmra.mrb[0].mxu0 %v1147
      %v1204 = vpop.f32.mrb[0].mxu0
      %v1205 = vadd.f32 0.0, %v1204
      %v1206 = vpop.f32.mrb[0].mxu0
      %v1207 = vpop.f32.mrb[0].mxu0
      %v1208 = vadd.f32 0.0, %v1207
      %v1209 = vpop.f32.mrb[0].mxu0
      %1210 = vmatprep.mubr.bf16.mxu0 0
      %1211 = vmatmul.mubr.bf16.gmra.mrb[0].mxu0 %v1150
      %v1212 = vpop.f32.mrb[0].mxu0
      %v1213 = vadd.f32 0.0, %v1212
      %v1214 = vpop.f32.mrb[0].mxu0
      %v1215 = vpop.f32.mrb[0].mxu0
      %v1216 = vadd.f32 0.0, %v1215
      %v1217 = vpop.f32.mrb[0].mxu0
      %1218 = vmatprep.mubr.bf16.mxu0 0
      %1219 = vmatmul.mubr.bf16.gmra.mrb[0].mxu0 %v1153
      %v1220 = vpop.f32.mrb[0].mxu0
      %v1221 = vadd.f32 0.0, %v1220
      %v1222 = vpop.f32.mrb[0].mxu0
      %v1223 = vpop.f32.mrb[0].mxu0
      %v1224 = vadd.f32 0.0, %v1223
      %v1225 = vpop.f32.mrb[0].mxu0
      %1226 = vmatprep.mubr.bf16.mxu0 0
      %1227 = vmatmul.mubr.bf16.gmra.mrb[0].mxu0 %v1156
      %v1228 = vpop.f32.mrb[0].mxu0
      %v1229 = vadd.f32 0.0, %v1228
      %v1230 = vpop.f32.mrb[0].mxu0
      %v1231 = vpop.f32.mrb[0].mxu0
      %v1232 = vadd.f32 0.0, %v1231
      %v1233 = vpop.f32.mrb[0].mxu0
      %1234 = vdwg.mxu0
      %v1235 = vsel %vm646, %v1100, -inf
      %1236 = vmax.xlane.f32.xlu0 %v1235
      %v1237 = vpop.xlane.xlu0 %1236
      %v1238 = vsel %vm646, %v1103, -inf
      %1239 = vmax.xlane.f32.xlu0 %v1238
      %v1240 = vpop.xlane.xlu0 %1239
      %v1241 = vsel %vm646, %v1108, -inf
      %1242 = vmax.xlane.f32.xlu0 %v1241
      %v1243 = vpop.xlane.xlu0 %1242
      %v1244 = vsel %vm646, %v1111, -inf
      %1245 = vmax.xlane.f32.xlu0 %v1244
      %v1246 = vpop.xlane.xlu0 %1245
      %v1247 = vsel %vm646, %v1116, -inf
      %1248 = vmax.xlane.f32.xlu0 %v1247
      %v1249 = vpop.xlane.xlu0 %1248
      %v1250 = vsel %vm646, %v1119, -inf
      %1251 = vmax.xlane.f32.xlu0 %v1250
      %v1252 = vpop.xlane.xlu0 %1251
      %v1253 = vsel %vm646, %v1124, -inf
      %1254 = vmax.xlane.f32.xlu0 %v1253
      %v1255 = vpop.xlane.xlu0 %1254
      %v1256 = vsel %vm646, %v1127, -inf
      %1257 = vmax.xlane.f32.xlu0 %v1256
      %v1258 = vpop.xlane.xlu0 %1257
      %v1259 = vsel %vm646, %v1205, -inf
      %1260 = vmax.xlane.f32.xlu0 %v1259
      %v1261 = vpop.xlane.xlu0 %1260
      %v1262 = vsel %vm646, %v1208, -inf
      %1263 = vmax.xlane.f32.xlu0 %v1262
      %v1264 = vpop.xlane.xlu0 %1263
      %v1265 = vsel %vm646, %v1213, -inf
      %1266 = vmax.xlane.f32.xlu0 %v1265
      %v1267 = vpop.xlane.xlu0 %1266
      %v1268 = vsel %vm646, %v1216, -inf
      %1269 = vmax.xlane.f32.xlu0 %v1268
      %v1270 = vpop.xlane.xlu0 %1269
      %v1271 = vsel %vm646, %v1221, -inf
      %1272 = vmax.xlane.f32.xlu0 %v1271
      %v1273 = vpop.xlane.xlu0 %1272
      %v1274 = vsel %vm646, %v1224, -inf
      %1275 = vmax.xlane.f32.xlu0 %v1274
      %v1276 = vpop.xlane.xlu0 %1275
      %v1277 = vsel %vm646, %v1229, -inf
      %1278 = vmax.xlane.f32.xlu0 %v1277
      %v1279 = vpop.xlane.xlu0 %1278
      %v1280 = vsel %vm646, %v1232, -inf
      %1281 = vmax.xlane.f32.xlu0 %v1280
      %v1282 = vpop.xlane.xlu0 %1281
      %v1283 = vsub.f32 %v1100, %v1237
      %v1284 = vsub.f32 %v1103, %v1240
      %v1285 = vsub.f32 %v1108, %v1243
      %v1286 = vsub.f32 %v1111, %v1246
      %v1287 = vsub.f32 %v1116, %v1249
      %v1288 = vsub.f32 %v1119, %v1252
      %v1289 = vsub.f32 %v1124, %v1255
      %v1290 = vsub.f32 %v1127, %v1258
      %v1291 = vsub.f32 %v1205, %v1261
      %v1292 = vsub.f32 %v1208, %v1264
      %v1293 = vsub.f32 %v1213, %v1267
      %v1294 = vsub.f32 %v1216, %v1270
      %v1295 = vsub.f32 %v1221, %v1273
      %v1296 = vsub.f32 %v1224, %v1276
      %v1297 = vsub.f32 %v1229, %v1279
      %v1298 = vsub.f32 %v1232, %v1282
      %v1299 = vmul.f32 %v1283, 1.442695
      %v1300 = vpow.pop %v1299
      %v1301 = vmul.f32 %v1284, 1.442695
      %v1302 = vpow.pop %v1301
      %v1303 = vmul.f32 %v1285, 1.442695
      %v1304 = vpow.pop %v1303
      %v1305 = vmul.f32 %v1286, 1.442695
      %v1306 = vpow.pop %v1305
      %v1307 = vmul.f32 %v1287, 1.442695
      %v1308 = vpow.pop %v1307
      %v1309 = vmul.f32 %v1288, 1.442695
      %v1310 = vpow.pop %v1309
      %v1311 = vmul.f32 %v1289, 1.442695
      %v1312 = vpow.pop %v1311
      %v1313 = vmul.f32 %v1290, 1.442695
      %v1314 = vpow.pop %v1313
      %v1315 = vmul.f32 %v1291, 1.442695
      %v1316 = vpow.pop %v1315
      %v1317 = vmul.f32 %v1292, 1.442695
      %v1318 = vpow.pop %v1317
      %v1319 = vmul.f32 %v1293, 1.442695
      %v1320 = vpow.pop %v1319
      %v1321 = vmul.f32 %v1294, 1.442695
      %v1322 = vpow.pop %v1321
      %v1323 = vmul.f32 %v1295, 1.442695
      %v1324 = vpow.pop %v1323
      %v1325 = vmul.f32 %v1296, 1.442695
      %v1326 = vpow.pop %v1325
      %v1327 = vmul.f32 %v1297, 1.442695
      %v1328 = vpow.pop %v1327
      %v1329 = vmul.f32 %v1298, 1.442695
      %v1330 = vpow.pop %v1329
      %v1331 = vsel %vm646, %v1300, 0.0
      %1332 = vadd.xlane.f32.xlu0 %v1331
      %v1333 = vpop.xlane.xlu0 %1332
      %v1334 = vsel %vm646, %v1302, 0.0
      %1335 = vadd.xlane.f32.xlu0 %v1334
      %v1336 = vpop.xlane.xlu0 %1335
      %v1337 = vsel %vm646, %v1304, 0.0
      %1338 = vadd.xlane.f32.xlu0 %v1337
      %v1339 = vpop.xlane.xlu0 %1338
      %v1340 = vsel %vm646, %v1306, 0.0
      %1341 = vadd.xlane.f32.xlu0 %v1340
      %v1342 = vpop.xlane.xlu0 %1341
      %v1343 = vsel %vm646, %v1308, 0.0
      %1344 = vadd.xlane.f32.xlu0 %v1343
      %v1345 = vpop.xlane.xlu0 %1344
      %v1346 = vsel %vm646, %v1310, 0.0
      %1347 = vadd.xlane.f32.xlu0 %v1346
      %v1348 = vpop.xlane.xlu0 %1347
      %v1349 = vsel %vm646, %v1312, 0.0
      %1350 = vadd.xlane.f32.xlu0 %v1349
      %v1351 = vpop.xlane.xlu0 %1350
      %v1352 = vsel %vm646, %v1314, 0.0
      %1353 = vadd.xlane.f32.xlu0 %v1352
      %v1354 = vpop.xlane.xlu0 %1353
      %v1355 = vsel %vm646, %v1316, 0.0
      %1356 = vadd.xlane.f32.xlu0 %v1355
      %v1357 = vpop.xlane.xlu0 %1356
      %v1358 = vsel %vm646, %v1318, 0.0
      %1359 = vadd.xlane.f32.xlu0 %v1358
      %v1360 = vpop.xlane.xlu0 %1359
      %v1361 = vsel %vm646, %v1320, 0.0
      %1362 = vadd.xlane.f32.xlu0 %v1361
      %v1363 = vpop.xlane.xlu0 %1362
      %v1364 = vsel %vm646, %v1322, 0.0
      %1365 = vadd.xlane.f32.xlu0 %v1364
      %v1366 = vpop.xlane.xlu0 %1365
      %v1367 = vsel %vm646, %v1324, 0.0
      %1368 = vadd.xlane.f32.xlu0 %v1367
      %v1369 = vpop.xlane.xlu0 %1368
      %v1370 = vsel %vm646, %v1326, 0.0
      %1371 = vadd.xlane.f32.xlu0 %v1370
      %v1372 = vpop.xlane.xlu0 %1371
      %v1373 = vsel %vm646, %v1328, 0.0
      %1374 = vadd.xlane.f32.xlu0 %v1373
      %v1375 = vpop.xlane.xlu0 %1374
      %v1376 = vsel %vm646, %v1330, 0.0
      %1377 = vadd.xlane.f32.xlu0 %v1376
      %v1378 = vpop.xlane.xlu0 %1377
      %v1379 = vpack.c.bf16 %v1302, %v1300
      %v1380 = vpack.c.bf16 %v1306, %v1304
      %v1381 = vpack.c.bf16 %v1310, %v1308
      %v1382 = vpack.c.bf16 %v1314, %v1312
      %v1383 = vpack.c.bf16 %v1318, %v1316
      %v1384 = vpack.c.bf16 %v1322, %v1320
      %v1385 = vpack.c.bf16 %v1326, %v1324
      %v1386 = vpack.c.bf16 %v1330, %v1328
      %1387 = vrot.lane.b32.xlu0 %v435, 56
      %v1388 = vpop.permute.xlu0 %1387
      %1389 = vrot.lane.b32.xlu0 %v436, 56
      %v1390 = vpop.permute.xlu0 %1389
      %1391 = vrot.lane.b32.xlu0 %v437, 56
      %v1392 = vpop.permute.xlu0 %1391
      %1393 = vrot.lane.b32.xlu0 %v438, 56
      %v1394 = vpop.permute.xlu0 %1393
      %v1400 = vsel %vm646, %v1379, 0
      %v1403 = vsel %vm646, %v1380, 0
      %v1406 = vsel %vm646, %v1381, 0
      %v1409 = vsel %vm646, %v1382, 0
      %1411 = vmatprep.subr.bf16.mxu0 0
      %1412 = vmatpush1.bf16.msra.mxu0 %v1388
      %1413 = vmatprep.subr.bf16.mxu0 0
      %1414 = vmatpush1.bf16.msra.mxu0 %v1390
      %1415 = vmatprep.subr.bf16.mxu0 0
      %1416 = vmatpush1.bf16.msra.mxu0 %v1392
      %1417 = vmatprep.subr.bf16.mxu0 0
      %1418 = vmatpush1.bf16.msra.mxu0 %v1394
      %1419 = vmatprep.subr.bf16.mxu0 0
      %1420 = vmatpush1.bf16.msra.mxu0 0
      %1421 = vmatprep.subr.bf16.mxu0 0
      %1422 = vmatpush1.bf16.msra.mxu0 0
      %1423 = vmatprep.subr.bf16.mxu0 0
      %1424 = vmatpush1.bf16.msra.mxu0 0
      %1425 = vmatprep.subr.bf16.mxu0 0
      %1426 = vmatpush1.bf16.msra.mxu0 0
      %1427 = vmatprep.subr.bf16.mxu0 0
      %1428 = vmatpush1.bf16.msra.mxu0 0
      %1429 = vmatprep.subr.bf16.mxu0 0
      %1430 = vmatpush1.bf16.msra.mxu0 0
      %1431 = vmatprep.subr.bf16.mxu0 0
      %1432 = vmatpush1.bf16.msra.mxu0 0
      %1433 = vmatprep.subr.bf16.mxu0 0
      %1434 = vmatpush1.bf16.msra.mxu0 0
      %1435 = vmatprep.subr.bf16.mxu0 0
      %1436 = vmatpush1.bf16.msra.mxu0 0
      %1437 = vmatprep.subr.bf16.mxu0 0
      %1438 = vmatpush1.bf16.msra.mxu0 0
      %1439 = vmatprep.subr.bf16.mxu0 0
      %1440 = vmatpush1.bf16.msra.mxu0 0
      %1441 = vmatprep.subr.bf16.mxu0 0
      %1442 = vmatpush1.bf16.msra.mxu0 0
      %1443 = vmatprep.mubr.bf16.mxu0 0
      %1444 = vmatmul.mubr.bf16.gmra.mrb[0].mxu0 %v1400
      %v1445 = vpop.f32.mrb[0].mxu0
      %v1446 = vadd.f32 0.0, %v1445
      %v1447 = vpop.f32.mrb[0].mxu0
      %v1448 = vpop.f32.mrb[0].mxu0
      %v1449 = vadd.f32 0.0, %v1448
      %v1450 = vpop.f32.mrb[0].mxu0
      %1451 = vmatprep.mubr.bf16.mxu0 0
      %1452 = vmatmul.mubr.bf16.gmra.mrb[0].mxu0 %v1403
      %v1453 = vpop.f32.mrb[0].mxu0
      %v1454 = vadd.f32 0.0, %v1453
      %v1455 = vpop.f32.mrb[0].mxu0
      %v1456 = vpop.f32.mrb[0].mxu0
      %v1457 = vadd.f32 0.0, %v1456
      %v1458 = vpop.f32.mrb[0].mxu0
      %1459 = vmatprep.mubr.bf16.mxu0 0
      %1460 = vmatmul.mubr.bf16.gmra.mrb[0].mxu0 %v1406
      %v1461 = vpop.f32.mrb[0].mxu0
      %v1462 = vadd.f32 0.0, %v1461
      %v1463 = vpop.f32.mrb[0].mxu0
      %v1464 = vpop.f32.mrb[0].mxu0
      %v1465 = vadd.f32 0.0, %v1464
      %v1466 = vpop.f32.mrb[0].mxu0
      %1467 = vmatprep.mubr.bf16.mxu0 0
      %1468 = vmatmul.mubr.bf16.gmra.mrb[0].mxu0 %v1409
      %v1469 = vpop.f32.mrb[0].mxu0
      %v1470 = vadd.f32 0.0, %v1469
      %v1471 = vpop.f32.mrb[0].mxu0
      %v1472 = vpop.f32.mrb[0].mxu0
      %v1473 = vadd.f32 0.0, %v1472
      %v1474 = vpop.f32.mrb[0].mxu0
      %1475 = vdwg.mxu0
      %1476 = vrot.lane.b32.xlu0 %v439, 56
      %v1477 = vpop.permute.xlu0 %1476
      %1478 = vrot.lane.b32.xlu0 %v440, 56
      %v1479 = vpop.permute.xlu0 %1478
      %1480 = vrot.lane.b32.xlu0 %v441, 56
      %v1481 = vpop.permute.xlu0 %1480
      %1482 = vrot.lane.b32.xlu0 %v442, 56
      %v1483 = vpop.permute.xlu0 %1482
      %v1489 = vsel %vm646, %v1383, 0
      %v1492 = vsel %vm646, %v1384, 0
      %v1495 = vsel %vm646, %v1385, 0
      %v1498 = vsel %vm646, %v1386, 0
      %1500 = vmatprep.subr.bf16.mxu0 0
      %1501 = vmatpush1.bf16.msra.mxu0 %v1477
      %1502 = vmatprep.subr.bf16.mxu0 0
      %1503 = vmatpush1.bf16.msra.mxu0 %v1479
      %1504 = vmatprep.subr.bf16.mxu0 0
      %1505 = vmatpush1.bf16.msra.mxu0 %v1481
      %1506 = vmatprep.subr.bf16.mxu0 0
      %1507 = vmatpush1.bf16.msra.mxu0 %v1483
      %1508 = vmatprep.subr.bf16.mxu0 0
      %1509 = vmatpush1.bf16.msra.mxu0 0
      %1510 = vmatprep.subr.bf16.mxu0 0
      %1511 = vmatpush1.bf16.msra.mxu0 0
      %1512 = vmatprep.subr.bf16.mxu0 0
      %1513 = vmatpush1.bf16.msra.mxu0 0
      %1514 = vmatprep.subr.bf16.mxu0 0
      %1515 = vmatpush1.bf16.msra.mxu0 0
      %1516 = vmatprep.subr.bf16.mxu0 0
      %1517 = vmatpush1.bf16.msra.mxu0 0
      %1518 = vmatprep.subr.bf16.mxu0 0
      %1519 = vmatpush1.bf16.msra.mxu0 0
      %1520 = vmatprep.subr.bf16.mxu0 0
      %1521 = vmatpush1.bf16.msra.mxu0 0
      %1522 = vmatprep.subr.bf16.mxu0 0
      %1523 = vmatpush1.bf16.msra.mxu0 0
      %1524 = vmatprep.subr.bf16.mxu0 0
      %1525 = vmatpush1.bf16.msra.mxu0 0
      %1526 = vmatprep.subr.bf16.mxu0 0
      %1527 = vmatpush1.bf16.msra.mxu0 0
      %1528 = vmatprep.subr.bf16.mxu0 0
      %1529 = vmatpush1.bf16.msra.mxu0 0
      %1530 = vmatprep.subr.bf16.mxu0 0
      %1531 = vmatpush1.bf16.msra.mxu0 0
      %1532 = vmatprep.mubr.bf16.mxu0 0
      %1533 = vmatmul.mubr.bf16.gmra.mrb[0].mxu0 %v1489
      %v1534 = vpop.f32.mrb[0].mxu0
      %v1535 = vadd.f32 0.0, %v1534
      %v1536 = vpop.f32.mrb[0].mxu0
      %v1537 = vpop.f32.mrb[0].mxu0
      %v1538 = vadd.f32 0.0, %v1537
      %v1539 = vpop.f32.mrb[0].mxu0
      %1540 = vmatprep.mubr.bf16.mxu0 0
      %1541 = vmatmul.mubr.bf16.gmra.mrb[0].mxu0 %v1492
      %v1542 = vpop.f32.mrb[0].mxu0
      %v1543 = vadd.f32 0.0, %v1542
      %v1544 = vpop.f32.mrb[0].mxu0
      %v1545 = vpop.f32.mrb[0].mxu0
      %v1546 = vadd.f32 0.0, %v1545
      %v1547 = vpop.f32.mrb[0].mxu0
      %1548 = vmatprep.mubr.bf16.mxu0 0
      %1549 = vmatmul.mubr.bf16.gmra.mrb[0].mxu0 %v1495
      %v1550 = vpop.f32.mrb[0].mxu0
      %v1551 = vadd.f32 0.0, %v1550
      %v1552 = vpop.f32.mrb[0].mxu0
      %v1553 = vpop.f32.mrb[0].mxu0
      %v1554 = vadd.f32 0.0, %v1553
      %v1555 = vpop.f32.mrb[0].mxu0
      %1556 = vmatprep.mubr.bf16.mxu0 0
      %1557 = vmatmul.mubr.bf16.gmra.mrb[0].mxu0 %v1498
      %v1558 = vpop.f32.mrb[0].mxu0
      %v1559 = vadd.f32 0.0, %v1558
      %v1560 = vpop.f32.mrb[0].mxu0
      %v1561 = vpop.f32.mrb[0].mxu0
      %v1562 = vadd.f32 0.0, %v1561
      %v1563 = vpop.f32.mrb[0].mxu0
      %1564 = vdwg.mxu0
      %v1565 = vrcp.pop %v1333
      %v1566 = vrcp.pop %v1336
      %v1567 = vrcp.pop %v1339
      %v1568 = vrcp.pop %v1342
      %v1569 = vrcp.pop %v1345
      %v1570 = vrcp.pop %v1348
      %v1571 = vrcp.pop %v1351
      %v1572 = vrcp.pop %v1354
      %v1573 = vrcp.pop %v1357
      %v1574 = vrcp.pop %v1360
      %v1575 = vrcp.pop %v1363
      %v1576 = vrcp.pop %v1366
      %v1577 = vrcp.pop %v1369
      %v1578 = vrcp.pop %v1372
      %v1579 = vrcp.pop %v1375
      %v1580 = vrcp.pop %v1378
      %v1581 = vmul.f32 %v1446, %v1565
      %v1582 = vmul.f32 %v1449, %v1566
      %v1583 = vmul.f32 %v1454, %v1567
      %v1584 = vmul.f32 %v1457, %v1568
      %v1585 = vmul.f32 %v1462, %v1569
      %v1586 = vmul.f32 %v1465, %v1570
      %v1587 = vmul.f32 %v1470, %v1571
      %v1588 = vmul.f32 %v1473, %v1572
      %v1589 = vmul.f32 %v1535, %v1573
      %v1590 = vmul.f32 %v1538, %v1574
      %v1591 = vmul.f32 %v1543, %v1575
      %v1592 = vmul.f32 %v1546, %v1576
      %v1593 = vmul.f32 %v1551, %v1577
      %v1594 = vmul.f32 %v1554, %v1578
      %v1595 = vmul.f32 %v1559, %v1579
      %v1596 = vmul.f32 %v1562, %v1580
      %v1597 = vpack.c.bf16 %v1582, %v1581
      %v1598 = vpack.c.bf16 %v1584, %v1583
      %v1599 = vpack.c.bf16 %v1586, %v1585
      %v1600 = vpack.c.bf16 %v1588, %v1587
      %v1601 = vpack.c.bf16 %v1590, %v1589
      %v1602 = vpack.c.bf16 %v1592, %v1591
      %v1603 = vpack.c.bf16 %v1594, %v1593
      %v1604 = vpack.c.bf16 %v1596, %v1595
      %1613 = vrot.lane.b32.xlu0 %v1597, 8
      %v1614 = vpop.permute.xlu0 %1613
      %1615 = vrot.lane.b32.xlu0 %v1598, 8
      %v1616 = vpop.permute.xlu0 %1615
      %1617 = vrot.lane.b32.xlu0 %v1599, 8
      %v1618 = vpop.permute.xlu0 %1617
      %1619 = vrot.lane.b32.xlu0 %v1600, 8
      %v1620 = vpop.permute.xlu0 %1619
      %1621 = vrot.lane.b32.xlu0 %v1601, 8
      %v1622 = vpop.permute.xlu0 %1621
      %1623 = vrot.lane.b32.xlu0 %v1602, 8
      %v1624 = vpop.permute.xlu0 %1623
      %1625 = vrot.lane.b32.xlu0 %v1603, 8
      %v1626 = vpop.permute.xlu0 %1625
      %1627 = vrot.lane.b32.xlu0 %v1604, 8
      %v1628 = vpop.permute.xlu0 %1627
      %vm1637 = vcmask 130112
      %1638 = vst.msk [vmem:[#allocation2] sm:$0xff] %vm1637, %v1614
      %1639 = vst.msk [vmem:[#allocation2 + $0x8] sm:$0xff] %vm1637, %v1616
      %1640 = vst.msk [vmem:[#allocation2 + $0x10] sm:$0xff] %vm1637, %v1618
      %1641 = vst.msk [vmem:[#allocation2 + $0x18] sm:$0xff] %vm1637, %v1620
      %1642 = vst.msk [vmem:[#allocation2 + $0x20] sm:$0xff] %vm1637, %v1622
      %1643 = vst.msk [vmem:[#allocation2 + $0x28] sm:$0xff] %vm1637, %v1624
      %1644 = vst.msk [vmem:[#allocation2 + $0x30] sm:$0xff] %vm1637, %v1626
      %1645 = vst.msk [vmem:[#allocation2 + $0x38] sm:$0xff] %vm1637, %v1628
      %1646 = vrot.lane.b32.xlu0 %v435, 112
      %v1647 = vpop.permute.xlu0 %1646
      %1648 = vrot.lane.b32.xlu0 %v436, 112
      %v1649 = vpop.permute.xlu0 %1648
      %1650 = vrot.lane.b32.xlu0 %v437, 112
      %v1651 = vpop.permute.xlu0 %1650
      %1652 = vrot.lane.b32.xlu0 %v438, 112
      %v1653 = vpop.permute.xlu0 %1652
      %1654 = vrot.lane.b32.xlu0 %v435, 80
      %v1655 = vpop.permute.xlu0 %1654
      %1656 = vrot.lane.b32.xlu0 %v436, 80
      %v1657 = vpop.permute.xlu0 %1656
      %1658 = vrot.lane.b32.xlu0 %v437, 80
      %v1659 = vpop.permute.xlu0 %1658
      %1660 = vrot.lane.b32.xlu0 %v438, 80
      %v1661 = vpop.permute.xlu0 %1660
      %v1663 = vsel %vm455, %v1647, 0
      %v1666 = vsel %vm455, %v1649, 0
      %v1669 = vsel %vm455, %v1651, 0
      %v1672 = vsel %vm455, %v1653, 0
      %v1675 = vsel %vm455, %v1655, 0
      %v1678 = vsel %vm455, %v1657, 0
      %v1681 = vsel %vm455, %v1659, 0
      %v1684 = vsel %vm455, %v1661, 0
      %1686 = vmatprep.subr.bf16.mxu0 0
      %1687 = vmatpush1.bf16.xpose.msra.mxu0 %v1675
      %1688 = vmatprep.subr.bf16.mxu0 0
      %1689 = vmatpush1.bf16.xpose.msra.mxu0 %v1678
      %1690 = vmatprep.subr.bf16.mxu0 0
      %1691 = vmatpush1.bf16.xpose.msra.mxu0 %v1681
      %1692 = vmatprep.subr.bf16.mxu0 0
      %1693 = vmatpush1.bf16.xpose.msra.mxu0 %v1684
      %1694 = vmatprep.subr.bf16.mxu0 0
      %1695 = vmatpush1.bf16.xpose.msra.mxu0 0
      %1696 = vmatprep.subr.bf16.mxu0 0
      %1697 = vmatpush1.bf16.xpose.msra.mxu0 0
      %1698 = vmatprep.subr.bf16.mxu0 0
      %1699 = vmatpush1.bf16.xpose.msra.mxu0 0
      %1700 = vmatprep.subr.bf16.mxu0 0
      %1701 = vmatpush1.bf16.xpose.msra.mxu0 0
      %1702 = vmatprep.subr.bf16.mxu0 0
      %1703 = vmatpush1.bf16.xpose.msra.mxu0 0
      %1704 = vmatprep.subr.bf16.mxu0 0
      %1705 = vmatpush1.bf16.xpose.msra.mxu0 0
      %1706 = vmatprep.subr.bf16.mxu0 0
      %1707 = vmatpush1.bf16.xpose.msra.mxu0 0
      %1708 = vmatprep.subr.bf16.mxu0 0
      %1709 = vmatpush1.bf16.xpose.msra.mxu0 0
      %1710 = vmatprep.subr.bf16.mxu0 0
      %1711 = vmatpush1.bf16.xpose.msra.mxu0 0
      %1712 = vmatprep.subr.bf16.mxu0 0
      %1713 = vmatpush1.bf16.xpose.msra.mxu0 0
      %1714 = vmatprep.subr.bf16.mxu0 0
      %1715 = vmatpush1.bf16.xpose.msra.mxu0 0
      %1716 = vmatprep.subr.bf16.mxu0 0
      %1717 = vmatpush1.bf16.xpose.msra.mxu0 0
      %1718 = vmatprep.mubr.bf16.mxu0 0
      %1719 = vmatmul.mubr.bf16.gmra.mrb[0].mxu0 %v1663
      %v1720 = vpop.f32.mrb[0].mxu0
      %v1721 = vadd.f32 0.0, %v1720
      %v1722 = vpop.f32.mrb[0].mxu0
      %v1723 = vpop.f32.mrb[0].mxu0
      %v1724 = vadd.f32 0.0, %v1723
      %v1725 = vpop.f32.mrb[0].mxu0
      %1726 = vmatprep.mubr.bf16.mxu0 0
      %1727 = vmatmul.mubr.bf16.gmra.mrb[0].mxu0 %v1666
      %v1728 = vpop.f32.mrb[0].mxu0
      %v1729 = vadd.f32 0.0, %v1728
      %v1730 = vpop.f32.mrb[0].mxu0
      %v1731 = vpop.f32.mrb[0].mxu0
      %v1732 = vadd.f32 0.0, %v1731
      %v1733 = vpop.f32.mrb[0].mxu0
      %1734 = vmatprep.mubr.bf16.mxu0 0
      %1735 = vmatmul.mubr.bf16.gmra.mrb[0].mxu0 %v1669
      %v1736 = vpop.f32.mrb[0].mxu0
      %v1737 = vadd.f32 0.0, %v1736
      %v1738 = vpop.f32.mrb[0].mxu0
      %v1739 = vpop.f32.mrb[0].mxu0
      %v1740 = vadd.f32 0.0, %v1739
      %v1741 = vpop.f32.mrb[0].mxu0
      %1742 = vmatprep.mubr.bf16.mxu0 0
      %1743 = vmatmul.mubr.bf16.gmra.mrb[0].mxu0 %v1672
      %v1744 = vpop.f32.mrb[0].mxu0
      %v1745 = vadd.f32 0.0, %v1744
      %v1746 = vpop.f32.mrb[0].mxu0
      %v1747 = vpop.f32.mrb[0].mxu0
      %v1748 = vadd.f32 0.0, %v1747
      %v1749 = vpop.f32.mrb[0].mxu0
      %1750 = vdwg.mxu0
      %1751 = vrot.lane.b32.xlu0 %v439, 112
      %v1752 = vpop.permute.xlu0 %1751
      %1753 = vrot.lane.b32.xlu0 %v440, 112
      %v1754 = vpop.permute.xlu0 %1753
      %1755 = vrot.lane.b32.xlu0 %v441, 112
      %v1756 = vpop.permute.xlu0 %1755
      %1757 = vrot.lane.b32.xlu0 %v442, 112
      %v1758 = vpop.permute.xlu0 %1757
      %1759 = vrot.lane.b32.xlu0 %v439, 80
      %v1760 = vpop.permute.xlu0 %1759
      %1761 = vrot.lane.b32.xlu0 %v440, 80
      %v1762 = vpop.permute.xlu0 %1761
      %1763 = vrot.lane.b32.xlu0 %v441, 80
      %v1764 = vpop.permute.xlu0 %1763
      %1765 = vrot.lane.b32.xlu0 %v442, 80
      %v1766 = vpop.permute.xlu0 %1765
      %v1768 = vsel %vm455, %v1752, 0
      %v1771 = vsel %vm455, %v1754, 0
      %v1774 = vsel %vm455, %v1756, 0
      %v1777 = vsel %vm455, %v1758, 0
      %v1780 = vsel %vm455, %v1760, 0
      %v1783 = vsel %vm455, %v1762, 0
      %v1786 = vsel %vm455, %v1764, 0
      %v1789 = vsel %vm455, %v1766, 0
      %1791 = vmatprep.subr.bf16.mxu0 0
      %1792 = vmatpush1.bf16.xpose.msra.mxu0 %v1780
      %1793 = vmatprep.subr.bf16.mxu0 0
      %1794 = vmatpush1.bf16.xpose.msra.mxu0 %v1783
      %1795 = vmatprep.subr.bf16.mxu0 0
      %1796 = vmatpush1.bf16.xpose.msra.mxu0 %v1786
      %1797 = vmatprep.subr.bf16.mxu0 0
      %1798 = vmatpush1.bf16.xpose.msra.mxu0 %v1789
      %1799 = vmatprep.subr.bf16.mxu0 0
      %1800 = vmatpush1.bf16.xpose.msra.mxu0 0
      %1801 = vmatprep.subr.bf16.mxu0 0
      %1802 = vmatpush1.bf16.xpose.msra.mxu0 0
      %1803 = vmatprep.subr.bf16.mxu0 0
      %1804 = vmatpush1.bf16.xpose.msra.mxu0 0
      %1805 = vmatprep.subr.bf16.mxu0 0
      %1806 = vmatpush1.bf16.xpose.msra.mxu0 0
      %1807 = vmatprep.subr.bf16.mxu0 0
      %1808 = vmatpush1.bf16.xpose.msra.mxu0 0
      %1809 = vmatprep.subr.bf16.mxu0 0
      %1810 = vmatpush1.bf16.xpose.msra.mxu0 0
      %1811 = vmatprep.subr.bf16.mxu0 0
      %1812 = vmatpush1.bf16.xpose.msra.mxu0 0
      %1813 = vmatprep.subr.bf16.mxu0 0
      %1814 = vmatpush1.bf16.xpose.msra.mxu0 0
      %1815 = vmatprep.subr.bf16.mxu0 0
      %1816 = vmatpush1.bf16.xpose.msra.mxu0 0
      %1817 = vmatprep.subr.bf16.mxu0 0
      %1818 = vmatpush1.bf16.xpose.msra.mxu0 0
      %1819 = vmatprep.subr.bf16.mxu0 0
      %1820 = vmatpush1.bf16.xpose.msra.mxu0 0
      %1821 = vmatprep.subr.bf16.mxu0 0
      %1822 = vmatpush1.bf16.xpose.msra.mxu0 0
      %1823 = vmatprep.mubr.bf16.mxu0 0
      %1824 = vmatmul.mubr.bf16.gmra.mrb[0].mxu0 %v1768
      %v1825 = vpop.f32.mrb[0].mxu0
      %v1826 = vadd.f32 0.0, %v1825
      %v1827 = vpop.f32.mrb[0].mxu0
      %v1828 = vpop.f32.mrb[0].mxu0
      %v1829 = vadd.f32 0.0, %v1828
      %v1830 = vpop.f32.mrb[0].mxu0
      %1831 = vmatprep.mubr.bf16.mxu0 0
      %1832 = vmatmul.mubr.bf16.gmra.mrb[0].mxu0 %v1771
      %v1833 = vpop.f32.mrb[0].mxu0
      %v1834 = vadd.f32 0.0, %v1833
      %v1835 = vpop.f32.mrb[0].mxu0
      %v1836 = vpop.f32.mrb[0].mxu0
      %v1837 = vadd.f32 0.0, %v1836
      %v1838 = vpop.f32.mrb[0].mxu0
      %1839 = vmatprep.mubr.bf16.mxu0 0
      %1840 = vmatmul.mubr.bf16.gmra.mrb[0].mxu0 %v1774
      %v1841 = vpop.f32.mrb[0].mxu0
      %v1842 = vadd.f32 0.0, %v1841
      %v1843 = vpop.f32.mrb[0].mxu0
      %v1844 = vpop.f32.mrb[0].mxu0
      %v1845 = vadd.f32 0.0, %v1844
      %v1846 = vpop.f32.mrb[0].mxu0
      %1847 = vmatprep.mubr.bf16.mxu0 0
      %1848 = vmatmul.mubr.bf16.gmra.mrb[0].mxu0 %v1777
      %v1849 = vpop.f32.mrb[0].mxu0
      %v1850 = vadd.f32 0.0, %v1849
      %v1851 = vpop.f32.mrb[0].mxu0
      %v1852 = vpop.f32.mrb[0].mxu0
      %v1853 = vadd.f32 0.0, %v1852
      %v1854 = vpop.f32.mrb[0].mxu0
      %1855 = vdwg.mxu0
      %v1856 = vsel %vm646, %v1721, -inf
      %1857 = vmax.xlane.f32.xlu0 %v1856
      %v1858 = vpop.xlane.xlu0 %1857
      %v1859 = vsel %vm646, %v1724, -inf
      %1860 = vmax.xlane.f32.xlu0 %v1859
      %v1861 = vpop.xlane.xlu0 %1860
      %v1862 = vsel %vm646, %v1729, -inf
      %1863 = vmax.xlane.f32.xlu0 %v1862
      %v1864 = vpop.xlane.xlu0 %1863
      %v1865 = vsel %vm646, %v1732, -inf
      %1866 = vmax.xlane.f32.xlu0 %v1865
      %v1867 = vpop.xlane.xlu0 %1866
      %v1868 = vsel %vm646, %v1737, -inf
      %1869 = vmax.xlane.f32.xlu0 %v1868
      %v1870 = vpop.xlane.xlu0 %1869
      %v1871 = vsel %vm646, %v1740, -inf
      %1872 = vmax.xlane.f32.xlu0 %v1871
      %v1873 = vpop.xlane.xlu0 %1872
      %v1874 = vsel %vm646, %v1745, -inf
      %1875 = vmax.xlane.f32.xlu0 %v1874
      %v1876 = vpop.xlane.xlu0 %1875
      %v1877 = vsel %vm646, %v1748, -inf
      %1878 = vmax.xlane.f32.xlu0 %v1877
      %v1879 = vpop.xlane.xlu0 %1878
      %v1880 = vsel %vm646, %v1826, -inf
      %1881 = vmax.xlane.f32.xlu0 %v1880
      %v1882 = vpop.xlane.xlu0 %1881
      %v1883 = vsel %vm646, %v1829, -inf
      %1884 = vmax.xlane.f32.xlu0 %v1883
      %v1885 = vpop.xlane.xlu0 %1884
      %v1886 = vsel %vm646, %v1834, -inf
      %1887 = vmax.xlane.f32.xlu0 %v1886
      %v1888 = vpop.xlane.xlu0 %1887
      %v1889 = vsel %vm646, %v1837, -inf
      %1890 = vmax.xlane.f32.xlu0 %v1889
      %v1891 = vpop.xlane.xlu0 %1890
      %v1892 = vsel %vm646, %v1842, -inf
      %1893 = vmax.xlane.f32.xlu0 %v1892
      %v1894 = vpop.xlane.xlu0 %1893
      %v1895 = vsel %vm646, %v1845, -inf
      %1896 = vmax.xlane.f32.xlu0 %v1895
      %v1897 = vpop.xlane.xlu0 %1896
      %v1898 = vsel %vm646, %v1850, -inf
      %1899 = vmax.xlane.f32.xlu0 %v1898
      %v1900 = vpop.xlane.xlu0 %1899
      %v1901 = vsel %vm646, %v1853, -inf
      %1902 = vmax.xlane.f32.xlu0 %v1901
      %v1903 = vpop.xlane.xlu0 %1902
      %v1904 = vsub.f32 %v1721, %v1858
      %v1905 = vsub.f32 %v1724, %v1861
      %v1906 = vsub.f32 %v1729, %v1864
      %v1907 = vsub.f32 %v1732, %v1867
      %v1908 = vsub.f32 %v1737, %v1870
      %v1909 = vsub.f32 %v1740, %v1873
      %v1910 = vsub.f32 %v1745, %v1876
      %v1911 = vsub.f32 %v1748, %v1879
      %v1912 = vsub.f32 %v1826, %v1882
      %v1913 = vsub.f32 %v1829, %v1885
      %v1914 = vsub.f32 %v1834, %v1888
      %v1915 = vsub.f32 %v1837, %v1891
      %v1916 = vsub.f32 %v1842, %v1894
      %v1917 = vsub.f32 %v1845, %v1897
      %v1918 = vsub.f32 %v1850, %v1900
      %v1919 = vsub.f32 %v1853, %v1903
      %v1920 = vmul.f32 %v1904, 1.442695
      %v1921 = vpow.pop %v1920
      %v1922 = vmul.f32 %v1905, 1.442695
      %v1923 = vpow.pop %v1922
      %v1924 = vmul.f32 %v1906, 1.442695
      %v1925 = vpow.pop %v1924
      %v1926 = vmul.f32 %v1907, 1.442695
      %v1927 = vpow.pop %v1926
      %v1928 = vmul.f32 %v1908, 1.442695
      %v1929 = vpow.pop %v1928
      %v1930 = vmul.f32 %v1909, 1.442695
      %v1931 = vpow.pop %v1930
      %v1932 = vmul.f32 %v1910, 1.442695
      %v1933 = vpow.pop %v1932
      %v1934 = vmul.f32 %v1911, 1.442695
      %v1935 = vpow.pop %v1934
      %v1936 = vmul.f32 %v1912, 1.442695
      %v1937 = vpow.pop %v1936
      %v1938 = vmul.f32 %v1913, 1.442695
      %v1939 = vpow.pop %v1938
      %v1940 = vmul.f32 %v1914, 1.442695
      %v1941 = vpow.pop %v1940
      %v1942 = vmul.f32 %v1915, 1.442695
      %v1943 = vpow.pop %v1942
      %v1944 = vmul.f32 %v1916, 1.442695
      %v1945 = vpow.pop %v1944
      %v1946 = vmul.f32 %v1917, 1.442695
      %v1947 = vpow.pop %v1946
      %v1948 = vmul.f32 %v1918, 1.442695
      %v1949 = vpow.pop %v1948
      %v1950 = vmul.f32 %v1919, 1.442695
      %v1951 = vpow.pop %v1950
      %v1952 = vsel %vm646, %v1921, 0.0
      %1953 = vadd.xlane.f32.xlu0 %v1952
      %v1954 = vpop.xlane.xlu0 %1953
      %v1955 = vsel %vm646, %v1923, 0.0
      %1956 = vadd.xlane.f32.xlu0 %v1955
      %v1957 = vpop.xlane.xlu0 %1956
      %v1958 = vsel %vm646, %v1925, 0.0
      %1959 = vadd.xlane.f32.xlu0 %v1958
      %v1960 = vpop.xlane.xlu0 %1959
      %v1961 = vsel %vm646, %v1927, 0.0
      %1962 = vadd.xlane.f32.xlu0 %v1961
      %v1963 = vpop.xlane.xlu0 %1962
      %v1964 = vsel %vm646, %v1929, 0.0
      %1965 = vadd.xlane.f32.xlu0 %v1964
      %v1966 = vpop.xlane.xlu0 %1965
      %v1967 = vsel %vm646, %v1931, 0.0
      %1968 = vadd.xlane.f32.xlu0 %v1967
      %v1969 = vpop.xlane.xlu0 %1968
      %v1970 = vsel %vm646, %v1933, 0.0
      %1971 = vadd.xlane.f32.xlu0 %v1970
      %v1972 = vpop.xlane.xlu0 %1971
      %v1973 = vsel %vm646, %v1935, 0.0
      %1974 = vadd.xlane.f32.xlu0 %v1973
      %v1975 = vpop.xlane.xlu0 %1974
      %v1976 = vsel %vm646, %v1937, 0.0
      %1977 = vadd.xlane.f32.xlu0 %v1976
      %v1978 = vpop.xlane.xlu0 %1977
      %v1979 = vsel %vm646, %v1939, 0.0
      %1980 = vadd.xlane.f32.xlu0 %v1979
      %v1981 = vpop.xlane.xlu0 %1980
      %v1982 = vsel %vm646, %v1941, 0.0
      %1983 = vadd.xlane.f32.xlu0 %v1982
      %v1984 = vpop.xlane.xlu0 %1983
      %v1985 = vsel %vm646, %v1943, 0.0
      %1986 = vadd.xlane.f32.xlu0 %v1985
      %v1987 = vpop.xlane.xlu0 %1986
      %v1988 = vsel %vm646, %v1945, 0.0
      %1989 = vadd.xlane.f32.xlu0 %v1988
      %v1990 = vpop.xlane.xlu0 %1989
      %v1991 = vsel %vm646, %v1947, 0.0
      %1992 = vadd.xlane.f32.xlu0 %v1991
      %v1993 = vpop.xlane.xlu0 %1992
      %v1994 = vsel %vm646, %v1949, 0.0
      %1995 = vadd.xlane.f32.xlu0 %v1994
      %v1996 = vpop.xlane.xlu0 %1995
      %v1997 = vsel %vm646, %v1951, 0.0
      %1998 = vadd.xlane.f32.xlu0 %v1997
      %v1999 = vpop.xlane.xlu0 %1998
      %v2000 = vpack.c.bf16 %v1923, %v1921
      %v2001 = vpack.c.bf16 %v1927, %v1925
      %v2002 = vpack.c.bf16 %v1931, %v1929
      %v2003 = vpack.c.bf16 %v1935, %v1933
      %v2004 = vpack.c.bf16 %v1939, %v1937
      %v2005 = vpack.c.bf16 %v1943, %v1941
      %v2006 = vpack.c.bf16 %v1947, %v1945
      %v2007 = vpack.c.bf16 %v1951, %v1949
      %2008 = vrot.lane.b32.xlu0 %v435, 48
      %v2009 = vpop.permute.xlu0 %2008
      %2010 = vrot.lane.b32.xlu0 %v436, 48
      %v2011 = vpop.permute.xlu0 %2010
      %2012 = vrot.lane.b32.xlu0 %v437, 48
      %v2013 = vpop.permute.xlu0 %2012
      %2014 = vrot.lane.b32.xlu0 %v438, 48
      %v2015 = vpop.permute.xlu0 %2014
      %v2021 = vsel %vm646, %v2000, 0
      %v2024 = vsel %vm646, %v2001, 0
      %v2027 = vsel %vm646, %v2002, 0
      %v2030 = vsel %vm646, %v2003, 0
      %2032 = vmatprep.subr.bf16.mxu0 0
      %2033 = vmatpush1.bf16.msra.mxu0 %v2009
      %2034 = vmatprep.subr.bf16.mxu0 0
      %2035 = vmatpush1.bf16.msra.mxu0 %v2011
      %2036 = vmatprep.subr.bf16.mxu0 0
      %2037 = vmatpush1.bf16.msra.mxu0 %v2013
      %2038 = vmatprep.subr.bf16.mxu0 0
      %2039 = vmatpush1.bf16.msra.mxu0 %v2015
      %2040 = vmatprep.subr.bf16.mxu0 0
      %2041 = vmatpush1.bf16.msra.mxu0 0
      %2042 = vmatprep.subr.bf16.mxu0 0
      %2043 = vmatpush1.bf16.msra.mxu0 0
      %2044 = vmatprep.subr.bf16.mxu0 0
      %2045 = vmatpush1.bf16.msra.mxu0 0
      %2046 = vmatprep.subr.bf16.mxu0 0
      %2047 = vmatpush1.bf16.msra.mxu0 0
      %2048 = vmatprep.subr.bf16.mxu0 0
      %2049 = vmatpush1.bf16.msra.mxu0 0
      %2050 = vmatprep.subr.bf16.mxu0 0
      %2051 = vmatpush1.bf16.msra.mxu0 0
      %2052 = vmatprep.subr.bf16.mxu0 0
      %2053 = vmatpush1.bf16.msra.mxu0 0
      %2054 = vmatprep.subr.bf16.mxu0 0
      %2055 = vmatpush1.bf16.msra.mxu0 0
      %2056 = vmatprep.subr.bf16.mxu0 0
      %2057 = vmatpush1.bf16.msra.mxu0 0
      %2058 = vmatprep.subr.bf16.mxu0 0
      %2059 = vmatpush1.bf16.msra.mxu0 0
      %2060 = vmatprep.subr.bf16.mxu0 0
      %2061 = vmatpush1.bf16.msra.mxu0 0
      %2062 = vmatprep.subr.bf16.mxu0 0
      %2063 = vmatpush1.bf16.msra.mxu0 0
      %2064 = vmatprep.mubr.bf16.mxu0 0
      %2065 = vmatmul.mubr.bf16.gmra.mrb[0].mxu0 %v2021
      %v2066 = vpop.f32.mrb[0].mxu0
      %v2067 = vadd.f32 0.0, %v2066
      %v2068 = vpop.f32.mrb[0].mxu0
      %v2069 = vpop.f32.mrb[0].mxu0
      %v2070 = vadd.f32 0.0, %v2069
      %v2071 = vpop.f32.mrb[0].mxu0
      %2072 = vmatprep.mubr.bf16.mxu0 0
      %2073 = vmatmul.mubr.bf16.gmra.mrb[0].mxu0 %v2024
      %v2074 = vpop.f32.mrb[0].mxu0
      %v2075 = vadd.f32 0.0, %v2074
      %v2076 = vpop.f32.mrb[0].mxu0
      %v2077 = vpop.f32.mrb[0].mxu0
      %v2078 = vadd.f32 0.0, %v2077
      %v2079 = vpop.f32.mrb[0].mxu0
      %2080 = vmatprep.mubr.bf16.mxu0 0
      %2081 = vmatmul.mubr.bf16.gmra.mrb[0].mxu0 %v2027
      %v2082 = vpop.f32.mrb[0].mxu0
      %v2083 = vadd.f32 0.0, %v2082
      %v2084 = vpop.f32.mrb[0].mxu0
      %v2085 = vpop.f32.mrb[0].mxu0
      %v2086 = vadd.f32 0.0, %v2085
      %v2087 = vpop.f32.mrb[0].mxu0
      %2088 = vmatprep.mubr.bf16.mxu0 0
      %2089 = vmatmul.mubr.bf16.gmra.mrb[0].mxu0 %v2030
      %v2090 = vpop.f32.mrb[0].mxu0
      %v2091 = vadd.f32 0.0, %v2090
      %v2092 = vpop.f32.mrb[0].mxu0
      %v2093 = vpop.f32.mrb[0].mxu0
      %v2094 = vadd.f32 0.0, %v2093
      %v2095 = vpop.f32.mrb[0].mxu0
      %2096 = vdwg.mxu0
      %2097 = vrot.lane.b32.xlu0 %v439, 48
      %v2098 = vpop.permute.xlu0 %2097
      %2099 = vrot.lane.b32.xlu0 %v440, 48
      %v2100 = vpop.permute.xlu0 %2099
      %2101 = vrot.lane.b32.xlu0 %v441, 48
      %v2102 = vpop.permute.xlu0 %2101
      %2103 = vrot.lane.b32.xlu0 %v442, 48
      %v2104 = vpop.permute.xlu0 %2103
      %v2110 = vsel %vm646, %v2004, 0
      %v2113 = vsel %vm646, %v2005, 0
      %v2116 = vsel %vm646, %v2006, 0
      %v2119 = vsel %vm646, %v2007, 0
      %2121 = vmatprep.subr.bf16.mxu0 0
      %2122 = vmatpush1.bf16.msra.mxu0 %v2098
      %2123 = vmatprep.subr.bf16.mxu0 0
      %2124 = vmatpush1.bf16.msra.mxu0 %v2100
      %2125 = vmatprep.subr.bf16.mxu0 0
      %2126 = vmatpush1.bf16.msra.mxu0 %v2102
      %2127 = vmatprep.subr.bf16.mxu0 0
      %2128 = vmatpush1.bf16.msra.mxu0 %v2104
      %2129 = vmatprep.subr.bf16.mxu0 0
      %2130 = vmatpush1.bf16.msra.mxu0 0
      %2131 = vmatprep.subr.bf16.mxu0 0
      %2132 = vmatpush1.bf16.msra.mxu0 0
      %2133 = vmatprep.subr.bf16.mxu0 0
      %2134 = vmatpush1.bf16.msra.mxu0 0
      %2135 = vmatprep.subr.bf16.mxu0 0
      %2136 = vmatpush1.bf16.msra.mxu0 0
      %2137 = vmatprep.subr.bf16.mxu0 0
      %2138 = vmatpush1.bf16.msra.mxu0 0
      %2139 = vmatprep.subr.bf16.mxu0 0
      %2140 = vmatpush1.bf16.msra.mxu0 0
      %2141 = vmatprep.subr.bf16.mxu0 0
      %2142 = vmatpush1.bf16.msra.mxu0 0
      %2143 = vmatprep.subr.bf16.mxu0 0
      %2144 = vmatpush1.bf16.msra.mxu0 0
      %2145 = vmatprep.subr.bf16.mxu0 0
      %2146 = vmatpush1.bf16.msra.mxu0 0
      %2147 = vmatprep.subr.bf16.mxu0 0
      %2148 = vmatpush1.bf16.msra.mxu0 0
      %2149 = vmatprep.subr.bf16.mxu0 0
      %2150 = vmatpush1.bf16.msra.mxu0 0
      %2151 = vmatprep.subr.bf16.mxu0 0
      %2152 = vmatpush1.bf16.msra.mxu0 0
      %2153 = vmatprep.mubr.bf16.mxu0 0
      %2154 = vmatmul.mubr.bf16.gmra.mrb[0].mxu0 %v2110
      %v2155 = vpop.f32.mrb[0].mxu0
      %v2156 = vadd.f32 0.0, %v2155
      %v2157 = vpop.f32.mrb[0].mxu0
      %v2158 = vpop.f32.mrb[0].mxu0
      %v2159 = vadd.f32 0.0, %v2158
      %v2160 = vpop.f32.mrb[0].mxu0
      %2161 = vmatprep.mubr.bf16.mxu0 0
      %2162 = vmatmul.mubr.bf16.gmra.mrb[0].mxu0 %v2113
      %v2163 = vpop.f32.mrb[0].mxu0
      %v2164 = vadd.f32 0.0, %v2163
      %v2165 = vpop.f32.mrb[0].mxu0
      %v2166 = vpop.f32.mrb[0].mxu0
      %v2167 = vadd.f32 0.0, %v2166
      %v2168 = vpop.f32.mrb[0].mxu0
      %2169 = vmatprep.mubr.bf16.mxu0 0
      %2170 = vmatmul.mubr.bf16.gmra.mrb[0].mxu0 %v2116
      %v2171 = vpop.f32.mrb[0].mxu0
      %v2172 = vadd.f32 0.0, %v2171
      %v2173 = vpop.f32.mrb[0].mxu0
      %v2174 = vpop.f32.mrb[0].mxu0
      %v2175 = vadd.f32 0.0, %v2174
      %v2176 = vpop.f32.mrb[0].mxu0
      %2177 = vmatprep.mubr.bf16.mxu0 0
      %2178 = vmatmul.mubr.bf16.gmra.mrb[0].mxu0 %v2119
      %v2179 = vpop.f32.mrb[0].mxu0
      %v2180 = vadd.f32 0.0, %v2179
      %v2181 = vpop.f32.mrb[0].mxu0
      %v2182 = vpop.f32.mrb[0].mxu0
      %v2183 = vadd.f32 0.0, %v2182
      %v2184 = vpop.f32.mrb[0].mxu0
      %2185 = vdwg.mxu0
      %v2186 = vrcp.pop %v1954
      %v2187 = vrcp.pop %v1957
      %v2188 = vrcp.pop %v1960
      %v2189 = vrcp.pop %v1963
      %v2190 = vrcp.pop %v1966
      %v2191 = vrcp.pop %v1969
      %v2192 = vrcp.pop %v1972
      %v2193 = vrcp.pop %v1975
      %v2194 = vrcp.pop %v1978
      %v2195 = vrcp.pop %v1981
      %v2196 = vrcp.pop %v1984
      %v2197 = vrcp.pop %v1987
      %v2198 = vrcp.pop %v1990
      %v2199 = vrcp.pop %v1993
      %v2200 = vrcp.pop %v1996
      %v2201 = vrcp.pop %v1999
      %v2202 = vmul.f32 %v2067, %v2186
      %v2203 = vmul.f32 %v2070, %v2187
      %v2204 = vmul.f32 %v2075, %v2188
      %v2205 = vmul.f32 %v2078, %v2189
      %v2206 = vmul.f32 %v2083, %v2190
      %v2207 = vmul.f32 %v2086, %v2191
      %v2208 = vmul.f32 %v2091, %v2192
      %v2209 = vmul.f32 %v2094, %v2193
      %v2210 = vmul.f32 %v2156, %v2194
      %v2211 = vmul.f32 %v2159, %v2195
      %v2212 = vmul.f32 %v2164, %v2196
      %v2213 = vmul.f32 %v2167, %v2197
      %v2214 = vmul.f32 %v2172, %v2198
      %v2215 = vmul.f32 %v2175, %v2199
      %v2216 = vmul.f32 %v2180, %v2200
      %v2217 = vmul.f32 %v2183, %v2201
      %v2218 = vpack.c.bf16 %v2203, %v2202
      %v2219 = vpack.c.bf16 %v2205, %v2204
      %v2220 = vpack.c.bf16 %v2207, %v2206
      %v2221 = vpack.c.bf16 %v2209, %v2208
      %v2222 = vpack.c.bf16 %v2211, %v2210
      %v2223 = vpack.c.bf16 %v2213, %v2212
      %v2224 = vpack.c.bf16 %v2215, %v2214
      %v2225 = vpack.c.bf16 %v2217, %v2216
      %2234 = vrot.lane.b32.xlu0 %v2218, 16
      %v2235 = vpop.permute.xlu0 %2234
      %2236 = vrot.lane.b32.xlu0 %v2219, 16
      %v2237 = vpop.permute.xlu0 %2236
      %2238 = vrot.lane.b32.xlu0 %v2220, 16
      %v2239 = vpop.permute.xlu0 %2238
      %2240 = vrot.lane.b32.xlu0 %v2221, 16
      %v2241 = vpop.permute.xlu0 %2240
      %2242 = vrot.lane.b32.xlu0 %v2222, 16
      %v2243 = vpop.permute.xlu0 %2242
      %2244 = vrot.lane.b32.xlu0 %v2223, 16
      %v2245 = vpop.permute.xlu0 %2244
      %2246 = vrot.lane.b32.xlu0 %v2224, 16
      %v2247 = vpop.permute.xlu0 %2246
      %2248 = vrot.lane.b32.xlu0 %v2225, 16
      %v2249 = vpop.permute.xlu0 %2248
      %vm2258 = vcmask 195712
      %2259 = vst.msk [vmem:[#allocation2] sm:$0xff] %vm2258, %v2235
      %2260 = vst.msk [vmem:[#allocation2 + $0x8] sm:$0xff] %vm2258, %v2237
      %2261 = vst.msk [vmem:[#allocation2 + $0x10] sm:$0xff] %vm2258, %v2239
      %2262 = vst.msk [vmem:[#allocation2 + $0x18] sm:$0xff] %vm2258, %v2241
      %2263 = vst.msk [vmem:[#allocation2 + $0x20] sm:$0xff] %vm2258, %v2243
      %2264 = vst.msk [vmem:[#allocation2 + $0x28] sm:$0xff] %vm2258, %v2245
      %2265 = vst.msk [vmem:[#allocation2 + $0x30] sm:$0xff] %vm2258, %v2247
      %2266 = vst.msk [vmem:[#allocation2 + $0x38] sm:$0xff] %vm2258, %v2249
      %2267 = vrot.lane.b32.xlu0 %v435, 104
      %v2268 = vpop.permute.xlu0 %2267
      %2269 = vrot.lane.b32.xlu0 %v436, 104
      %v2270 = vpop.permute.xlu0 %2269
      %2271 = vrot.lane.b32.xlu0 %v437, 104
      %v2272 = vpop.permute.xlu0 %2271
      %2273 = vrot.lane.b32.xlu0 %v438, 104
      %v2274 = vpop.permute.xlu0 %2273
      %2275 = vrot.lane.b32.xlu0 %v435, 72
      %v2276 = vpop.permute.xlu0 %2275
      %2277 = vrot.lane.b32.xlu0 %v436, 72
      %v2278 = vpop.permute.xlu0 %2277
      %2279 = vrot.lane.b32.xlu0 %v437, 72
      %v2280 = vpop.permute.xlu0 %2279
      %2281 = vrot.lane.b32.xlu0 %v438, 72
      %v2282 = vpop.permute.xlu0 %2281
      %v2284 = vsel %vm455, %v2268, 0
      %v2287 = vsel %vm455, %v2270, 0
      %v2290 = vsel %vm455, %v2272, 0
      %v2293 = vsel %vm455, %v2274, 0
      %v2296 = vsel %vm455, %v2276, 0
      %v2299 = vsel %vm455, %v2278, 0
      %v2302 = vsel %vm455, %v2280, 0
      %v2305 = vsel %vm455, %v2282, 0
      %2307 = vmatprep.subr.bf16.mxu0 0
      %2308 = vmatpush1.bf16.xpose.msra.mxu0 %v2296
      %2309 = vmatprep.subr.bf16.mxu0 0
      %2310 = vmatpush1.bf16.xpose.msra.mxu0 %v2299
      %2311 = vmatprep.subr.bf16.mxu0 0
      %2312 = vmatpush1.bf16.xpose.msra.mxu0 %v2302
      %2313 = vmatprep.subr.bf16.mxu0 0
      %2314 = vmatpush1.bf16.xpose.msra.mxu0 %v2305
      %2315 = vmatprep.subr.bf16.mxu0 0
      %2316 = vmatpush1.bf16.xpose.msra.mxu0 0
      %2317 = vmatprep.subr.bf16.mxu0 0
      %2318 = vmatpush1.bf16.xpose.msra.mxu0 0
      %2319 = vmatprep.subr.bf16.mxu0 0
      %2320 = vmatpush1.bf16.xpose.msra.mxu0 0
      %2321 = vmatprep.subr.bf16.mxu0 0
      %2322 = vmatpush1.bf16.xpose.msra.mxu0 0
      %2323 = vmatprep.subr.bf16.mxu0 0
      %2324 = vmatpush1.bf16.xpose.msra.mxu0 0
      %2325 = vmatprep.subr.bf16.mxu0 0
      %2326 = vmatpush1.bf16.xpose.msra.mxu0 0
      %2327 = vmatprep.subr.bf16.mxu0 0
      %2328 = vmatpush1.bf16.xpose.msra.mxu0 0
      %2329 = vmatprep.subr.bf16.mxu0 0
      %2330 = vmatpush1.bf16.xpose.msra.mxu0 0
      %2331 = vmatprep.subr.bf16.mxu0 0
      %2332 = vmatpush1.bf16.xpose.msra.mxu0 0
      %2333 = vmatprep.subr.bf16.mxu0 0
      %2334 = vmatpush1.bf16.xpose.msra.mxu0 0
      %2335 = vmatprep.subr.bf16.mxu0 0
      %2336 = vmatpush1.bf16.xpose.msra.mxu0 0
      %2337 = vmatprep.subr.bf16.mxu0 0
      %2338 = vmatpush1.bf16.xpose.msra.mxu0 0
      %2339 = vmatprep.mubr.bf16.mxu0 0
      %2340 = vmatmul.mubr.bf16.gmra.mrb[0].mxu0 %v2284
      %v2341 = vpop.f32.mrb[0].mxu0
      %v2342 = vadd.f32 0.0, %v2341
      %v2343 = vpop.f32.mrb[0].mxu0
      %v2344 = vpop.f32.mrb[0].mxu0
      %v2345 = vadd.f32 0.0, %v2344
      %v2346 = vpop.f32.mrb[0].mxu0
      %2347 = vmatprep.mubr.bf16.mxu0 0
      %2348 = vmatmul.mubr.bf16.gmra.mrb[0].mxu0 %v2287
      %v2349 = vpop.f32.mrb[0].mxu0
      %v2350 = vadd.f32 0.0, %v2349
      %v2351 = vpop.f32.mrb[0].mxu0
      %v2352 = vpop.f32.mrb[0].mxu0
      %v2353 = vadd.f32 0.0, %v2352
      %v2354 = vpop.f32.mrb[0].mxu0
      %2355 = vmatprep.mubr.bf16.mxu0 0
      %2356 = vmatmul.mubr.bf16.gmra.mrb[0].mxu0 %v2290
      %v2357 = vpop.f32.mrb[0].mxu0
      %v2358 = vadd.f32 0.0, %v2357
      %v2359 = vpop.f32.mrb[0].mxu0
      %v2360 = vpop.f32.mrb[0].mxu0
      %v2361 = vadd.f32 0.0, %v2360
      %v2362 = vpop.f32.mrb[0].mxu0
      %2363 = vmatprep.mubr.bf16.mxu0 0
      %2364 = vmatmul.mubr.bf16.gmra.mrb[0].mxu0 %v2293
      %v2365 = vpop.f32.mrb[0].mxu0
      %v2366 = vadd.f32 0.0, %v2365
      %v2367 = vpop.f32.mrb[0].mxu0
      %v2368 = vpop.f32.mrb[0].mxu0
      %v2369 = vadd.f32 0.0, %v2368
      %v2370 = vpop.f32.mrb[0].mxu0
      %2371 = vdwg.mxu0
      %2372 = vrot.lane.b32.xlu0 %v439, 104
      %v2373 = vpop.permute.xlu0 %2372
      %2374 = vrot.lane.b32.xlu0 %v440, 104
      %v2375 = vpop.permute.xlu0 %2374
      %2376 = vrot.lane.b32.xlu0 %v441, 104
      %v2377 = vpop.permute.xlu0 %2376
      %2378 = vrot.lane.b32.xlu0 %v442, 104
      %v2379 = vpop.permute.xlu0 %2378
      %2380 = vrot.lane.b32.xlu0 %v439, 72
      %v2381 = vpop.permute.xlu0 %2380
      %2382 = vrot.lane.b32.xlu0 %v440, 72
      %v2383 = vpop.permute.xlu0 %2382
      %2384 = vrot.lane.b32.xlu0 %v441, 72
      %v2385 = vpop.permute.xlu0 %2384
      %2386 = vrot.lane.b32.xlu0 %v442, 72
      %v2387 = vpop.permute.xlu0 %2386
      %v2389 = vsel %vm455, %v2373, 0
      %v2392 = vsel %vm455, %v2375, 0
      %v2395 = vsel %vm455, %v2377, 0
      %v2398 = vsel %vm455, %v2379, 0
      %v2401 = vsel %vm455, %v2381, 0
      %v2404 = vsel %vm455, %v2383, 0
      %v2407 = vsel %vm455, %v2385, 0
      %v2410 = vsel %vm455, %v2387, 0
      %2412 = vmatprep.subr.bf16.mxu0 0
      %2413 = vmatpush1.bf16.xpose.msra.mxu0 %v2401
      %2414 = vmatprep.subr.bf16.mxu0 0
      %2415 = vmatpush1.bf16.xpose.msra.mxu0 %v2404
      %2416 = vmatprep.subr.bf16.mxu0 0
      %2417 = vmatpush1.bf16.xpose.msra.mxu0 %v2407
      %2418 = vmatprep.subr.bf16.mxu0 0
      %2419 = vmatpush1.bf16.xpose.msra.mxu0 %v2410
      %2420 = vmatprep.subr.bf16.mxu0 0
      %2421 = vmatpush1.bf16.xpose.msra.mxu0 0
      %2422 = vmatprep.subr.bf16.mxu0 0
      %2423 = vmatpush1.bf16.xpose.msra.mxu0 0
      %2424 = vmatprep.subr.bf16.mxu0 0
      %2425 = vmatpush1.bf16.xpose.msra.mxu0 0
      %2426 = vmatprep.subr.bf16.mxu0 0
      %2427 = vmatpush1.bf16.xpose.msra.mxu0 0
      %2428 = vmatprep.subr.bf16.mxu0 0
      %2429 = vmatpush1.bf16.xpose.msra.mxu0 0
      %2430 = vmatprep.subr.bf16.mxu0 0
      %2431 = vmatpush1.bf16.xpose.msra.mxu0 0
      %2432 = vmatprep.subr.bf16.mxu0 0
      %2433 = vmatpush1.bf16.xpose.msra.mxu0 0
      %2434 = vmatprep.subr.bf16.mxu0 0
      %2435 = vmatpush1.bf16.xpose.msra.mxu0 0
      %2436 = vmatprep.subr.bf16.mxu0 0
      %2437 = vmatpush1.bf16.xpose.msra.mxu0 0
      %2438 = vmatprep.subr.bf16.mxu0 0
      %2439 = vmatpush1.bf16.xpose.msra.mxu0 0
      %2440 = vmatprep.subr.bf16.mxu0 0
      %2441 = vmatpush1.bf16.xpose.msra.mxu0 0
      %2442 = vmatprep.subr.bf16.mxu0 0
      %2443 = vmatpush1.bf16.xpose.msra.mxu0 0
      %2444 = vmatprep.mubr.bf16.mxu0 0
      %2445 = vmatmul.mubr.bf16.gmra.mrb[0].mxu0 %v2389
      %v2446 = vpop.f32.mrb[0].mxu0
      %v2447 = vadd.f32 0.0, %v2446
      %v2448 = vpop.f32.mrb[0].mxu0
      %v2449 = vpop.f32.mrb[0].mxu0
      %v2450 = vadd.f32 0.0, %v2449
      %v2451 = vpop.f32.mrb[0].mxu0
      %2452 = vmatprep.mubr.bf16.mxu0 0
      %2453 = vmatmul.mubr.bf16.gmra.mrb[0].mxu0 %v2392
      %v2454 = vpop.f32.mrb[0].mxu0
      %v2455 = vadd.f32 0.0, %v2454
      %v2456 = vpop.f32.mrb[0].mxu0
      %v2457 = vpop.f32.mrb[0].mxu0
      %v2458 = vadd.f32 0.0, %v2457
      %v2459 = vpop.f32.mrb[0].mxu0
      %2460 = vmatprep.mubr.bf16.mxu0 0
      %2461 = vmatmul.mubr.bf16.gmra.mrb[0].mxu0 %v2395
      %v2462 = vpop.f32.mrb[0].mxu0
      %v2463 = vadd.f32 0.0, %v2462
      %v2464 = vpop.f32.mrb[0].mxu0
      %v2465 = vpop.f32.mrb[0].mxu0
      %v2466 = vadd.f32 0.0, %v2465
      %v2467 = vpop.f32.mrb[0].mxu0
      %2468 = vmatprep.mubr.bf16.mxu0 0
      %2469 = vmatmul.mubr.bf16.gmra.mrb[0].mxu0 %v2398
      %v2470 = vpop.f32.mrb[0].mxu0
      %v2471 = vadd.f32 0.0, %v2470
      %v2472 = vpop.f32.mrb[0].mxu0
      %v2473 = vpop.f32.mrb[0].mxu0
      %v2474 = vadd.f32 0.0, %v2473
      %v2475 = vpop.f32.mrb[0].mxu0
      %2476 = vdwg.mxu0
      %v2477 = vsel %vm646, %v2342, -inf
      %2478 = vmax.xlane.f32.xlu0 %v2477
      %v2479 = vpop.xlane.xlu0 %2478
      %v2480 = vsel %vm646, %v2345, -inf
      %2481 = vmax.xlane.f32.xlu0 %v2480
      %v2482 = vpop.xlane.xlu0 %2481
      %v2483 = vsel %vm646, %v2350, -inf
      %2484 = vmax.xlane.f32.xlu0 %v2483
      %v2485 = vpop.xlane.xlu0 %2484
      %v2486 = vsel %vm646, %v2353, -inf
      %2487 = vmax.xlane.f32.xlu0 %v2486
      %v2488 = vpop.xlane.xlu0 %2487
      %v2489 = vsel %vm646, %v2358, -inf
      %2490 = vmax.xlane.f32.xlu0 %v2489
      %v2491 = vpop.xlane.xlu0 %2490
      %v2492 = vsel %vm646, %v2361, -inf
      %2493 = vmax.xlane.f32.xlu0 %v2492
      %v2494 = vpop.xlane.xlu0 %2493
      %v2495 = vsel %vm646, %v2366, -inf
      %2496 = vmax.xlane.f32.xlu0 %v2495
      %v2497 = vpop.xlane.xlu0 %2496
      %v2498 = vsel %vm646, %v2369, -inf
      %2499 = vmax.xlane.f32.xlu0 %v2498
      %v2500 = vpop.xlane.xlu0 %2499
      %v2501 = vsel %vm646, %v2447, -inf
      %2502 = vmax.xlane.f32.xlu0 %v2501
      %v2503 = vpop.xlane.xlu0 %2502
      %v2504 = vsel %vm646, %v2450, -inf
      %2505 = vmax.xlane.f32.xlu0 %v2504
      %v2506 = vpop.xlane.xlu0 %2505
      %v2507 = vsel %vm646, %v2455, -inf
      %2508 = vmax.xlane.f32.xlu0 %v2507
      %v2509 = vpop.xlane.xlu0 %2508
      %v2510 = vsel %vm646, %v2458, -inf
      %2511 = vmax.xlane.f32.xlu0 %v2510
      %v2512 = vpop.xlane.xlu0 %2511
      %v2513 = vsel %vm646, %v2463, -inf
      %2514 = vmax.xlane.f32.xlu0 %v2513
      %v2515 = vpop.xlane.xlu0 %2514
      %v2516 = vsel %vm646, %v2466, -inf
      %2517 = vmax.xlane.f32.xlu0 %v2516
      %v2518 = vpop.xlane.xlu0 %2517
      %v2519 = vsel %vm646, %v2471, -inf
      %2520 = vmax.xlane.f32.xlu0 %v2519
      %v2521 = vpop.xlane.xlu0 %2520
      %v2522 = vsel %vm646, %v2474, -inf
      %2523 = vmax.xlane.f32.xlu0 %v2522
      %v2524 = vpop.xlane.xlu0 %2523
      %v2525 = vsub.f32 %v2342, %v2479
      %v2526 = vsub.f32 %v2345, %v2482
      %v2527 = vsub.f32 %v2350, %v2485
      %v2528 = vsub.f32 %v2353, %v2488
      %v2529 = vsub.f32 %v2358, %v2491
      %v2530 = vsub.f32 %v2361, %v2494
      %v2531 = vsub.f32 %v2366, %v2497
      %v2532 = vsub.f32 %v2369, %v2500
      %v2533 = vsub.f32 %v2447, %v2503
      %v2534 = vsub.f32 %v2450, %v2506
      %v2535 = vsub.f32 %v2455, %v2509
      %v2536 = vsub.f32 %v2458, %v2512
      %v2537 = vsub.f32 %v2463, %v2515
      %v2538 = vsub.f32 %v2466, %v2518
      %v2539 = vsub.f32 %v2471, %v2521
      %v2540 = vsub.f32 %v2474, %v2524
      %v2541 = vmul.f32 %v2525, 1.442695
      %v2542 = vpow.pop %v2541
      %v2543 = vmul.f32 %v2526, 1.442695
      %v2544 = vpow.pop %v2543
      %v2545 = vmul.f32 %v2527, 1.442695
      %v2546 = vpow.pop %v2545
      %v2547 = vmul.f32 %v2528, 1.442695
      %v2548 = vpow.pop %v2547
      %v2549 = vmul.f32 %v2529, 1.442695
      %v2550 = vpow.pop %v2549
      %v2551 = vmul.f32 %v2530, 1.442695
      %v2552 = vpow.pop %v2551
      %v2553 = vmul.f32 %v2531, 1.442695
      %v2554 = vpow.pop %v2553
      %v2555 = vmul.f32 %v2532, 1.442695
      %v2556 = vpow.pop %v2555
      %v2557 = vmul.f32 %v2533, 1.442695
      %v2558 = vpow.pop %v2557
      %v2559 = vmul.f32 %v2534, 1.442695
      %v2560 = vpow.pop %v2559
      %v2561 = vmul.f32 %v2535, 1.442695
      %v2562 = vpow.pop %v2561
      %v2563 = vmul.f32 %v2536, 1.442695
      %v2564 = vpow.pop %v2563
      %v2565 = vmul.f32 %v2537, 1.442695
      %v2566 = vpow.pop %v2565
      %v2567 = vmul.f32 %v2538, 1.442695
      %v2568 = vpow.pop %v2567
      %v2569 = vmul.f32 %v2539, 1.442695
      %v2570 = vpow.pop %v2569
      %v2571 = vmul.f32 %v2540, 1.442695
      %v2572 = vpow.pop %v2571
      %v2573 = vsel %vm646, %v2542, 0.0
      %2574 = vadd.xlane.f32.xlu0 %v2573
      %v2575 = vpop.xlane.xlu0 %2574
      %v2576 = vsel %vm646, %v2544, 0.0
      %2577 = vadd.xlane.f32.xlu0 %v2576
      %v2578 = vpop.xlane.xlu0 %2577
      %v2579 = vsel %vm646, %v2546, 0.0
      %2580 = vadd.xlane.f32.xlu0 %v2579
      %v2581 = vpop.xlane.xlu0 %2580
      %v2582 = vsel %vm646, %v2548, 0.0
      %2583 = vadd.xlane.f32.xlu0 %v2582
      %v2584 = vpop.xlane.xlu0 %2583
      %v2585 = vsel %vm646, %v2550, 0.0
      %2586 = vadd.xlane.f32.xlu0 %v2585
      %v2587 = vpop.xlane.xlu0 %2586
      %v2588 = vsel %vm646, %v2552, 0.0
      %2589 = vadd.xlane.f32.xlu0 %v2588
      %v2590 = vpop.xlane.xlu0 %2589
      %v2591 = vsel %vm646, %v2554, 0.0
      %2592 = vadd.xlane.f32.xlu0 %v2591
      %v2593 = vpop.xlane.xlu0 %2592
      %v2594 = vsel %vm646, %v2556, 0.0
      %2595 = vadd.xlane.f32.xlu0 %v2594
      %v2596 = vpop.xlane.xlu0 %2595
      %v2597 = vsel %vm646, %v2558, 0.0
      %2598 = vadd.xlane.f32.xlu0 %v2597
      %v2599 = vpop.xlane.xlu0 %2598
      %v2600 = vsel %vm646, %v2560, 0.0
      %2601 = vadd.xlane.f32.xlu0 %v2600
      %v2602 = vpop.xlane.xlu0 %2601
      %v2603 = vsel %vm646, %v2562, 0.0
      %2604 = vadd.xlane.f32.xlu0 %v2603
      %v2605 = vpop.xlane.xlu0 %2604
      %v2606 = vsel %vm646, %v2564, 0.0
      %2607 = vadd.xlane.f32.xlu0 %v2606
      %v2608 = vpop.xlane.xlu0 %2607
      %v2609 = vsel %vm646, %v2566, 0.0
      %2610 = vadd.xlane.f32.xlu0 %v2609
      %v2611 = vpop.xlane.xlu0 %2610
      %v2612 = vsel %vm646, %v2568, 0.0
      %2613 = vadd.xlane.f32.xlu0 %v2612
      %v2614 = vpop.xlane.xlu0 %2613
      %v2615 = vsel %vm646, %v2570, 0.0
      %2616 = vadd.xlane.f32.xlu0 %v2615
      %v2617 = vpop.xlane.xlu0 %2616
      %v2618 = vsel %vm646, %v2572, 0.0
      %2619 = vadd.xlane.f32.xlu0 %v2618
      %v2620 = vpop.xlane.xlu0 %2619
      %v2621 = vpack.c.bf16 %v2544, %v2542
      %v2622 = vpack.c.bf16 %v2548, %v2546
      %v2623 = vpack.c.bf16 %v2552, %v2550
      %v2624 = vpack.c.bf16 %v2556, %v2554
      %v2625 = vpack.c.bf16 %v2560, %v2558
      %v2626 = vpack.c.bf16 %v2564, %v2562
      %v2627 = vpack.c.bf16 %v2568, %v2566
      %v2628 = vpack.c.bf16 %v2572, %v2570
      %2629 = vrot.lane.b32.xlu0 %v435, 40
      %v2630 = vpop.permute.xlu0 %2629
      %2631 = vrot.lane.b32.xlu0 %v436, 40
      %v2632 = vpop.permute.xlu0 %2631
      %2633 = vrot.lane.b32.xlu0 %v437, 40
      %v2634 = vpop.permute.xlu0 %2633
      %2635 = vrot.lane.b32.xlu0 %v438, 40
      %v2636 = vpop.permute.xlu0 %2635
      %v2642 = vsel %vm646, %v2621, 0
      %v2645 = vsel %vm646, %v2622, 0
      %v2648 = vsel %vm646, %v2623, 0
      %v2651 = vsel %vm646, %v2624, 0
      %2653 = vmatprep.subr.bf16.mxu0 0
      %2654 = vmatpush1.bf16.msra.mxu0 %v2630
      %2655 = vmatprep.subr.bf16.mxu0 0
      %2656 = vmatpush1.bf16.msra.mxu0 %v2632
      %2657 = vmatprep.subr.bf16.mxu0 0
      %2658 = vmatpush1.bf16.msra.mxu0 %v2634
      %2659 = vmatprep.subr.bf16.mxu0 0
      %2660 = vmatpush1.bf16.msra.mxu0 %v2636
      %2661 = vmatprep.subr.bf16.mxu0 0
      %2662 = vmatpush1.bf16.msra.mxu0 0
      %2663 = vmatprep.subr.bf16.mxu0 0
      %2664 = vmatpush1.bf16.msra.mxu0 0
      %2665 = vmatprep.subr.bf16.mxu0 0
      %2666 = vmatpush1.bf16.msra.mxu0 0
      %2667 = vmatprep.subr.bf16.mxu0 0
      %2668 = vmatpush1.bf16.msra.mxu0 0
      %2669 = vmatprep.subr.bf16.mxu0 0
      %2670 = vmatpush1.bf16.msra.mxu0 0
      %2671 = vmatprep.subr.bf16.mxu0 0
      %2672 = vmatpush1.bf16.msra.mxu0 0
      %2673 = vmatprep.subr.bf16.mxu0 0
      %2674 = vmatpush1.bf16.msra.mxu0 0
      %2675 = vmatprep.subr.bf16.mxu0 0
      %2676 = vmatpush1.bf16.msra.mxu0 0
      %2677 = vmatprep.subr.bf16.mxu0 0
      %2678 = vmatpush1.bf16.msra.mxu0 0
      %2679 = vmatprep.subr.bf16.mxu0 0
      %2680 = vmatpush1.bf16.msra.mxu0 0
      %2681 = vmatprep.subr.bf16.mxu0 0
      %2682 = vmatpush1.bf16.msra.mxu0 0
      %2683 = vmatprep.subr.bf16.mxu0 0
      %2684 = vmatpush1.bf16.msra.mxu0 0
      %2685 = vmatprep.mubr.bf16.mxu0 0
      %2686 = vmatmul.mubr.bf16.gmra.mrb[0].mxu0 %v2642
      %v2687 = vpop.f32.mrb[0].mxu0
      %v2688 = vadd.f32 0.0, %v2687
      %v2689 = vpop.f32.mrb[0].mxu0
      %v2690 = vpop.f32.mrb[0].mxu0
      %v2691 = vadd.f32 0.0, %v2690
      %v2692 = vpop.f32.mrb[0].mxu0
      %2693 = vmatprep.mubr.bf16.mxu0 0
      %2694 = vmatmul.mubr.bf16.gmra.mrb[0].mxu0 %v2645
      %v2695 = vpop.f32.mrb[0].mxu0
      %v2696 = vadd.f32 0.0, %v2695
      %v2697 = vpop.f32.mrb[0].mxu0
      %v2698 = vpop.f32.mrb[0].mxu0
      %v2699 = vadd.f32 0.0, %v2698
      %v2700 = vpop.f32.mrb[0].mxu0
      %2701 = vmatprep.mubr.bf16.mxu0 0
      %2702 = vmatmul.mubr.bf16.gmra.mrb[0].mxu0 %v2648
      %v2703 = vpop.f32.mrb[0].mxu0
      %v2704 = vadd.f32 0.0, %v2703
      %v2705 = vpop.f32.mrb[0].mxu0
      %v2706 = vpop.f32.mrb[0].mxu0
      %v2707 = vadd.f32 0.0, %v2706
      %v2708 = vpop.f32.mrb[0].mxu0
      %2709 = vmatprep.mubr.bf16.mxu0 0
      %2710 = vmatmul.mubr.bf16.gmra.mrb[0].mxu0 %v2651
      %v2711 = vpop.f32.mrb[0].mxu0
      %v2712 = vadd.f32 0.0, %v2711
      %v2713 = vpop.f32.mrb[0].mxu0
      %v2714 = vpop.f32.mrb[0].mxu0
      %v2715 = vadd.f32 0.0, %v2714
      %v2716 = vpop.f32.mrb[0].mxu0
      %2717 = vdwg.mxu0
      %2718 = vrot.lane.b32.xlu0 %v439, 40
      %v2719 = vpop.permute.xlu0 %2718
      %2720 = vrot.lane.b32.xlu0 %v440, 40
      %v2721 = vpop.permute.xlu0 %2720
      %2722 = vrot.lane.b32.xlu0 %v441, 40
      %v2723 = vpop.permute.xlu0 %2722
      %2724 = vrot.lane.b32.xlu0 %v442, 40
      %v2725 = vpop.permute.xlu0 %2724
      %v2731 = vsel %vm646, %v2625, 0
      %v2734 = vsel %vm646, %v2626, 0
      %v2737 = vsel %vm646, %v2627, 0
      %v2740 = vsel %vm646, %v2628, 0
      %2742 = vmatprep.subr.bf16.mxu0 0
      %2743 = vmatpush1.bf16.msra.mxu0 %v2719
      %2744 = vmatprep.subr.bf16.mxu0 0
      %2745 = vmatpush1.bf16.msra.mxu0 %v2721
      %2746 = vmatprep.subr.bf16.mxu0 0
      %2747 = vmatpush1.bf16.msra.mxu0 %v2723
      %2748 = vmatprep.subr.bf16.mxu0 0
      %2749 = vmatpush1.bf16.msra.mxu0 %v2725
      %2750 = vmatprep.subr.bf16.mxu0 0
      %2751 = vmatpush1.bf16.msra.mxu0 0
      %2752 = vmatprep.subr.bf16.mxu0 0
      %2753 = vmatpush1.bf16.msra.mxu0 0
      %2754 = vmatprep.subr.bf16.mxu0 0
      %2755 = vmatpush1.bf16.msra.mxu0 0
      %2756 = vmatprep.subr.bf16.mxu0 0
      %2757 = vmatpush1.bf16.msra.mxu0 0
      %2758 = vmatprep.subr.bf16.mxu0 0
      %2759 = vmatpush1.bf16.msra.mxu0 0
      %2760 = vmatprep.subr.bf16.mxu0 0
      %2761 = vmatpush1.bf16.msra.mxu0 0
      %2762 = vmatprep.subr.bf16.mxu0 0
      %2763 = vmatpush1.bf16.msra.mxu0 0
      %2764 = vmatprep.subr.bf16.mxu0 0
      %2765 = vmatpush1.bf16.msra.mxu0 0
      %2766 = vmatprep.subr.bf16.mxu0 0
      %2767 = vmatpush1.bf16.msra.mxu0 0
      %2768 = vmatprep.subr.bf16.mxu0 0
      %2769 = vmatpush1.bf16.msra.mxu0 0
      %2770 = vmatprep.subr.bf16.mxu0 0
      %2771 = vmatpush1.bf16.msra.mxu0 0
      %2772 = vmatprep.subr.bf16.mxu0 0
      %2773 = vmatpush1.bf16.msra.mxu0 0
      %2774 = vmatprep.mubr.bf16.mxu0 0
      %2775 = vmatmul.mubr.bf16.gmra.mrb[0].mxu0 %v2731
      %v2776 = vpop.f32.mrb[0].mxu0
      %v2777 = vadd.f32 0.0, %v2776
      %v2778 = vpop.f32.mrb[0].mxu0
      %v2779 = vpop.f32.mrb[0].mxu0
      %v2780 = vadd.f32 0.0, %v2779
      %v2781 = vpop.f32.mrb[0].mxu0
      %2782 = vmatprep.mubr.bf16.mxu0 0
      %2783 = vmatmul.mubr.bf16.gmra.mrb[0].mxu0 %v2734
      %v2784 = vpop.f32.mrb[0].mxu0
      %v2785 = vadd.f32 0.0, %v2784
      %v2786 = vpop.f32.mrb[0].mxu0
      %v2787 = vpop.f32.mrb[0].mxu0
      %v2788 = vadd.f32 0.0, %v2787
      %v2789 = vpop.f32.mrb[0].mxu0
      %2790 = vmatprep.mubr.bf16.mxu0 0
      %2791 = vmatmul.mubr.bf16.gmra.mrb[0].mxu0 %v2737
      %v2792 = vpop.f32.mrb[0].mxu0
      %v2793 = vadd.f32 0.0, %v2792
      %v2794 = vpop.f32.mrb[0].mxu0
      %v2795 = vpop.f32.mrb[0].mxu0
      %v2796 = vadd.f32 0.0, %v2795
      %v2797 = vpop.f32.mrb[0].mxu0
      %2798 = vmatprep.mubr.bf16.mxu0 0
      %2799 = vmatmul.mubr.bf16.gmra.mrb[0].mxu0 %v2740
      %v2800 = vpop.f32.mrb[0].mxu0
      %v2801 = vadd.f32 0.0, %v2800
      %v2802 = vpop.f32.mrb[0].mxu0
      %v2803 = vpop.f32.mrb[0].mxu0
      %v2804 = vadd.f32 0.0, %v2803
      %v2805 = vpop.f32.mrb[0].mxu0
      %2806 = vdwg.mxu0
      %v2807 = vrcp.pop %v2575
      %v2808 = vrcp.pop %v2578
      %v2809 = vrcp.pop %v2581
      %v2810 = vrcp.pop %v2584
      %v2811 = vrcp.pop %v2587
      %v2812 = vrcp.pop %v2590
      %v2813 = vrcp.pop %v2593
      %v2814 = vrcp.pop %v2596
      %v2815 = vrcp.pop %v2599
      %v2816 = vrcp.pop %v2602
      %v2817 = vrcp.pop %v2605
      %v2818 = vrcp.pop %v2608
      %v2819 = vrcp.pop %v2611
      %v2820 = vrcp.pop %v2614
      %v2821 = vrcp.pop %v2617
      %v2822 = vrcp.pop %v2620
      %v2823 = vmul.f32 %v2688, %v2807
      %v2824 = vmul.f32 %v2691, %v2808
      %v2825 = vmul.f32 %v2696, %v2809
      %v2826 = vmul.f32 %v2699, %v2810
      %v2827 = vmul.f32 %v2704, %v2811
      %v2828 = vmul.f32 %v2707, %v2812
      %v2829 = vmul.f32 %v2712, %v2813
      %v2830 = vmul.f32 %v2715, %v2814
      %v2831 = vmul.f32 %v2777, %v2815
      %v2832 = vmul.f32 %v2780, %v2816
      %v2833 = vmul.f32 %v2785, %v2817
      %v2834 = vmul.f32 %v2788, %v2818
      %v2835 = vmul.f32 %v2793, %v2819
      %v2836 = vmul.f32 %v2796, %v2820
      %v2837 = vmul.f32 %v2801, %v2821
      %v2838 = vmul.f32 %v2804, %v2822
      %v2839 = vpack.c.bf16 %v2824, %v2823
      %v2840 = vpack.c.bf16 %v2826, %v2825
      %v2841 = vpack.c.bf16 %v2828, %v2827
      %v2842 = vpack.c.bf16 %v2830, %v2829
      %v2843 = vpack.c.bf16 %v2832, %v2831
      %v2844 = vpack.c.bf16 %v2834, %v2833
      %v2845 = vpack.c.bf16 %v2836, %v2835
      %v2846 = vpack.c.bf16 %v2838, %v2837
      %2855 = vrot.lane.b32.xlu0 %v2839, 24
      %v2856 = vpop.permute.xlu0 %2855
      %2857 = vrot.lane.b32.xlu0 %v2840, 24
      %v2858 = vpop.permute.xlu0 %2857
      %2859 = vrot.lane.b32.xlu0 %v2841, 24
      %v2860 = vpop.permute.xlu0 %2859
      %2861 = vrot.lane.b32.xlu0 %v2842, 24
      %v2862 = vpop.permute.xlu0 %2861
      %2863 = vrot.lane.b32.xlu0 %v2843, 24
      %v2864 = vpop.permute.xlu0 %2863
      %2865 = vrot.lane.b32.xlu0 %v2844, 24
      %v2866 = vpop.permute.xlu0 %2865
      %2867 = vrot.lane.b32.xlu0 %v2845, 24
      %v2868 = vpop.permute.xlu0 %2867
      %2869 = vrot.lane.b32.xlu0 %v2846, 24
      %v2870 = vpop.permute.xlu0 %2869
      %vm2879 = vcmask 261312
      %2880 = vst.msk [vmem:[#allocation2] sm:$0xff] %vm2879, %v2856
      %2881 = vst.msk [vmem:[#allocation2 + $0x8] sm:$0xff] %vm2879, %v2858
      %2882 = vst.msk [vmem:[#allocation2 + $0x10] sm:$0xff] %vm2879, %v2860
      %2883 = vst.msk [vmem:[#allocation2 + $0x18] sm:$0xff] %vm2879, %v2862
      %2884 = vst.msk [vmem:[#allocation2 + $0x20] sm:$0xff] %vm2879, %v2864
      %2885 = vst.msk [vmem:[#allocation2 + $0x28] sm:$0xff] %vm2879, %v2866
      %2886 = vst.msk [vmem:[#allocation2 + $0x30] sm:$0xff] %vm2879, %v2868
      %2887 = vst.msk [vmem:[#allocation2 + $0x38] sm:$0xff] %vm2879, %v2870
      %v2888 = vld [vmem:[#allocation2] sm:$0xff]
      %v2889 = vld [vmem:[#allocation2 + $0x8] sm:$0xff]
      %v2890 = vld [vmem:[#allocation2 + $0x10] sm:$0xff]
      %v2891 = vld [vmem:[#allocation2 + $0x18] sm:$0xff]
      %v2892 = vld [vmem:[#allocation2 + $0x20] sm:$0xff]
      %v2893 = vld [vmem:[#allocation2 + $0x28] sm:$0xff]
      %v2894 = vld [vmem:[#allocation2 + $0x30] sm:$0xff]
      %v2895 = vld [vmem:[#allocation2 + $0x38] sm:$0xff]
      %v2896 = vld [vmem:[%s3] sm:$0xf]
      %v2897 = vld [vmem:[%s3 + $0x4] sm:$0xf]
      %v2898 = vld [vmem:[%s3 + $0x8] sm:$0xf]
      %v2899 = vld [vmem:[%s3 + $0xc] sm:$0xf]
      %v2900 = vld [vmem:[%s4] sm:$0x1]
      %v2902 = vlaneseq
      %v2903 = vshrl.u32 %v2902, 7
      %v2904 = vsub.s32 0, %v2903
      %v2905 = vrot.slane %v2900, %v2904
      %v2911 = vunpack.c.l.b16 %v2896
      %v2912 = vunpack.c.l.b16 %v2897
      %v2913 = vunpack.c.l.b16 %v2898
      %v2914 = vunpack.c.l.b16 %v2899
      %v2915 = vpack.c.b16 %v2912, %v2911
      %v2916 = vpack.c.b16 %v2914, %v2913
      %v2920 = vsel %vm313, %v2888, 0
      %v2923 = vsel %vm313, %v2889, 0
      %v2926 = vsel %vm313, %v2890, 0
      %v2929 = vsel %vm313, %v2891, 0
      %v2932 = vsel %vm313, %v2892, 0
      %v2935 = vsel %vm313, %v2893, 0
      %v2938 = vsel %vm313, %v2894, 0
      %v2941 = vsel %vm313, %v2895, 0
      %2943 = vmatprep.subr.bf16.mxu0 0
      %2944 = vmatpush1.bf16.msra.mxu0 %v2915
      %2945 = vmatprep.subr.bf16.mxu0 0
      %2946 = vmatpush1.bf16.msra.mxu0 %v2916
      %2947 = vmatprep.subr.bf16.mxu0 0
      %2948 = vmatpush1.bf16.msra.mxu0 0
      %2949 = vmatprep.subr.bf16.mxu0 0
      %2950 = vmatpush1.bf16.msra.mxu0 0
      %2951 = vmatprep.subr.bf16.mxu0 0
      %2952 = vmatpush1.bf16.msra.mxu0 0
      %2953 = vmatprep.subr.bf16.mxu0 0
      %2954 = vmatpush1.bf16.msra.mxu0 0
      %2955 = vmatprep.subr.bf16.mxu0 0
      %2956 = vmatpush1.bf16.msra.mxu0 0
      %2957 = vmatprep.subr.bf16.mxu0 0
      %2958 = vmatpush1.bf16.msra.mxu0 0
      %2959 = vmatprep.subr.bf16.mxu0 0
      %2960 = vmatpush1.bf16.msra.mxu0 0
      %2961 = vmatprep.subr.bf16.mxu0 0
      %2962 = vmatpush1.bf16.msra.mxu0 0
      %2963 = vmatprep.subr.bf16.mxu0 0
      %2964 = vmatpush1.bf16.msra.mxu0 0
      %2965 = vmatprep.subr.bf16.mxu0 0
      %2966 = vmatpush1.bf16.msra.mxu0 0
      %2967 = vmatprep.subr.bf16.mxu0 0
      %2968 = vmatpush1.bf16.msra.mxu0 0
      %2969 = vmatprep.subr.bf16.mxu0 0
      %2970 = vmatpush1.bf16.msra.mxu0 0
      %2971 = vmatprep.subr.bf16.mxu0 0
      %2972 = vmatpush1.bf16.msra.mxu0 0
      %2973 = vmatprep.subr.bf16.mxu0 0
      %2974 = vmatpush1.bf16.msra.mxu0 0
      %2975 = vmatprep.mubr.bf16.mxu0 0
      %2976 = vmatmul.mubr.bf16.gmra.mrb[0].mxu0 %v2920
      %v2977 = vpop.f32.mrb[0].mxu0
      %v2978 = vadd.f32 %v2905, %v2977
      %v2979 = vpop.f32.mrb[0].mxu0
      %v2980 = vpop.f32.mrb[0].mxu0
      %v2981 = vadd.f32 %v2905, %v2980
      %v2982 = vpop.f32.mrb[0].mxu0
      %2983 = vmatprep.mubr.bf16.mxu0 0
      %2984 = vmatmul.mubr.bf16.gmra.mrb[0].mxu0 %v2923
      %v2985 = vpop.f32.mrb[0].mxu0
      %v2986 = vadd.f32 %v2905, %v2985
      %v2987 = vpop.f32.mrb[0].mxu0
      %v2988 = vpop.f32.mrb[0].mxu0
      %v2989 = vadd.f32 %v2905, %v2988
      %v2990 = vpop.f32.mrb[0].mxu0
      %2991 = vmatprep.mubr.bf16.mxu0 0
      %2992 = vmatmul.mubr.bf16.gmra.mrb[0].mxu0 %v2926
      %v2993 = vpop.f32.mrb[0].mxu0
      %v2994 = vadd.f32 %v2905, %v2993
      %v2995 = vpop.f32.mrb[0].mxu0
      %v2996 = vpop.f32.mrb[0].mxu0
      %v2997 = vadd.f32 %v2905, %v2996
      %v2998 = vpop.f32.mrb[0].mxu0
      %2999 = vmatprep.mubr.bf16.mxu0 0
      %3000 = vmatmul.mubr.bf16.gmra.mrb[0].mxu0 %v2929
      %v3001 = vpop.f32.mrb[0].mxu0
      %v3002 = vadd.f32 %v2905, %v3001
      %v3003 = vpop.f32.mrb[0].mxu0
      %v3004 = vpop.f32.mrb[0].mxu0
      %v3005 = vadd.f32 %v2905, %v3004
      %v3006 = vpop.f32.mrb[0].mxu0
      %3007 = vmatprep.mubr.bf16.mxu0 0
      %3008 = vmatmul.mubr.bf16.gmra.mrb[0].mxu0 %v2932
      %v3009 = vpop.f32.mrb[0].mxu0
      %v3010 = vadd.f32 %v2905, %v3009
      %v3011 = vpop.f32.mrb[0].mxu0
      %v3012 = vpop.f32.mrb[0].mxu0
      %v3013 = vadd.f32 %v2905, %v3012
      %v3014 = vpop.f32.mrb[0].mxu0
      %3015 = vmatprep.mubr.bf16.mxu0 0
      %3016 = vmatmul.mubr.bf16.gmra.mrb[0].mxu0 %v2935
      %v3017 = vpop.f32.mrb[0].mxu0
      %v3018 = vadd.f32 %v2905, %v3017
      %v3019 = vpop.f32.mrb[0].mxu0
      %v3020 = vpop.f32.mrb[0].mxu0
      %v3021 = vadd.f32 %v2905, %v3020
      %v3022 = vpop.f32.mrb[0].mxu0
      %3023 = vmatprep.mubr.bf16.mxu0 0
      %3024 = vmatmul.mubr.bf16.gmra.mrb[0].mxu0 %v2938
      %v3025 = vpop.f32.mrb[0].mxu0
      %v3026 = vadd.f32 %v2905, %v3025
      %v3027 = vpop.f32.mrb[0].mxu0
      %v3028 = vpop.f32.mrb[0].mxu0
      %v3029 = vadd.f32 %v2905, %v3028
      %v3030 = vpop.f32.mrb[0].mxu0
      %3031 = vmatprep.mubr.bf16.mxu0 0
      %3032 = vmatmul.mubr.bf16.gmra.mrb[0].mxu0 %v2941
      %v3033 = vpop.f32.mrb[0].mxu0
      %v3034 = vadd.f32 %v2905, %v3033
      %v3035 = vpop.f32.mrb[0].mxu0
      %v3036 = vpop.f32.mrb[0].mxu0
      %v3037 = vadd.f32 %v2905, %v3036
      %v3038 = vpop.f32.mrb[0].mxu0
      %3039 = vdwg.mxu0
      %v3040 = vpack.c.bf16 %v2981, %v2978
      %v3041 = vpack.c.bf16 %v2989, %v2986
      %v3042 = vpack.c.bf16 %v2997, %v2994
      %v3043 = vpack.c.bf16 %v3005, %v3002
      %v3044 = vpack.c.bf16 %v3013, %v3010
      %v3045 = vpack.c.bf16 %v3021, %v3018
      %v3046 = vpack.c.bf16 %v3029, %v3026
      %v3047 = vpack.c.bf16 %v3037, %v3034
      %v3056 = vunpack.c.l.b16 %v3040
      %v3057 = vunpack.c.h.b16 %v3040
      %v3058 = vunpack.c.l.b16 %v3041
      %v3059 = vunpack.c.h.b16 %v3041
      %v3060 = vunpack.c.l.b16 %v3042
      %v3061 = vunpack.c.h.b16 %v3042
      %v3062 = vunpack.c.l.b16 %v3043
      %v3063 = vunpack.c.h.b16 %v3043
      %v3064 = vunpack.c.l.b16 %v3044
      %v3065 = vunpack.c.h.b16 %v3044
      %v3066 = vunpack.c.l.b16 %v3045
      %v3067 = vunpack.c.h.b16 %v3045
      %v3068 = vunpack.c.l.b16 %v3046
      %v3069 = vunpack.c.h.b16 %v3046
      %v3070 = vunpack.c.l.b16 %v3047
      %v3071 = vunpack.c.h.b16 %v3047
      %v3072 = vpack.c.b16 %v3056, %v3056
      %v3073 = vpack.c.b16 %v3057, %v3057
      %v3074 = vpack.c.b16 %v3058, %v3058
      %v3075 = vpack.c.b16 %v3059, %v3059
      %v3076 = vpack.c.b16 %v3060, %v3060
      %v3077 = vpack.c.b16 %v3061, %v3061
      %v3078 = vpack.c.b16 %v3062, %v3062
      %v3079 = vpack.c.b16 %v3063, %v3063
      %v3080 = vpack.c.b16 %v3064, %v3064
      %v3081 = vpack.c.b16 %v3065, %v3065
      %v3082 = vpack.c.b16 %v3066, %v3066
      %v3083 = vpack.c.b16 %v3067, %v3067
      %v3084 = vpack.c.b16 %v3068, %v3068
      %v3085 = vpack.c.b16 %v3069, %v3069
      %v3086 = vpack.c.b16 %v3070, %v3070
      %v3087 = vpack.c.b16 %v3071, %v3071
      %vm3104 = vcmask 257024
      %3105 = vst.msk [vmem:[%s231] sm:$0xf] %vm3104, %v3072
      %3106 = vst.msk [vmem:[%s231 + $0x4] sm:$0xf] %vm3104, %v3073
      %3107 = vst.msk [vmem:[%s231 + $0x8] sm:$0xf] %vm3104, %v3074
      %3108 = vst.msk [vmem:[%s231 + $0xc] sm:$0xf] %vm3104, %v3075
      %3109 = vst.msk [vmem:[%s231 + $0x10] sm:$0xf] %vm3104, %v3076
      %3110 = vst.msk [vmem:[%s231 + $0x14] sm:$0xf] %vm3104, %v3077
      %3111 = vst.msk [vmem:[%s231 + $0x18] sm:$0xf] %vm3104, %v3078
      %3112 = vst.msk [vmem:[%s231 + $0x1c] sm:$0xf] %vm3104, %v3079
      %3113 = vst.msk [vmem:[%s231 + $0x20] sm:$0xf] %vm3104, %v3080
      %3114 = vst.msk [vmem:[%s231 + $0x24] sm:$0xf] %vm3104, %v3081
      %3115 = vst.msk [vmem:[%s231 + $0x28] sm:$0xf] %vm3104, %v3082
      %3116 = vst.msk [vmem:[%s231 + $0x2c] sm:$0xf] %vm3104, %v3083
      %3117 = vst.msk [vmem:[%s231 + $0x30] sm:$0xf] %vm3104, %v3084
      %3118 = vst.msk [vmem:[%s231 + $0x34] sm:$0xf] %vm3104, %v3085
      %3119 = vst.msk [vmem:[%s231 + $0x38] sm:$0xf] %vm3104, %v3086
      %3120 = vst.msk [vmem:[%s231 + $0x3c] sm:$0xf] %vm3104, %v3087
      %s3121 = smul.u32 2, %s16
      %p3122 = scmp.lt.s32.totalorder %s3121, 7
      %s3123 = scalar_select %p3122, %s3121, 7
      %s3124 = smul.addr %s3123, 8
      %s3125 = smul.addr %s3124, 4
      %s3126 = scalar_lea.vmem %s5, %s3125
      // Predicated region
      $region41: #{tpu_custom_call.1} parent=39 // pred_check
        %p3127 = pneg %p144
      $region42: #{tpu_custom_call.1} parent=39 // pred_check_branch
        %3129 = sbr.rel (%p3127) target = $region44
      $region43: #{tpu_custom_call.1} parent=39 // pred_region
        %s3130 = smul.u32 2, %s16
      $region44: #{tpu_custom_call.1} parent=39 // pred_fallthru
        _
    $region40: #{tpu_custom_call.1} parent=5 // pred_fallthru
      _
    %p3131 = scmp.le.s32.totalorder 2, %s11
    // Predicated region
    $region45: #{tpu_custom_call.1} parent=5 // pred_check
      %p3132 = pneg %p3131
    $region46: #{tpu_custom_call.1} parent=5 // pred_check_branch
      %3134 = sbr.rel (%p3132) target = $region48
    $region47: #{tpu_custom_call.1} parent=5 // pred_region
      %s3135 = ssub.s32 %s11, 2
      // Predicated region
      $region49: #{tpu_custom_call.1} parent=47 // pred_check
        %p3136 = pneg %p150
      $region50: #{tpu_custom_call.1} parent=47 // pred_check_branch
        %3138 = sbr.rel (%p3136) target = $region52
      $region51: #{tpu_custom_call.1} parent=47 // pred_region
        %s3139 = smul.u32 2, %s17
        %p3140 = scmp.lt.s32.totalorder %s3139, 7
        %s3141 = scalar_select %p3140, %s3139, 7
        %s3142 = smul.addr %s3141, 8
        %s3143 = smul.addr %s3142, 4
        %s3144 = scalar_lea.vmem %s5, %s3143
      $region52: #{tpu_custom_call.1} parent=47 // pred_fallthru
        _
    $region48: #{tpu_custom_call.1} parent=5 // pred_fallthru
      _
  $region6: #{tpu_custom_call.1} parent=0 // loop_footer
    %s15 = sadd.s32 1, %s11
  $region7: #{tpu_custom_call.1} parent=0 // loop_footer_branch
    %10 = sbr.rel target = $region3
  $region8: #{tpu_custom_call.1} parent=0 // loop_exit
    _

</llo_original>
